<compile_context>
chip_gen: v5e
topology: v5e:2x2
jax: 0.10.0
libtpu: 0.0.40
codegen_flags: <defaults>
</compile_context>

<pallas_src>
import functools
import math

import jax
import jax.numpy as jnp
from jax.experimental import pallas as pl
from jax.experimental.pallas import tpu as pltpu

NEG_INF = -1e30                       # additive mask value (f32; bf16 would overflow)
_WEIGHT_SLAB_BYTES = 8 * 1024 * 1024  # cap for a (K, tn) bf16 weight panel (x2 buffers)


def _vmem_limit_bytes():
    """Generation-aware scoped-VMEM budget (v7x has only 64 MiB physical / TC)."""
    try:
        kind = jax.devices()[0].device_kind.lower()
    except Exception:
        kind = ""
    if "v7" in kind or "7x" in kind:
        return 48 * 1024 * 1024
    if "v6" in kind or "v5" in kind or "v4" in kind:
        return 96 * 1024 * 1024
    return 32 * 1024 * 1024


VMEM_LIMIT = _vmem_limit_bytes()


def _pick_tile(dim, candidates):
    """Largest candidate that evenly divides `dim`, else the full dim."""
    for c in candidates:
        if dim % c == 0:
            return c
    return dim


# --------------------------- tiled linear kernels ---------------------------

def _linear_kernel_direct(x_ref, w_ref, b_ref, o_ref, *, act):
    y = jnp.dot(x_ref[...], w_ref[...], preferred_element_type=jnp.float32)
    y = y + b_ref[...].astype(jnp.float32)
    if act == "relu":
        y = jnp.maximum(y, 0.0)
    o_ref[...] = y.astype(o_ref.dtype)


def _linear_kernel_acc(x_ref, w_ref, b_ref, o_ref, acc_ref, *, act):
    k = pl.program_id(2)

    @pl.when(k == 0)
    def _():
        acc_ref[...] = jnp.zeros_like(acc_ref)

    acc_ref[...] += jnp.dot(x_ref[...], w_ref[...],
                            preferred_element_type=jnp.float32)

    @pl.when(k == pl.num_programs(2) - 1)
    def _():
        y = acc_ref[...] + b_ref[...].astype(jnp.float32)
        if act == "relu":
            y = jnp.maximum(y, 0.0)
        o_ref[...] = y.astype(o_ref.dtype)


def linear(x2d, w, b, act="none", out_dtype=None):
    """y = act(x @ w + b), tiled over (M, N[, K])."""
    M, K = x2d.shape
    N = w.shape[1]
    out_dtype = out_dtype or x2d.dtype
    tm = _pick_tile(M, (512, 256, 128, 64, 32, 16))      # keep >= 16 rows (bf16 packing)
    tn = _pick_tile(N, (512, 256, 128))
    # Tile K only when the full-K weight panel would blow the VMEM budget.
    if K * tn * 2 * 2 <= _WEIGHT_SLAB_BYTES:
        tk = K
    else:
        tk = _pick_tile(K, (1024, 512, 256, 128))
    nk = K // tk

    # Put tiles of the *larger* operand on the outer grid axis so its blocks are
    # streamed from HBM exactly once; the small operand is the one re-streamed.
    weight_major = (K * N) >= (M * K)
    if weight_major:
        grid = (N // tn, M // tm, nk)
        x_map = lambda o, n, k: (n, k)
        w_map = lambda o, n, k: (k, o)
        b_map = lambda o, n, k: (0, o)
        o_map = lambda o, n, k: (n, o)
    else:
        grid = (M // tm, N // tn, nk)
        x_map = lambda o, n, k: (o, k)
        w_map = lambda o, n, k: (k, n)
        b_map = lambda o, n, k: (0, n)
        o_map = lambda o, n, k: (o, n)

    if nk == 1:
        kernel = functools.partial(_linear_kernel_direct, act=act)
        scratch = []
    else:
        kernel = functools.partial(_linear_kernel_acc, act=act)
        scratch = [pltpu.VMEM((tm, tn), jnp.float32)]

    return pl.pallas_call(
        kernel,
        grid=grid,
        in_specs=[
            pl.BlockSpec((tm, tk), x_map),
            pl.BlockSpec((tk, tn), w_map),
            pl.BlockSpec((1, tn), b_map),
        ],
        out_specs=pl.BlockSpec((tm, tn), o_map),
        out_shape=jax.ShapeDtypeStruct((M, N), out_dtype),
        scratch_shapes=scratch,
        compiler_params=pltpu.CompilerParams(
            dimension_semantics=("parallel", "parallel", "arbitrary"),
            vmem_limit_bytes=VMEM_LIMIT),
    )(x2d, w, b)


# ------------------ fused matmul + residual + layernorm ---------------------

def _linear_add_ln_kernel(x_ref, w_ref, b_ref, r_ref, g_ref, beta_ref, o_ref,
                          acc_ref, *, eps):
    k = pl.program_id(1)

    @pl.when(k == 0)
    def _():
        acc_ref[...] = (r_ref[...].astype(jnp.float32)
                        + b_ref[...].astype(jnp.float32))

    acc_ref[...] += jnp.dot(x_ref[...], w_ref[...],
                            preferred_element_type=jnp.float32)

    @pl.when(k == pl.num_programs(1) - 1)
    def _():
        y = acc_ref[...]
        mu = jnp.mean(y, axis=-1, keepdims=True)
        yc = y - mu
        var = jnp.mean(yc * yc, axis=-1, keepdims=True)
        out = yc * jax.lax.rsqrt(var + eps)
        o_ref[...] = (out * g_ref[...] + beta_ref[...]).astype(o_ref.dtype)


def linear_add_ln(x2d, w, b, resid, gamma, beta, eps=1e-5):
    """LN(resid + x @ w + b); d_model (N) stays resident (LN needs the full row),
    K is tiled with an f32 accumulator when the weight panel is large."""
    M, K = x2d.shape
    N = w.shape[1]
    tm = _pick_tile(M, (256, 128, 64, 32, 16))
    if K * N * 2 * 2 <= _WEIGHT_SLAB_BYTES:
        tk = K
    else:
        tk = _pick_tile(K, (1024, 512, 256, 128))
    nk = K // tk
    return pl.pallas_call(
        functools.partial(_linear_add_ln_kernel, eps=eps),
        grid=(M // tm, nk),
        in_specs=[
            pl.BlockSpec((tm, tk), lambda i, k: (i, k)),
            pl.BlockSpec((tk, N), lambda i, k: (k, 0)),
            pl.BlockSpec((1, N), lambda i, k: (0, 0)),
            pl.BlockSpec((tm, N), lambda i, k: (i, 0)),
            pl.BlockSpec((1, N), lambda i, k: (0, 0)),
            pl.BlockSpec((1, N), lambda i, k: (0, 0)),
        ],
        out_specs=pl.BlockSpec((tm, N), lambda i, k: (i, 0)),
        out_shape=jax.ShapeDtypeStruct((M, N), x2d.dtype),
        scratch_shapes=[pltpu.VMEM((tm, N), jnp.float32)],
        compiler_params=pltpu.CompilerParams(
            dimension_semantics=("parallel", "arbitrary"),
            vmem_limit_bytes=VMEM_LIMIT),
    )(x2d, w, b, resid, gamma, beta)


# ----------------------------- attention kernels ----------------------------

def _self_attn_kernel(q_ref, k_ref, v_ref, pad_ref, o_ref, *, nhead, scale):
    # q_ref: (1, tq, D); k_ref/v_ref: (1, T, D); pad_ref: (1, 1, T) additive f32
    _, tq, D = q_ref.shape
    T = k_ref.shape[1]
    dh = D // nhead
    qi = pl.program_id(1)

    # (tq, T) causal + key-padding strip, built in-kernel (no (B,T,T) HBM mask)
    padd = pad_ref[0].astype(jnp.float32)                        # (1, T)
    row = qi * tq + jax.lax.broadcasted_iota(jnp.int32, (tq, T), 0)
    col = jax.lax.broadcasted_iota(jnp.int32, (tq, T), 1)
    mask_add = jnp.where(col > row, NEG_INF, 0.0) + padd         # (tq, T)

    for h in range(nhead):
        hs = h * dh
        # ref slices (strided loads), scale folded into Q once (tq*dh per head)
        qh = (q_ref[0, :, hs:hs + dh] * scale).astype(k_ref.dtype)
        kh = k_ref[0, :, hs:hs + dh]
        vh = v_ref[0, :, hs:hs + dh]
        s = jnp.dot(qh, kh.T, preferred_element_type=jnp.float32) + mask_add
        s = s - jnp.max(s, axis=-1, keepdims=True)
        p = jnp.exp(s)
        p = p * pl.reciprocal(jnp.sum(p, axis=-1, keepdims=True), approx=True)
        o = jnp.dot(p.astype(vh.dtype), vh, preferred_element_type=jnp.float32)
        o_ref[0, :, hs:hs + dh] = o.astype(o_ref.dtype)          # no concat epilogue


def self_attention(qkv, pad_add, nhead):
    # qkv: (B, T, 3D) bf16 (columns [Q | K | V]); pad_add: (B, 1, T) additive f32
    B, T, D3 = qkv.shape
    D = D3 // 3
    assert D % 128 == 0, "d_model must be a multiple of 128 for fused-QKV blocking"
    tq = _pick_tile(T, (512, 256, 128, 64, 32, 16, 8))
    scale = 1.0 / math.sqrt(D // nhead)
    return pl.pallas_call(
        functools.partial(_self_attn_kernel, nhead=nhead, scale=scale),
        grid=(B, T // tq),
        in_specs=[
            pl.BlockSpec((1, tq, D), lambda b, q: (b, q, 0)),   # Q tile
            pl.BlockSpec((1, T, D), lambda b, q: (b, 0, 1)),    # K (resident over q tiles)
            pl.BlockSpec((1, T, D), lambda b, q: (b, 0, 2)),    # V
            pl.BlockSpec((1, 1, T), lambda b, q: (b, 0, 0)),
        ],
        out_specs=pl.BlockSpec((1, tq, D), lambda b, q: (b, q, 0)),  # lane-dense (tq, D)
        out_shape=jax.ShapeDtypeStruct((B, T, D), qkv.dtype),
        compiler_params=pltpu.CompilerParams(
            dimension_semantics=("parallel", "parallel"),
            vmem_limit_bytes=VMEM_LIMIT),
    )(qkv, qkv, qkv, pad_add)


def _cross_attn_kernel(q_ref, k_ref, v_ref, pad_ref, *out_refs,
                       nhead, scale, want_w):
    o_ref = out_refs[0]
    w_ref = out_refs[1] if want_w else None
    _, tq, D = q_ref.shape
    S = k_ref.shape[1]
    dh = D // nhead
    mask_add = pad_ref[0].astype(jnp.float32)                    # (1, S) key padding

    w_acc = jnp.zeros((tq, S), jnp.float32) if want_w else None
    for h in range(nhead):
        hs = h * dh
        qh = (q_ref[0, :, hs:hs + dh] * scale).astype(k_ref.dtype)
        kh = k_ref[0, :, hs:hs + dh]
        vh = v_ref[0, :, hs:hs + dh]
        s = jnp.dot(qh, kh.T, preferred_element_type=jnp.float32) + mask_add
        s = s - jnp.max(s, axis=-1, keepdims=True)
        p = jnp.exp(s)
        p = p * pl.reciprocal(jnp.sum(p, axis=-1, keepdims=True), approx=True)
        if want_w:
            w_acc = w_acc + p                                    # head-avg in-kernel
        o = jnp.dot(p.astype(vh.dtype), vh, preferred_element_type=jnp.float32)
        o_ref[0, :, hs:hs + dh] = o.astype(o_ref.dtype)
    if want_w:
        w_ref[0] = (w_acc * (1.0 / nhead)).astype(w_ref.dtype)


def cross_attention(q, kv, pad_add, nhead, want_w):
    # q: (B, T, D); kv: (B, S, 2D) (columns [K | V]); pad_add: (B, 1, S)
    B, T, D = q.shape
    S = kv.shape[1]
    assert D % 128 == 0, "d_model must be a multiple of 128 for fused-KV blocking"
    tq = _pick_tile(T, (512, 256, 128, 64, 32, 16, 8))
    scale = 1.0 / math.sqrt(D // nhead)
    out_specs = [pl.BlockSpec((1, tq, D), lambda b, qi: (b, qi, 0))]
    out_shape = [jax.ShapeDtypeStruct((B, T, D), q.dtype)]
    if want_w:
        out_specs.append(pl.BlockSpec((1, tq, S), lambda b, qi: (b, qi, 0)))
        out_shape.append(jax.ShapeDtypeStruct((B, T, S), jnp.float32))
    res = pl.pallas_call(
        functools.partial(_cross_attn_kernel, nhead=nhead, scale=scale,
                          want_w=want_w),
        grid=(B, T // tq),
        in_specs=[
            pl.BlockSpec((1, tq, D), lambda b, qi: (b, qi, 0)),
            pl.BlockSpec((1, S, D), lambda b, qi: (b, 0, 0)),    # K (resident)
            pl.BlockSpec((1, S, D), lambda b, qi: (b, 0, 1)),    # V
            pl.BlockSpec((1, 1, S), lambda b, qi: (b, 0, 0)),
        ],
        out_specs=out_specs,
        out_shape=out_shape,
        compiler_params=pltpu.CompilerParams(
            dimension_semantics=("parallel", "parallel"),
            vmem_limit_bytes=VMEM_LIMIT),
    )(q, kv, kv, pad_add)
    if want_w:
        return res[0], res[1]
    return res[0], None


# ----------------------- vocab projection in (T,B,V) ------------------------

def _vocab_tbv_kernel(x_ref, w_ref, b_ref, o_ref):
    y = jnp.dot(x_ref[0], w_ref[...], preferred_element_type=jnp.float32)
    o_ref[...] = (y + b_ref[...].astype(jnp.float32)).astype(o_ref.dtype)


def vocab_projection(x_btd, w, b):
    """x: (B, T, D) -> logits (T, B, V) f32, written directly in (T, B, V) layout
    via a flattened (T, B*V) output (no (B,T,V) f32 HBM transpose afterwards)."""
    B, T, D = x_btd.shape
    V = w.shape[1]
    if V % 128 != 0:
        # Fallback for lane-unfriendly vocab sizes.
        y = linear(x_btd.reshape(B * T, D), w, b, out_dtype=jnp.float32)
        return y.reshape(B, T, V).transpose(1, 0, 2)
    tn = _pick_tile(V, (512, 256, 128))
    tt = _pick_tile(T, (256, 128, 64, 32, 16, 8))
    nv = V // tn
    out = pl.pallas_call(
        _vocab_tbv_kernel,
        grid=(nv, B, T // tt),          # vocab tiles outermost: weight streamed once
        in_specs=[
            pl.BlockSpec((1, tt, D), lambda j, bb, t: (bb, t, 0)),
            pl.BlockSpec((D, tn), lambda j, bb, t: (0, j)),
            pl.BlockSpec((1, tn), lambda j, bb, t: (0, j)),
        ],
        out_specs=pl.BlockSpec((tt, tn), lambda j, bb, t: (t, bb * nv + j)),
        out_shape=jax.ShapeDtypeStruct((T, B * V), jnp.float32),
        compiler_params=pltpu.CompilerParams(
            dimension_semantics=("parallel", "parallel", "parallel"),
            vmem_limit_bytes=VMEM_LIMIT),
    )(x_btd, w, b)
    return out.reshape(T, B, V)


# --------------------------- model composition ------------------------------

def decoder_layer(x, memory, tgt_pad_add, mem_pad_add, p, nhead, want_w):
    # post-norm (PyTorch default norm_first=False); dropout == identity (eval)
    B, T, D = x.shape
    S = memory.shape[1]
    xf = x.reshape(B * T, D)
    mf = memory.reshape(B * S, D)

    # self-attention: fused QKV projection, causal + tgt key-padding mask
    qkv = linear(xf, p["sa_wqkv"], p["sa_bqkv"])                    # (B*T, 3D)
    heads = self_attention(qkv.reshape(B, T, 3 * D), tgt_pad_add, nhead)
    x1 = linear_add_ln(heads.reshape(B * T, D), p["sa_wo"], p["sa_bo"],
                       xf, p["ln1_g"], p["ln1_b"])                  # out-proj + res + LN1

    # cross-attention: fused KV projection of memory, memory key-padding mask
    q = linear(x1, p["ca_wq"], p["ca_bq"])                          # (B*T, D)
    kv = linear(mf, p["ca_wkv"], p["ca_bkv"])                       # (B*S, 2D)
    heads2, attn_w = cross_attention(q.reshape(B, T, D),
                                     kv.reshape(B, S, 2 * D),
                                     mem_pad_add, nhead, want_w)
    x2 = linear_add_ln(heads2.reshape(B * T, D), p["ca_wo"], p["ca_bo"],
                       x1, p["ln2_g"], p["ln2_b"])                  # out-proj + res + LN2

    # feed-forward
    h = linear(x2, p["ff_w1"], p["ff_b1"], act="relu")
    x3 = linear_add_ln(h, p["ff_w2"], p["ff_b2"],
                       x2, p["ln3_g"], p["ln3_b"])                  # W2 + res + LN3
    return x3.reshape(B, T, D), attn_w


def decoder_forward(params, src_feats_list, src_lengths_list, tgt_input_ids,
                    padding_idx, nhead):
    # tgt_input_ids: (B, T) int32  (== tgt.input_ids in the PyTorch module)
    B, T = tgt_input_ids.shape
    tgt_ids = tgt_input_ids                                         # batch-first internally

    # encoder projections (Dropout->Linear->ReLU->Linear) + src padding masks
    # TODO(synk): Dropout and the optional gaussian feature noise are eval-mode identities.
    mem_list, mem_pad_list = [], []
    for feats, lengths in zip(src_feats_list, src_lengths_list):
        S, B_, Fdim = feats.shape
        src_idx = jnp.arange(S)[None, :]
        # matches PyTorch `src_indices > lengths` (position == length unmasked)
        mem_pad_list.append(src_idx > lengths[:, None])             # (B, S) True=pad
        fb = jnp.transpose(feats, (1, 0, 2)).reshape(B * S, Fdim).astype(jnp.bfloat16)
        h = linear(fb, params["enc_w1"], params["enc_b1"], act="relu")
        h = linear(h, params["enc_w2"], params["enc_b2"])
        mem_list.append(h.reshape(B, S, -1))
    memory = jnp.concatenate(mem_list, axis=1)                      # (B, S_tot, D)
    mem_pad = jnp.concatenate(mem_pad_list, axis=1)                 # (B, S_tot)
    S_tot = memory.shape[1]

    # compact additive key-padding rows (masks are expanded in-kernel)
    tgt_pad_add = jnp.where(tgt_ids == padding_idx, NEG_INF, 0.0)
    tgt_pad_add = tgt_pad_add.astype(jnp.float32).reshape(B, 1, T)
    mem_pad_add = jnp.where(mem_pad, NEG_INF, 0.0)
    mem_pad_add = mem_pad_add.astype(jnp.float32).reshape(B, 1, S_tot)

    # embeddings: token + position (gather stays in XLA)
    x = jnp.take(params["tok_emb"], tgt_ids, axis=0)                # (B, T, D)
    x = (x + params["pos_emb"][:T][None, :, :]).astype(jnp.bfloat16)

    attn_w = None
    nl = len(params["layers"])
    for li, lp in enumerate(params["layers"]):
        x, w = decoder_layer(x, memory, tgt_pad_add, mem_pad_add, lp, nhead,
                             want_w=(li == nl - 1))
        if w is not None:
            attn_w = w

    logits = vocab_projection(x, params["vocab_w"], params["vocab_b"])   # (T, B, V)
    return logits, attn_w


# ------------------------------- init ---------------------------------------

def _xavier(key, shape, dtype=jnp.float32):
    fan_in, fan_out = shape[-2], shape[-1]
    bound = math.sqrt(6.0 / (fan_in + fan_out))
    return jax.random.uniform(key, shape, jnp.float32, -bound, bound).astype(dtype)


def init_params(key, vocab_size, d_model, nhead, dim_ff, num_layers,
                d_src_feat, max_len):
    keys = iter(jax.random.split(key, 1024))
    nk = lambda: next(keys)
    zf = lambda d: jnp.zeros((1, d), jnp.float32)
    onef = lambda d: jnp.ones((1, d), jnp.float32)
    W = lambda din, dout: _xavier(nk(), (din, dout), jnp.bfloat16)

    p = {
        "tok_emb": _xavier(nk(), (vocab_size, d_model), jnp.bfloat16),
        "pos_emb": _xavier(nk(), (max_len, d_model), jnp.bfloat16),
        "enc_w1": W(d_src_feat, dim_ff), "enc_b1": zf(dim_ff),
        "enc_w2": W(dim_ff, d_model), "enc_b2": zf(d_model),
        "vocab_w": W(d_model, vocab_size), "vocab_b": zf(vocab_size),
    }
    layers = []
    for _ in range(num_layers):
        layers.append({
            "sa_wqkv": W(d_model, 3 * d_model), "sa_bqkv": zf(3 * d_model),
            "sa_wo": W(d_model, d_model), "sa_bo": zf(d_model),
            "ca_wq": W(d_model, d_model), "ca_bq": zf(d_model),
            "ca_wkv": W(d_model, 2 * d_model), "ca_bkv": zf(2 * d_model),
            "ca_wo": W(d_model, d_model), "ca_bo": zf(d_model),
            "ff_w1": W(d_model, dim_ff), "ff_b1": zf(dim_ff),
            "ff_w2": W(dim_ff, d_model), "ff_b2": zf(d_model),
            "ln1_g": onef(d_model), "ln1_b": zf(d_model),
            "ln2_g": onef(d_model), "ln2_b": zf(d_model),
            "ln3_g": onef(d_model), "ln3_b": zf(d_model),
        })
    p["layers"] = layers
    return p


# -------------------------------- main ---------------------------------------

if __name__ == "__main__":
    vocab_size, padding_idx, max_len = 128, 0, 16
    d_model, nhead, dim_ff, num_layers = 128, 4, 256, 2
    d_src_feat = 48
    B, T, S = 2, 8, 8

    key = jax.random.PRNGKey(0)
    kp, kf, kt = jax.random.split(key, 3)
    params = init_params(kp, vocab_size, d_model, nhead, dim_ff, num_layers,
                         d_src_feat, max_len)

    # single task ('paraphrase'), combination_mode='none'
    src_feats = jax.random.normal(kf, (S, B, d_src_feat), jnp.float32)
    src_lengths = jnp.array([S - 1, S - 3], jnp.int32)
    tgt_ids = jax.random.randint(kt, (B, T), 1, vocab_size).astype(jnp.int32)
    tgt_ids = tgt_ids.at[0, T - 2:].set(padding_idx)   # some padding at the end

    fwd = jax.jit(functools.partial(decoder_forward,
                                    padding_idx=padding_idx, nhead=nhead))
    logits, attn_w = fwd(params, [src_feats], [src_lengths], tgt_ids)
    jax.block_until_ready((logits, attn_w))

    assert logits.shape == (T, B, vocab_size)
    assert attn_w.shape == (B, T, S)
    assert bool(jnp.all(jnp.isfinite(logits)))
    assert bool(jnp.all(jnp.isfinite(attn_w)))
    print("KERNEL_OK")
</pallas_src>

<mosaic_0001>
module attributes {stable_mosaic.version = 11 : i64} {
  func.func @_linear_kernel_direct(%arg0: i32, %arg1: i32, %arg2: i32, %arg3: memref<16x128xbf16, #tpu.memory_space<vmem>>, %arg4: memref<128x128xbf16, #tpu.memory_space<vmem>>, %arg5: memref<1x128xf32, #tpu.memory_space<vmem>>, %arg6: memref<16x128xbf16, #tpu.memory_space<vmem>>) attributes {dimension_semantics = [#tpu.dimension_semantics<parallel>, #tpu.dimension_semantics<parallel>, #tpu.dimension_semantics<arbitrary>], iteration_bounds = array<i64: 1, 1, 1>, scalar_prefetch = 0 : i64, scratch_operands = 0 : i64, tpu.core_type = #tpu.core_type<tc>, window_params = [{transform_indices = @transform_0, window_bounds = array<i64: 16, 128>}, {transform_indices = @transform_1, window_bounds = array<i64: 128, 128>}, {transform_indices = @transform_2, window_bounds = array<i64: 1, 128>}, {transform_indices = @transform_3, window_bounds = array<i64: 16, 128>}]} {
    %c0 = arith.constant 0 : index
    %c0_0 = arith.constant 0 : index
    %0 = vector.load %arg3[%c0, %c0_0] : memref<16x128xbf16, #tpu.memory_space<vmem>>, vector<16x128xbf16>
    %c0_1 = arith.constant 0 : index
    %c0_2 = arith.constant 0 : index
    %1 = vector.load %arg4[%c0_1, %c0_2] : memref<128x128xbf16, #tpu.memory_space<vmem>>, vector<128x128xbf16>
    %cst = arith.constant dense<0.000000e+00> : vector<16x128xf32>
    %2 = tpu.matmul %0, %1, %cst {dimension_numbers = #tpu.dot_dimension_numbers<[1], [0], [0], [1], [0, 0, 1, 1], [], []>} : vector<16x128xbf16>, vector<128x128xbf16>, vector<16x128xf32> -> vector<16x128xf32>
    %c0_3 = arith.constant 0 : index
    %c0_4 = arith.constant 0 : index
    %3 = vector.load %arg5[%c0_3, %c0_4] : memref<1x128xf32, #tpu.memory_space<vmem>>, vector<1x128xf32>
    %4 = vector.broadcast %3 : vector<1x128xf32> to vector<16x128xf32>
    %5 = arith.addf %2, %4 : vector<16x128xf32>
    %6 = arith.truncf %5 : vector<16x128xf32> to vector<16x128xbf16>
    %c0_5 = arith.constant 0 : index
    %c0_6 = arith.constant 0 : index
    %7 = vector.load %arg6[%c0_5, %c0_6] : memref<16x128xbf16, #tpu.memory_space<vmem>>, vector<16x128xbf16>
    tpu.vector_store %arg6[%c0_5, %c0_6], %6 {strides = array<i32>} : memref<16x128xbf16, #tpu.memory_space<vmem>>, vector<16x128xbf16>,
    return
  }
  func.func @transform_0(%arg0: i32, %arg1: i32, %arg2: i32) -> (i32, i32) {
    %c0_i32 = arith.constant 0 : i32
    return %arg1, %arg2 : i32, i32
  }
  func.func @transform_1(%arg0: i32, %arg1: i32, %arg2: i32) -> (i32, i32) {
    %c0_i32 = arith.constant 0 : i32
    return %arg2, %arg0 : i32, i32
  }
  func.func @transform_2(%arg0: i32, %arg1: i32, %arg2: i32) -> (i32, i32) {
    %c0_i32 = arith.constant 0 : i32
    %c0_i32_0 = arith.constant 0 : i32
    return %c0_i32, %arg0 : i32, i32
  }
  func.func @transform_3(%arg0: i32, %arg1: i32, %arg2: i32) -> (i32, i32) {
    %c0_i32 = arith.constant 0 : i32
    return %arg1, %arg0 : i32, i32
  }
}

module attributes {stable_mosaic.version = 11 : i64} {
  func.func @_linear_kernel_direct(%arg0: i32, %arg1: i32, %arg2: i32, %arg3: memref<16x128xbf16, #tpu.memory_space<vmem>>, %arg4: memref<128x128xbf16, #tpu.memory_space<vmem>>, %arg5: memref<1x128xf32, #tpu.memory_space<vmem>>, %arg6: memref<16x128xbf16, #tpu.memory_space<vmem>>) attributes {dimension_semantics = [#tpu.dimension_semantics<parallel>, #tpu.dimension_semantics<parallel>, #tpu.dimension_semantics<arbitrary>], iteration_bounds = array<i64: 3, 1, 1>, scalar_prefetch = 0 : i64, scratch_operands = 0 : i64, tpu.core_type = #tpu.core_type<tc>, window_params = [{transform_indices = @transform_0, window_bounds = array<i64: 16, 128>}, {transform_indices = @transform_1, window_bounds = array<i64: 128, 128>}, {transform_indices = @transform_2, window_bounds = array<i64: 1, 128>}, {transform_indices = @transform_3, window_bounds = array<i64: 16, 128>}]} {
    %c0 = arith.constant 0 : index
    %c0_0 = arith.constant 0 : index
    %0 = vector.load %arg3[%c0, %c0_0] : memref<16x128xbf16, #tpu.memory_space<vmem>>, vector<16x128xbf16>
    %c0_1 = arith.constant 0 : index
    %c0_2 = arith.constant 0 : index
    %1 = vector.load %arg4[%c0_1, %c0_2] : memref<128x128xbf16, #tpu.memory_space<vmem>>, vector<128x128xbf16>
    %cst = arith.constant dense<0.000000e+00> : vector<16x128xf32>
    %2 = tpu.matmul %0, %1, %cst {dimension_numbers = #tpu.dot_dimension_numbers<[1], [0], [0], [1], [0, 0, 1, 1], [], []>} : vector<16x128xbf16>, vector<128x128xbf16>, vector<16x128xf32> -> vector<16x128xf32>
    %c0_3 = arith.constant 0 : index
    %c0_4 = arith.constant 0 : index
    %3 = vector.load %arg5[%c0_3, %c0_4] : memref<1x128xf32, #tpu.memory_space<vmem>>, vector<1x128xf32>
    %4 = vector.broadcast %3 : vector<1x128xf32> to vector<16x128xf32>
    %5 = arith.addf %2, %4 : vector<16x128xf32>
    %6 = arith.truncf %5 : vector<16x128xf32> to vector<16x128xbf16>
    %c0_5 = arith.constant 0 : index
    %c0_6 = arith.constant 0 : index
    %7 = vector.load %arg6[%c0_5, %c0_6] : memref<16x128xbf16, #tpu.memory_space<vmem>>, vector<16x128xbf16>
    tpu.vector_store %arg6[%c0_5, %c0_6], %6 {strides = array<i32>} : memref<16x128xbf16, #tpu.memory_space<vmem>>, vector<16x128xbf16>,
    return
  }
  func.func @transform_0(%arg0: i32, %arg1: i32, %arg2: i32) -> (i32, i32) {
    %c0_i32 = arith.constant 0 : i32
    return %arg1, %arg2 : i32, i32
  }
  func.func @transform_1(%arg0: i32, %arg1: i32, %arg2: i32) -> (i32, i32) {
    %c0_i32 = arith.constant 0 : i32
    return %arg2, %arg0 : i32, i32
  }
  func.func @transform_2(%arg0: i32, %arg1: i32, %arg2: i32) -> (i32, i32) {
    %c0_i32 = arith.constant 0 : i32
    %c0_i32_0 = arith.constant 0 : i32
    return %c0_i32, %arg0 : i32, i32
  }
  func.func @transform_3(%arg0: i32, %arg1: i32, %arg2: i32) -> (i32, i32) {
    %c0_i32 = arith.constant 0 : i32
    return %arg1, %arg0 : i32, i32
  }
}

module attributes {stable_mosaic.version = 11 : i64} {
  func.func @_linear_add_ln_kernel(%arg0: i32, %arg1: i32, %arg2: memref<16x128xbf16, #tpu.memory_space<vmem>>, %arg3: memref<128x128xbf16, #tpu.memory_space<vmem>>, %arg4: memref<1x128xf32, #tpu.memory_space<vmem>>, %arg5: memref<16x128xbf16, #tpu.memory_space<vmem>>, %arg6: memref<1x128xf32, #tpu.memory_space<vmem>>, %arg7: memref<1x128xf32, #tpu.memory_space<vmem>>, %arg8: memref<16x128xbf16, #tpu.memory_space<vmem>>, %arg9: memref<16x128xf32, #tpu.memory_space<vmem>>) attributes {dimension_semantics = [#tpu.dimension_semantics<parallel>, #tpu.dimension_semantics<arbitrary>], iteration_bounds = array<i64: 1, 1>, scalar_prefetch = 0 : i64, scratch_operands = 1 : i64, tpu.core_type = #tpu.core_type<tc>, window_params = [{transform_indices = @transform_0, window_bounds = array<i64: 16, 128>}, {transform_indices = @transform_1, window_bounds = array<i64: 128, 128>}, {pipeline_mode = #tpu.pipeline_mode<synchronous>, transform_indices = @transform_2, window_bounds = array<i64: 1, 128>}, {transform_indices = @transform_3, window_bounds = array<i64: 16, 128>}, {pipeline_mode = #tpu.pipeline_mode<synchronous>, transform_indices = @transform_4, window_bounds = array<i64: 1, 128>}, {pipeline_mode = #tpu.pipeline_mode<synchronous>, transform_indices = @transform_5, window_bounds = array<i64: 1, 128>}, {transform_indices = @transform_6, window_bounds = array<i64: 16, 128>}]} {
    %c0_i32 = arith.constant 0 : i32
    %0 = arith.cmpi eq, %arg1, %c0_i32 : i32
    %1 = arith.extui %0 : i1 to i32
    %c0_i32_0 = arith.constant 0 : i32
    %2 = arith.cmpi ne, %1, %c0_i32_0 : i32
    scf.if %2 {
      %c0_10 = arith.constant 0 : index
      %c0_11 = arith.constant 0 : index
      %12 = vector.load %arg5[%c0_10, %c0_11] : memref<16x128xbf16, #tpu.memory_space<vmem>>, vector<16x128xbf16>
      %13 = arith.extf %12 : vector<16x128xbf16> to vector<16x128xf32>
      %c0_12 = arith.constant 0 : index
      %c0_13 = arith.constant 0 : index
      %14 = vector.load %arg4[%c0_12, %c0_13] : memref<1x128xf32, #tpu.memory_space<vmem>>, vector<1x128xf32>
      %15 = vector.broadcast %14 : vector<1x128xf32> to vector<16x128xf32>
      %16 = arith.addf %13, %15 : vector<16x128xf32>
      %c0_14 = arith.constant 0 : index
      %c0_15 = arith.constant 0 : index
      %17 = vector.load %arg9[%c0_14, %c0_15] : memref<16x128xf32, #tpu.memory_space<vmem>>, vector<16x128xf32>
      tpu.vector_store %arg9[%c0_14, %c0_15], %16 {strides = array<i32>} : memref<16x128xf32, #tpu.memory_space<vmem>>, vector<16x128xf32>,
    } else {
    }
    %c0 = arith.constant 0 : index
    %c0_1 = arith.constant 0 : index
    %3 = vector.load %arg9[%c0, %c0_1] : memref<16x128xf32, #tpu.memory_space<vmem>>, vector<16x128xf32>
    %c0_2 = arith.constant 0 : index
    %c0_3 = arith.constant 0 : index
    %4 = vector.load %arg2[%c0_2, %c0_3] : memref<16x128xbf16, #tpu.memory_space<vmem>>, vector<16x128xbf16>
    %c0_4 = arith.constant 0 : index
    %c0_5 = arith.constant 0 : index
    %5 = vector.load %arg3[%c0_4, %c0_5] : memref<128x128xbf16, #tpu.memory_space<vmem>>, vector<128x128xbf16>
    %cst = arith.constant dense<0.000000e+00> : vector<16x128xf32>
    %6 = tpu.matmul %4, %5, %cst {dimension_numbers = #tpu.dot_dimension_numbers<[1], [0], [0], [1], [0, 0, 1, 1], [], []>} : vector<16x128xbf16>, vector<128x128xbf16>, vector<16x128xf32> -> vector<16x128xf32>
    %7 = arith.addf %3, %6 : vector<16x128xf32>
    %c0_6 = arith.constant 0 : index
    %c0_7 = arith.constant 0 : index
    %8 = vector.load %arg9[%c0_6, %c0_7] : memref<16x128xf32, #tpu.memory_space<vmem>>, vector<16x128xf32>
    tpu.vector_store %arg9[%c0_6, %c0_7], %7 {strides = array<i32>} : memref<16x128xf32, #tpu.memory_space<vmem>>, vector<16x128xf32>,
    %c0_i32_8 = arith.constant 0 : i32
    %9 = arith.cmpi eq, %arg1, %c0_i32_8 : i32
    %10 = arith.extui %9 : i1 to i32
    %c0_i32_9 = arith.constant 0 : i32
    %11 = arith.cmpi ne, %10, %c0_i32_9 : i32
    scf.if %11 {
      %c0_10 = arith.constant 0 : index
      %c0_11 = arith.constant 0 : index
      %12 = vector.load %arg9[%c0_10, %c0_11] : memref<16x128xf32, #tpu.memory_space<vmem>>, vector<16x128xf32>
      %cst_12 = arith.constant dense<0.000000e+00> : vector<16xf32>
      %13 = vector.multi_reduction <add>, %12, %cst_12 [1] : vector<16x128xf32> to vector<16xf32>
      %14 = vector.shape_cast %13 : vector<16xf32> to vector<16x1xf32>
      %cst_13 = arith.constant 1.280000e+02 : f32
      %15 = vector.broadcast %cst_13 : f32 to vector<16x1xf32>
      %16 = arith.divf %14, %15 : vector<16x1xf32>
      %17 = vector.broadcast %16 : vector<16x1xf32> to vector<16x128xf32>
      %18 = arith.subf %12, %17 : vector<16x128xf32>
      %19 = arith.mulf %18, %18 : vector<16x128xf32>
      %cst_14 = arith.constant dense<0.000000e+00> : vector<16xf32>
      %20 = vector.multi_reduction <add>, %19, %cst_14 [1] : vector<16x128xf32> to vector<16xf32>
      %21 = vector.shape_cast %20 : vector<16xf32> to vector<16x1xf32>
      %cst_15 = arith.constant 1.280000e+02 : f32
      %22 = vector.broadcast %cst_15 : f32 to vector<16x1xf32>
      %23 = arith.divf %21, %22 : vector<16x1xf32>
      %cst_16 = arith.constant 9.99999974E-6 : f32
      %24 = vector.broadcast %cst_16 : f32 to vector<16x1xf32>
      %25 = arith.addf %23, %24 : vector<16x1xf32>
      %26 = math.rsqrt %25 : vector<16x1xf32>
      %27 = vector.broadcast %26 : vector<16x1xf32> to vector<16x128xf32>
      %28 = arith.mulf %18, %27 : vector<16x128xf32>
      %c0_17 = arith.constant 0 : index
      %c0_18 = arith.constant 0 : index
      %29 = vector.load %arg6[%c0_17, %c0_18] : memref<1x128xf32, #tpu.memory_space<vmem>>, vector<1x128xf32>
      %30 = vector.broadcast %29 : vector<1x128xf32> to vector<16x128xf32>
      %31 = arith.mulf %28, %30 : vector<16x128xf32>
      %c0_19 = arith.constant 0 : index
      %c0_20 = arith.constant 0 : index
      %32 = vector.load %arg7[%c0_19, %c0_20] : memref<1x128xf32, #tpu.memory_space<vmem>>, vector<1x128xf32>
      %33 = vector.broadcast %32 : vector<1x128xf32> to vector<16x128xf32>
      %34 = arith.addf %31, %33 : vector<16x128xf32>
      %35 = arith.truncf %34 : vector<16x128xf32> to vector<16x128xbf16>
      %c0_21 = arith.constant 0 : index
      %c0_22 = arith.constant 0 : index
      %36 = vector.load %arg8[%c0_21, %c0_22] : memref<16x128xbf16, #tpu.memory_space<vmem>>, vector<16x128xbf16>
      tpu.vector_store %arg8[%c0_21, %c0_22], %35 {strides = array<i32>} : memref<16x128xbf16, #tpu.memory_space<vmem>>, vector<16x128xbf16>,
    } else {
    }
    return
  }
  func.func @transform_0(%arg0: i32, %arg1: i32) -> (i32, i32) {
    %c0_i32 = arith.constant 0 : i32
    return %arg0, %arg1 : i32, i32
  }
  func.func @transform_1(%arg0: i32, %arg1: i32) -> (i32, i32) {
    %c0_i32 = arith.constant 0 : i32
    %c0_i32_0 = arith.constant 0 : i32
    return %arg1, %c0_i32 : i32, i32
  }
  func.func @transform_2(%arg0: i32, %arg1: i32) -> (i32, i32) {
    %c0_i32 = arith.constant 0 : i32
    %c0_i32_0 = arith.constant 0 : i32
    %c0_i32_1 = arith.constant 0 : i32
    return %c0_i32, %c0_i32_0 : i32, i32
  }
  func.func @transform_3(%arg0: i32, %arg1: i32) -> (i32, i32) {
    %c0_i32 = arith.constant 0 : i32
    %c0_i32_0 = arith.constant 0 : i32
    return %arg0, %c0_i32 : i32, i32
  }
  func.func @transform_4(%arg0: i32, %arg1: i32) -> (i32, i32) {
    %c0_i32 = arith.constant 0 : i32
    %c0_i32_0 = arith.constant 0 : i32
    %c0_i32_1 = arith.constant 0 : i32
    return %c0_i32, %c0_i32_0 : i32, i32
  }
  func.func @transform_5(%arg0: i32, %arg1: i32) -> (i32, i32) {
    %c0_i32 = arith.constant 0 : i32
    %c0_i32_0 = arith.constant 0 : i32
    %c0_i32_1 = arith.constant 0 : i32
    return %c0_i32, %c0_i32_0 : i32, i32
  }
  func.func @transform_6(%arg0: i32, %arg1: i32) -> (i32, i32) {
    %c0_i32 = arith.constant 0 : i32
    %c0_i32_0 = arith.constant 0 : i32
    return %arg0, %c0_i32 : i32, i32
  }
}

module attributes {stable_mosaic.version = 11 : i64} {
  func.func @_self_attn_kernel(%arg0: i32, %arg1: i32, %arg2: memref<1x8x128xbf16, #tpu.memory_space<vmem>>, %arg3: memref<1x8x128xbf16, #tpu.memory_space<vmem>>, %arg4: memref<1x8x128xbf16, #tpu.memory_space<vmem>>, %arg5: memref<1x1x8xf32, #tpu.memory_space<vmem>>, %arg6: memref<1x8x128xbf16, #tpu.memory_space<vmem>>) attributes {dimension_semantics = [#tpu.dimension_semantics<parallel>, #tpu.dimension_semantics<parallel>], iteration_bounds = array<i64: 2, 1>, scalar_prefetch = 0 : i64, scratch_operands = 0 : i64, tpu.core_type = #tpu.core_type<tc>, window_params = [{transform_indices = @transform_0, window_bounds = array<i64: 1, 8, 128>}, {transform_indices = @transform_1, window_bounds = array<i64: 1, 8, 128>}, {transform_indices = @transform_2, window_bounds = array<i64: 1, 8, 128>}, {transform_indices = @transform_3, window_bounds = array<i64: 1, 1, 8>}, {transform_indices = @transform_4, window_bounds = array<i64: 1, 8, 128>}]} {
    %c0 = arith.constant 0 : index
    %c0_0 = arith.constant 0 : index
    %c0_1 = arith.constant 0 : index
    %0 = vector.load %arg5[%c0, %c0_0, %c0_1] : memref<1x1x8xf32, #tpu.memory_space<vmem>>, vector<1x1x8xf32>
    %1 = vector.shape_cast %0 : vector<1x1x8xf32> to vector<1x8xf32>
    %c8_i32 = arith.constant 8 : i32
    %2 = arith.muli %arg1, %c8_i32 : i32
    %3 = tpu.iota {dimensions = array<i32: 0>} : vector<8x8xi32>
    %4 = vector.broadcast %2 : i32 to vector<8x8xi32>
    %5 = arith.addi %4, %3 : vector<8x8xi32>
    %6 = tpu.iota {dimensions = array<i32: 1>} : vector<8x8xi32>
    %7 = arith.cmpi sgt, %6, %5 : vector<8x8xi32>
    %cst = arith.constant -1.000000e+30 : f32
    %cst_2 = arith.constant 0.000000e+00 : f32
    %8 = vector.broadcast %cst : f32 to vector<8x8xf32>
    %9 = vector.broadcast %cst_2 : f32 to vector<8x8xf32>
    %10 = arith.select %7, %8, %9 : vector<8x8xi1>, vector<8x8xf32>
    %11 = vector.broadcast %1 : vector<1x8xf32> to vector<8x8xf32>
    %12 = arith.addf %10, %11 : vector<8x8xf32>
    %c0_3 = arith.constant 0 : index
    %c0_4 = arith.constant 0 : index
    %c0_5 = arith.constant 0 : index
    %13 = vector.load %arg2[%c0_3, %c0_4, %c0_5] : memref<1x8x128xbf16, #tpu.memory_space<vmem>>, vector<1x8x32xbf16>
    %14 = vector.shape_cast %13 : vector<1x8x32xbf16> to vector<8x32xbf16>
    %cst_6 = arith.constant 1.767580e-01 : bf16
    %15 = vector.broadcast %cst_6 : bf16 to vector<8x32xbf16>
    %16 = arith.mulf %14, %15 : vector<8x32xbf16>
    %c0_7 = arith.constant 0 : index
    %c0_8 = arith.constant 0 : index
    %c0_9 = arith.constant 0 : index
    %17 = vector.load %arg3[%c0_7, %c0_8, %c0_9] : memref<1x8x128xbf16, #tpu.memory_space<vmem>>, vector<1x8x32xbf16>
    %18 = vector.shape_cast %17 : vector<1x8x32xbf16> to vector<8x32xbf16>
    %c0_10 = arith.constant 0 : index
    %c0_11 = arith.constant 0 : index
    %c0_12 = arith.constant 0 : index
    %19 = vector.load %arg4[%c0_10, %c0_11, %c0_12] : memref<1x8x128xbf16, #tpu.memory_space<vmem>>, vector<1x8x32xbf16>
    %20 = vector.shape_cast %19 : vector<1x8x32xbf16> to vector<8x32xbf16>
    %21 = tpu.transpose %18, [1, 0] : vector<8x32xbf16> -> vector<32x8xbf16>
    %cst_13 = arith.constant dense<0.000000e+00> : vector<8x8xf32>
    %22 = tpu.matmul %16, %21, %cst_13 {dimension_numbers = #tpu.dot_dimension_numbers<[1], [0], [0], [1], [0, 0, 1, 1], [], []>} : vector<8x32xbf16>, vector<32x8xbf16>, vector<8x8xf32> -> vector<8x8xf32>
    %23 = arith.addf %22, %12 : vector<8x8xf32>
    %cst_14 = arith.constant dense<0xFF800000> : vector<8xf32>
    %24 = vector.multi_reduction <maximumf>, %23, %cst_14 [1] : vector<8x8xf32> to vector<8xf32>
    %25 = vector.shape_cast %24 : vector<8xf32> to vector<8x1xf32>
    %26 = vector.broadcast %25 : vector<8x1xf32> to vector<8x8xf32>
    %27 = arith.subf %23, %26 : vector<8x8xf32>
    %28 = math.exp %27 : vector<8x8xf32>
    %cst_15 = arith.constant dense<0.000000e+00> : vector<8xf32>
    %29 = vector.multi_reduction <add>, %28, %cst_15 [1] : vector<8x8xf32> to vector<8xf32>
    %30 = vector.shape_cast %29 : vector<8xf32> to vector<8x1xf32>
    %31 = tpu.reciprocal %30 {approx = true} : vector<8x1xf32> -> vector<8x1xf32>
    %32 = vector.broadcast %31 : vector<8x1xf32> to vector<8x8xf32>
    %33 = arith.mulf %28, %32 : vector<8x8xf32>
    %34 = arith.truncf %33 : vector<8x8xf32> to vector<8x8xbf16>
    %cst_16 = arith.constant dense<0.000000e+00> : vector<8x32xf32>
    %35 = tpu.matmul %34, %20, %cst_16 {dimension_numbers = #tpu.dot_dimension_numbers<[1], [0], [0], [1], [0, 0, 1, 1], [], []>} : vector<8x8xbf16>, vector<8x32xbf16>, vector<8x32xf32> -> vector<8x32xf32>
    %36 = arith.truncf %35 : vector<8x32xf32> to vector<8x32xbf16>
    %c0_17 = arith.constant 0 : index
    %c0_18 = arith.constant 0 : index
    %c0_19 = arith.constant 0 : index
    %37 = vector.load %arg6[%c0_17, %c0_18, %c0_19] : memref<1x8x128xbf16, #tpu.memory_space<vmem>>, vector<1x8x32xbf16>
    %38 = vector.shape_cast %37 : vector<1x8x32xbf16> to vector<8x32xbf16>
    %39 = vector.shape_cast %36 : vector<8x32xbf16> to vector<1x8x32xbf16>
    tpu.vector_store %arg6[%c0_17, %c0_18, %c0_19], %39 {strides = array<i32>} : memref<1x8x128xbf16, #tpu.memory_space<vmem>>, vector<1x8x32xbf16>,
    %c0_20 = arith.constant 0 : index
    %c0_21 = arith.constant 0 : index
    %c32 = arith.constant 32 : index
    %40 = vector.load %arg2[%c0_20, %c0_21, %c32] : memref<1x8x128xbf16, #tpu.memory_space<vmem>>, vector<1x8x32xbf16>
    %41 = vector.shape_cast %40 : vector<1x8x32xbf16> to vector<8x32xbf16>
    %cst_22 = arith.constant 1.767580e-01 : bf16
    %42 = vector.broadcast %cst_22 : bf16 to vector<8x32xbf16>
    %43 = arith.mulf %41, %42 : vector<8x32xbf16>
    %c0_23 = arith.constant 0 : index
    %c0_24 = arith.constant 0 : index
    %c32_25 = arith.constant 32 : index
    %44 = vector.load %arg3[%c0_23, %c0_24, %c32_25] : memref<1x8x128xbf16, #tpu.memory_space<vmem>>, vector<1x8x32xbf16>
    %45 = vector.shape_cast %44 : vector<1x8x32xbf16> to vector<8x32xbf16>
    %c0_26 = arith.constant 0 : index
    %c0_27 = arith.constant 0 : index
    %c32_28 = arith.constant 32 : index
    %46 = vector.load %arg4[%c0_26, %c0_27, %c32_28] : memref<1x8x128xbf16, #tpu.memory_space<vmem>>, vector<1x8x32xbf16>
    %47 = vector.shape_cast %46 : vector<1x8x32xbf16> to vector<8x32xbf16>
    %48 = tpu.transpose %45, [1, 0] : vector<8x32xbf16> -> vector<32x8xbf16>
    %cst_29 = arith.constant dense<0.000000e+00> : vector<8x8xf32>
    %49 = tpu.matmul %43, %48, %cst_29 {dimension_numbers = #tpu.dot_dimension_numbers<[1], [0], [0], [1], [0, 0, 1, 1], [], []>} : vector<8x32xbf16>, vector<32x8xbf16>, vector<8x8xf32> -> vector<8x8xf32>
    %50 = arith.addf %49, %12 : vector<8x8xf32>
    %cst_30 = arith.constant dense<0xFF800000> : vector<8xf32>
    %51 = vector.multi_reduction <maximumf>, %50, %cst_30 [1] : vector<8x8xf32> to vector<8xf32>
    %52 = vector.shape_cast %51 : vector<8xf32> to vector<8x1xf32>
    %53 = vector.broadcast %52 : vector<8x1xf32> to vector<8x8xf32>
    %54 = arith.subf %50, %53 : vector<8x8xf32>
    %55 = math.exp %54 : vector<8x8xf32>
    %cst_31 = arith.constant dense<0.000000e+00> : vector<8xf32>
    %56 = vector.multi_reduction <add>, %55, %cst_31 [1] : vector<8x8xf32> to vector<8xf32>
    %57 = vector.shape_cast %56 : vector<8xf32> to vector<8x1xf32>
    %58 = tpu.reciprocal %57 {approx = true} : vector<8x1xf32> -> vector<8x1xf32>
    %59 = vector.broadcast %58 : vector<8x1xf32> to vector<8x8xf32>
    %60 = arith.mulf %55, %59 : vector<8x8xf32>
    %61 = arith.truncf %60 : vector<8x8xf32> to vector<8x8xbf16>
    %cst_32 = arith.constant dense<0.000000e+00> : vector<8x32xf32>
    %62 = tpu.matmul %61, %47, %cst_32 {dimension_numbers = #tpu.dot_dimension_numbers<[1], [0], [0], [1], [0, 0, 1, 1], [], []>} : vector<8x8xbf16>, vector<8x32xbf16>, vector<8x32xf32> -> vector<8x32xf32>
    %63 = arith.truncf %62 : vector<8x32xf32> to vector<8x32xbf16>
    %c0_33 = arith.constant 0 : index
    %c0_34 = arith.constant 0 : index
    %c32_35 = arith.constant 32 : index
    %64 = vector.load %arg6[%c0_33, %c0_34, %c32_35] : memref<1x8x128xbf16, #tpu.memory_space<vmem>>, vector<1x8x32xbf16>
    %65 = vector.shape_cast %64 : vector<1x8x32xbf16> to vector<8x32xbf16>
    %66 = vector.shape_cast %63 : vector<8x32xbf16> to vector<1x8x32xbf16>
    tpu.vector_store %arg6[%c0_33, %c0_34, %c32_35], %66 {strides = array<i32>} : memref<1x8x128xbf16, #tpu.memory_space<vmem>>, vector<1x8x32xbf16>,
    %c0_36 = arith.constant 0 : index
    %c0_37 = arith.constant 0 : index
    %c64 = arith.constant 64 : index
    %67 = vector.load %arg2[%c0_36, %c0_37, %c64] : memref<1x8x128xbf16, #tpu.memory_space<vmem>>, vector<1x8x32xbf16>
    %68 = vector.shape_cast %67 : vector<1x8x32xbf16> to vector<8x32xbf16>
    %cst_38 = arith.constant 1.767580e-01 : bf16
    %69 = vector.broadcast %cst_38 : bf16 to vector<8x32xbf16>
    %70 = arith.mulf %68, %69 : vector<8x32xbf16>
    %c0_39 = arith.constant 0 : index
    %c0_40 = arith.constant 0 : index
    %c64_41 = arith.constant 64 : index
    %71 = vector.load %arg3[%c0_39, %c0_40, %c64_41] : memref<1x8x128xbf16, #tpu.memory_space<vmem>>, vector<1x8x32xbf16>
    %72 = vector.shape_cast %71 : vector<1x8x32xbf16> to vector<8x32xbf16>
    %c0_42 = arith.constant 0 : index
    %c0_43 = arith.constant 0 : index
    %c64_44 = arith.constant 64 : index
    %73 = vector.load %arg4[%c0_42, %c0_43, %c64_44] : memref<1x8x128xbf16, #tpu.memory_space<vmem>>, vector<1x8x32xbf16>
    %74 = vector.shape_cast %73 : vector<1x8x32xbf16> to vector<8x32xbf16>
    %75 = tpu.transpose %72, [1, 0] : vector<8x32xbf16> -> vector<32x8xbf16>
    %cst_45 = arith.constant dense<0.000000e+00> : vector<8x8xf32>
    %76 = tpu.matmul %70, %75, %cst_45 {dimension_numbers = #tpu.dot_dimension_numbers<[1], [0], [0], [1], [0, 0, 1, 1], [], []>} : vector<8x32xbf16>, vector<32x8xbf16>, vector<8x8xf32> -> vector<8x8xf32>
    %77 = arith.addf %76, %12 : vector<8x8xf32>
    %cst_46 = arith.constant dense<0xFF800000> : vector<8xf32>
    %78 = vector.multi_reduction <maximumf>, %77, %cst_46 [1] : vector<8x8xf32> to vector<8xf32>
    %79 = vector.shape_cast %78 : vector<8xf32> to vector<8x1xf32>
    %80 = vector.broadcast %79 : vector<8x1xf32> to vector<8x8xf32>
    %81 = arith.subf %77, %80 : vector<8x8xf32>
    %82 = math.exp %81 : vector<8x8xf32>
    %cst_47 = arith.constant dense<0.000000e+00> : vector<8xf32>
    %83 = vector.multi_reduction <add>, %82, %cst_47 [1] : vector<8x8xf32> to vector<8xf32>
    %84 = vector.shape_cast %83 : vector<8xf32> to vector<8x1xf32>
    %85 = tpu.reciprocal %84 {approx = true} : vector<8x1xf32> -> vector<8x1xf32>
    %86 = vector.broadcast %85 : vector<8x1xf32> to vector<8x8xf32>
    %87 = arith.mulf %82, %86 : vector<8x8xf32>
    %88 = arith.truncf %87 : vector<8x8xf32> to vector<8x8xbf16>
    %cst_48 = arith.constant dense<0.000000e+00> : vector<8x32xf32>
    %89 = tpu.matmul %88, %74, %cst_48 {dimension_numbers = #tpu.dot_dimension_numbers<[1], [0], [0], [1], [0, 0, 1, 1], [], []>} : vector<8x8xbf16>, vector<8x32xbf16>, vector<8x32xf32> -> vector<8x32xf32>
    %90 = arith.truncf %89 : vector<8x32xf32> to vector<8x32xbf16>
    %c0_49 = arith.constant 0 : index
    %c0_50 = arith.constant 0 : index
    %c64_51 = arith.constant 64 : index
    %91 = vector.load %arg6[%c0_49, %c0_50, %c64_51] : memref<1x8x128xbf16, #tpu.memory_space<vmem>>, vector<1x8x32xbf16>
    %92 = vector.shape_cast %91 : vector<1x8x32xbf16> to vector<8x32xbf16>
    %93 = vector.shape_cast %90 : vector<8x32xbf16> to vector<1x8x32xbf16>
    tpu.vector_store %arg6[%c0_49, %c0_50, %c64_51], %93 {strides = array<i32>} : memref<1x8x128xbf16, #tpu.memory_space<vmem>>, vector<1x8x32xbf16>,
    %c0_52 = arith.constant 0 : index
    %c0_53 = arith.constant 0 : index
    %c96 = arith.constant 96 : index
    %94 = vector.load %arg2[%c0_52, %c0_53, %c96] : memref<1x8x128xbf16, #tpu.memory_space<vmem>>, vector<1x8x32xbf16>
    %95 = vector.shape_cast %94 : vector<1x8x32xbf16> to vector<8x32xbf16>
    %cst_54 = arith.constant 1.767580e-01 : bf16
    %96 = vector.broadcast %cst_54 : bf16 to vector<8x32xbf16>
    %97 = arith.mulf %95, %96 : vector<8x32xbf16>
    %c0_55 = arith.constant 0 : index
    %c0_56 = arith.constant 0 : index
    %c96_57 = arith.constant 96 : index
    %98 = vector.load %arg3[%c0_55, %c0_56, %c96_57] : memref<1x8x128xbf16, #tpu.memory_space<vmem>>, vector<1x8x32xbf16>
    %99 = vector.shape_cast %98 : vector<1x8x32xbf16> to vector<8x32xbf16>
    %c0_58 = arith.constant 0 : index
    %c0_59 = arith.constant 0 : index
    %c96_60 = arith.constant 96 : index
    %100 = vector.load %arg4[%c0_58, %c0_59, %c96_60] : memref<1x8x128xbf16, #tpu.memory_space<vmem>>, vector<1x8x32xbf16>
    %101 = vector.shape_cast %100 : vector<1x8x32xbf16> to vector<8x32xbf16>
    %102 = tpu.transpose %99, [1, 0] : vector<8x32xbf16> -> vector<32x8xbf16>
    %cst_61 = arith.constant dense<0.000000e+00> : vector<8x8xf32>
    %103 = tpu.matmul %97, %102, %cst_61 {dimension_numbers = #tpu.dot_dimension_numbers<[1], [0], [0], [1], [0, 0, 1, 1], [], []>} : vector<8x32xbf16>, vector<32x8xbf16>, vector<8x8xf32> -> vector<8x8xf32>
    %104 = arith.addf %103, %12 : vector<8x8xf32>
    %cst_62 = arith.constant dense<0xFF800000> : vector<8xf32>
    %105 = vector.multi_reduction <maximumf>, %104, %cst_62 [1] : vector<8x8xf32> to vector<8xf32>
    %106 = vector.shape_cast %105 : vector<8xf32> to vector<8x1xf32>
    %107 = vector.broadcast %106 : vector<8x1xf32> to vector<8x8xf32>
    %108 = arith.subf %104, %107 : vector<8x8xf32>
    %109 = math.exp %108 : vector<8x8xf32>
    %cst_63 = arith.constant dense<0.000000e+00> : vector<8xf32>
    %110 = vector.multi_reduction <add>, %109, %cst_63 [1] : vector<8x8xf32> to vector<8xf32>
    %111 = vector.shape_cast %110 : vector<8xf32> to vector<8x1xf32>
    %112 = tpu.reciprocal %111 {approx = true} : vector<8x1xf32> -> vector<8x1xf32>
    %113 = vector.broadcast %112 : vector<8x1xf32> to vector<8x8xf32>
    %114 = arith.mulf %109, %113 : vector<8x8xf32>
    %115 = arith.truncf %114 : vector<8x8xf32> to vector<8x8xbf16>
    %cst_64 = arith.constant dense<0.000000e+00> : vector<8x32xf32>
    %116 = tpu.matmul %115, %101, %cst_64 {dimension_numbers = #tpu.dot_dimension_numbers<[1], [0], [0], [1], [0, 0, 1, 1], [], []>} : vector<8x8xbf16>, vector<8x32xbf16>, vector<8x32xf32> -> vector<8x32xf32>
    %117 = arith.truncf %116 : vector<8x32xf32> to vector<8x32xbf16>
    %c0_65 = arith.constant 0 : index
    %c0_66 = arith.constant 0 : index
    %c96_67 = arith.constant 96 : index
    %118 = vector.load %arg6[%c0_65, %c0_66, %c96_67] : memref<1x8x128xbf16, #tpu.memory_space<vmem>>, vector<1x8x32xbf16>
    %119 = vector.shape_cast %118 : vector<1x8x32xbf16> to vector<8x32xbf16>
    %120 = vector.shape_cast %117 : vector<8x32xbf16> to vector<1x8x32xbf16>
    tpu.vector_store %arg6[%c0_65, %c0_66, %c96_67], %120 {strides = array<i32>} : memref<1x8x128xbf16, #tpu.memory_space<vmem>>, vector<1x8x32xbf16>,
    return
  }
  func.func @transform_0(%arg0: i32, %arg1: i32) -> (i32, i32, i32) {
    %c0_i32 = arith.constant 0 : i32
    %c0_i32_0 = arith.constant 0 : i32
    return %arg0, %arg1, %c0_i32 : i32, i32, i32
  }
  func.func @transform_1(%arg0: i32, %arg1: i32) -> (i32, i32, i32) {
    %c0_i32 = arith.constant 0 : i32
    %c1_i32 = arith.constant 1 : i32
    %c0_i32_0 = arith.constant 0 : i32
    return %arg0, %c0_i32, %c1_i32 : i32, i32, i32
  }
  func.func @transform_2(%arg0: i32, %arg1: i32) -> (i32, i32, i32) {
    %c0_i32 = arith.constant 0 : i32
    %c2_i32 = arith.constant 2 : i32
    %c0_i32_0 = arith.constant 0 : i32
    return %arg0, %c0_i32, %c2_i32 : i32, i32, i32
  }
  func.func @transform_3(%arg0: i32, %arg1: i32) -> (i32, i32, i32) {
    %c0_i32 = arith.constant 0 : i32
    %c0_i32_0 = arith.constant 0 : i32
    %c0_i32_1 = arith.constant 0 : i32
    return %arg0, %c0_i32, %c0_i32_0 : i32, i32, i32
  }
  func.func @transform_4(%arg0: i32, %arg1: i32) -> (i32, i32, i32) {
    %c0_i32 = arith.constant 0 : i32
    %c0_i32_0 = arith.constant 0 : i32
    return %arg0, %arg1, %c0_i32 : i32, i32, i32
  }
}

module attributes {stable_mosaic.version = 11 : i64} {
  func.func @_linear_kernel_direct(%arg0: i32, %arg1: i32, %arg2: i32, %arg3: memref<16x256xbf16, #tpu.memory_space<vmem>>, %arg4: memref<256x128xbf16, #tpu.memory_space<vmem>>, %arg5: memref<1x128xf32, #tpu.memory_space<vmem>>, %arg6: memref<16x128xbf16, #tpu.memory_space<vmem>>) attributes {dimension_semantics = [#tpu.dimension_semantics<parallel>, #tpu.dimension_semantics<parallel>, #tpu.dimension_semantics<arbitrary>], iteration_bounds = array<i64: 1, 1, 1>, scalar_prefetch = 0 : i64, scratch_operands = 0 : i64, tpu.core_type = #tpu.core_type<tc>, window_params = [{transform_indices = @transform_0, window_bounds = array<i64: 16, 256>}, {transform_indices = @transform_1, window_bounds = array<i64: 256, 128>}, {transform_indices = @transform_2, window_bounds = array<i64: 1, 128>}, {transform_indices = @transform_3, window_bounds = array<i64: 16, 128>}]} {
    %c0 = arith.constant 0 : index
    %c0_0 = arith.constant 0 : index
    %0 = vector.load %arg3[%c0, %c0_0] : memref<16x256xbf16, #tpu.memory_space<vmem>>, vector<16x256xbf16>
    %c0_1 = arith.constant 0 : index
    %c0_2 = arith.constant 0 : index
    %1 = vector.load %arg4[%c0_1, %c0_2] : memref<256x128xbf16, #tpu.memory_space<vmem>>, vector<256x128xbf16>
    %cst = arith.constant dense<0.000000e+00> : vector<16x128xf32>
    %2 = tpu.matmul %0, %1, %cst {dimension_numbers = #tpu.dot_dimension_numbers<[1], [0], [0], [1], [0, 0, 1, 1], [], []>} : vector<16x256xbf16>, vector<256x128xbf16>, vector<16x128xf32> -> vector<16x128xf32>
    %c0_3 = arith.constant 0 : index
    %c0_4 = arith.constant 0 : index
    %3 = vector.load %arg5[%c0_3, %c0_4] : memref<1x128xf32, #tpu.memory_space<vmem>>, vector<1x128xf32>
    %4 = vector.broadcast %3 : vector<1x128xf32> to vector<16x128xf32>
    %5 = arith.addf %2, %4 : vector<16x128xf32>
    %6 = arith.truncf %5 : vector<16x128xf32> to vector<16x128xbf16>
    %c0_5 = arith.constant 0 : index
    %c0_6 = arith.constant 0 : index
    %7 = vector.load %arg6[%c0_5, %c0_6] : memref<16x128xbf16, #tpu.memory_space<vmem>>, vector<16x128xbf16>
    tpu.vector_store %arg6[%c0_5, %c0_6], %6 {strides = array<i32>} : memref<16x128xbf16, #tpu.memory_space<vmem>>, vector<16x128xbf16>,
    return
  }
  func.func @transform_0(%arg0: i32, %arg1: i32, %arg2: i32) -> (i32, i32) {
    %c0_i32 = arith.constant 0 : i32
    return %arg1, %arg2 : i32, i32
  }
  func.func @transform_1(%arg0: i32, %arg1: i32, %arg2: i32) -> (i32, i32) {
    %c0_i32 = arith.constant 0 : i32
    return %arg2, %arg0 : i32, i32
  }
  func.func @transform_2(%arg0: i32, %arg1: i32, %arg2: i32) -> (i32, i32) {
    %c0_i32 = arith.constant 0 : i32
    %c0_i32_0 = arith.constant 0 : i32
    return %c0_i32, %arg0 : i32, i32
  }
  func.func @transform_3(%arg0: i32, %arg1: i32, %arg2: i32) -> (i32, i32) {
    %c0_i32 = arith.constant 0 : i32
    return %arg1, %arg0 : i32, i32
  }
}

module attributes {stable_mosaic.version = 11 : i64} {
  func.func @_linear_kernel_direct(%arg0: i32, %arg1: i32, %arg2: i32, %arg3: memref<16x48xbf16, #tpu.memory_space<vmem>>, %arg4: memref<48x256xbf16, #tpu.memory_space<vmem>>, %arg5: memref<1x256xf32, #tpu.memory_space<vmem>>, %arg6: memref<16x256xbf16, #tpu.memory_space<vmem>>) attributes {dimension_semantics = [#tpu.dimension_semantics<parallel>, #tpu.dimension_semantics<parallel>, #tpu.dimension_semantics<arbitrary>], iteration_bounds = array<i64: 1, 1, 1>, scalar_prefetch = 0 : i64, scratch_operands = 0 : i64, tpu.core_type = #tpu.core_type<tc>, window_params = [{transform_indices = @transform_0, window_bounds = array<i64: 16, 48>}, {transform_indices = @transform_1, window_bounds = array<i64: 48, 256>}, {transform_indices = @transform_2, window_bounds = array<i64: 1, 256>}, {transform_indices = @transform_3, window_bounds = array<i64: 16, 256>}]} {
    %c0 = arith.constant 0 : index
    %c0_0 = arith.constant 0 : index
    %0 = vector.load %arg3[%c0, %c0_0] : memref<16x48xbf16, #tpu.memory_space<vmem>>, vector<16x48xbf16>
    %c0_1 = arith.constant 0 : index
    %c0_2 = arith.constant 0 : index
    %1 = vector.load %arg4[%c0_1, %c0_2] : memref<48x256xbf16, #tpu.memory_space<vmem>>, vector<48x256xbf16>
    %cst = arith.constant dense<0.000000e+00> : vector<16x256xf32>
    %2 = tpu.matmul %0, %1, %cst {dimension_numbers = #tpu.dot_dimension_numbers<[1], [0], [0], [1], [0, 0, 1, 1], [], []>} : vector<16x48xbf16>, vector<48x256xbf16>, vector<16x256xf32> -> vector<16x256xf32>
    %c0_3 = arith.constant 0 : index
    %c0_4 = arith.constant 0 : index
    %3 = vector.load %arg5[%c0_3, %c0_4] : memref<1x256xf32, #tpu.memory_space<vmem>>, vector<1x256xf32>
    %4 = vector.broadcast %3 : vector<1x256xf32> to vector<16x256xf32>
    %5 = arith.addf %2, %4 : vector<16x256xf32>
    %cst_5 = arith.constant 0.000000e+00 : f32
    %6 = vector.broadcast %cst_5 : f32 to vector<16x256xf32>
    %7 = arith.maximumf %5, %6 : vector<16x256xf32>
    %8 = arith.truncf %7 : vector<16x256xf32> to vector<16x256xbf16>
    %c0_6 = arith.constant 0 : index
    %c0_7 = arith.constant 0 : index
    %9 = vector.load %arg6[%c0_6, %c0_7] : memref<16x256xbf16, #tpu.memory_space<vmem>>, vector<16x256xbf16>
    tpu.vector_store %arg6[%c0_6, %c0_7], %8 {strides = array<i32>} : memref<16x256xbf16, #tpu.memory_space<vmem>>, vector<16x256xbf16>,
    return
  }
  func.func @transform_0(%arg0: i32, %arg1: i32, %arg2: i32) -> (i32, i32) {
    %c0_i32 = arith.constant 0 : i32
    return %arg1, %arg2 : i32, i32
  }
  func.func @transform_1(%arg0: i32, %arg1: i32, %arg2: i32) -> (i32, i32) {
    %c0_i32 = arith.constant 0 : i32
    return %arg2, %arg0 : i32, i32
  }
  func.func @transform_2(%arg0: i32, %arg1: i32, %arg2: i32) -> (i32, i32) {
    %c0_i32 = arith.constant 0 : i32
    %c0_i32_0 = arith.constant 0 : i32
    return %c0_i32, %arg0 : i32, i32
  }
  func.func @transform_3(%arg0: i32, %arg1: i32, %arg2: i32) -> (i32, i32) {
    %c0_i32 = arith.constant 0 : i32
    return %arg1, %arg0 : i32, i32
  }
}

module attributes {stable_mosaic.version = 11 : i64} {
  func.func @_linear_kernel_direct(%arg0: i32, %arg1: i32, %arg2: i32, %arg3: memref<16x128xbf16, #tpu.memory_space<vmem>>, %arg4: memref<128x256xbf16, #tpu.memory_space<vmem>>, %arg5: memref<1x256xf32, #tpu.memory_space<vmem>>, %arg6: memref<16x256xbf16, #tpu.memory_space<vmem>>) attributes {dimension_semantics = [#tpu.dimension_semantics<parallel>, #tpu.dimension_semantics<parallel>, #tpu.dimension_semantics<arbitrary>], iteration_bounds = array<i64: 1, 1, 1>, scalar_prefetch = 0 : i64, scratch_operands = 0 : i64, tpu.core_type = #tpu.core_type<tc>, window_params = [{transform_indices = @transform_0, window_bounds = array<i64: 16, 128>}, {transform_indices = @transform_1, window_bounds = array<i64: 128, 256>}, {transform_indices = @transform_2, window_bounds = array<i64: 1, 256>}, {transform_indices = @transform_3, window_bounds = array<i64: 16, 256>}]} {
    %c0 = arith.constant 0 : index
    %c0_0 = arith.constant 0 : index
    %0 = vector.load %arg3[%c0, %c0_0] : memref<16x128xbf16, #tpu.memory_space<vmem>>, vector<16x128xbf16>
    %c0_1 = arith.constant 0 : index
    %c0_2 = arith.constant 0 : index
    %1 = vector.load %arg4[%c0_1, %c0_2] : memref<128x256xbf16, #tpu.memory_space<vmem>>, vector<128x256xbf16>
    %cst = arith.constant dense<0.000000e+00> : vector<16x256xf32>
    %2 = tpu.matmul %0, %1, %cst {dimension_numbers = #tpu.dot_dimension_numbers<[1], [0], [0], [1], [0, 0, 1, 1], [], []>} : vector<16x128xbf16>, vector<128x256xbf16>, vector<16x256xf32> -> vector<16x256xf32>
    %c0_3 = arith.constant 0 : index
    %c0_4 = arith.constant 0 : index
    %3 = vector.load %arg5[%c0_3, %c0_4] : memref<1x256xf32, #tpu.memory_space<vmem>>, vector<1x256xf32>
    %4 = vector.broadcast %3 : vector<1x256xf32> to vector<16x256xf32>
    %5 = arith.addf %2, %4 : vector<16x256xf32>
    %6 = arith.truncf %5 : vector<16x256xf32> to vector<16x256xbf16>
    %c0_5 = arith.constant 0 : index
    %c0_6 = arith.constant 0 : index
    %7 = vector.load %arg6[%c0_5, %c0_6] : memref<16x256xbf16, #tpu.memory_space<vmem>>, vector<16x256xbf16>
    tpu.vector_store %arg6[%c0_5, %c0_6], %6 {strides = array<i32>} : memref<16x256xbf16, #tpu.memory_space<vmem>>, vector<16x256xbf16>,
    return
  }
  func.func @transform_0(%arg0: i32, %arg1: i32, %arg2: i32) -> (i32, i32) {
    %c0_i32 = arith.constant 0 : i32
    return %arg1, %arg2 : i32, i32
  }
  func.func @transform_1(%arg0: i32, %arg1: i32, %arg2: i32) -> (i32, i32) {
    %c0_i32 = arith.constant 0 : i32
    return %arg2, %arg0 : i32, i32
  }
  func.func @transform_2(%arg0: i32, %arg1: i32, %arg2: i32) -> (i32, i32) {
    %c0_i32 = arith.constant 0 : i32
    %c0_i32_0 = arith.constant 0 : i32
    return %c0_i32, %arg0 : i32, i32
  }
  func.func @transform_3(%arg0: i32, %arg1: i32, %arg2: i32) -> (i32, i32) {
    %c0_i32 = arith.constant 0 : i32
    return %arg1, %arg0 : i32, i32
  }
}

module attributes {stable_mosaic.version = 11 : i64} {
  func.func @_cross_attn_kernel(%arg0: i32, %arg1: i32, %arg2: memref<1x8x128xbf16, #tpu.memory_space<vmem>>, %arg3: memref<1x8x128xbf16, #tpu.memory_space<vmem>>, %arg4: memref<1x8x128xbf16, #tpu.memory_space<vmem>>, %arg5: memref<1x1x8xf32, #tpu.memory_space<vmem>>, %arg6: memref<1x8x128xbf16, #tpu.memory_space<vmem>>) attributes {dimension_semantics = [#tpu.dimension_semantics<parallel>, #tpu.dimension_semantics<parallel>], iteration_bounds = array<i64: 2, 1>, scalar_prefetch = 0 : i64, scratch_operands = 0 : i64, tpu.core_type = #tpu.core_type<tc>, window_params = [{transform_indices = @transform_0, window_bounds = array<i64: 1, 8, 128>}, {transform_indices = @transform_1, window_bounds = array<i64: 1, 8, 128>}, {transform_indices = @transform_2, window_bounds = array<i64: 1, 8, 128>}, {transform_indices = @transform_3, window_bounds = array<i64: 1, 1, 8>}, {transform_indices = @transform_4, window_bounds = array<i64: 1, 8, 128>}]} {
    %c0 = arith.constant 0 : index
    %c0_0 = arith.constant 0 : index
    %c0_1 = arith.constant 0 : index
    %0 = vector.load %arg5[%c0, %c0_0, %c0_1] : memref<1x1x8xf32, #tpu.memory_space<vmem>>, vector<1x1x8xf32>
    %1 = vector.shape_cast %0 : vector<1x1x8xf32> to vector<1x8xf32>
    %c0_2 = arith.constant 0 : index
    %c0_3 = arith.constant 0 : index
    %c0_4 = arith.constant 0 : index
    %2 = vector.load %arg2[%c0_2, %c0_3, %c0_4] : memref<1x8x128xbf16, #tpu.memory_space<vmem>>, vector<1x8x32xbf16>
    %3 = vector.shape_cast %2 : vector<1x8x32xbf16> to vector<8x32xbf16>
    %cst = arith.constant 1.767580e-01 : bf16
    %4 = vector.broadcast %cst : bf16 to vector<8x32xbf16>
    %5 = arith.mulf %3, %4 : vector<8x32xbf16>
    %c0_5 = arith.constant 0 : index
    %c0_6 = arith.constant 0 : index
    %c0_7 = arith.constant 0 : index
    %6 = vector.load %arg3[%c0_5, %c0_6, %c0_7] : memref<1x8x128xbf16, #tpu.memory_space<vmem>>, vector<1x8x32xbf16>
    %7 = vector.shape_cast %6 : vector<1x8x32xbf16> to vector<8x32xbf16>
    %c0_8 = arith.constant 0 : index
    %c0_9 = arith.constant 0 : index
    %c0_10 = arith.constant 0 : index
    %8 = vector.load %arg4[%c0_8, %c0_9, %c0_10] : memref<1x8x128xbf16, #tpu.memory_space<vmem>>, vector<1x8x32xbf16>
    %9 = vector.shape_cast %8 : vector<1x8x32xbf16> to vector<8x32xbf16>
    %10 = tpu.transpose %7, [1, 0] : vector<8x32xbf16> -> vector<32x8xbf16>
    %cst_11 = arith.constant dense<0.000000e+00> : vector<8x8xf32>
    %11 = tpu.matmul %5, %10, %cst_11 {dimension_numbers = #tpu.dot_dimension_numbers<[1], [0], [0], [1], [0, 0, 1, 1], [], []>} : vector<8x32xbf16>, vector<32x8xbf16>, vector<8x8xf32> -> vector<8x8xf32>
    %12 = vector.broadcast %1 : vector<1x8xf32> to vector<8x8xf32>
    %13 = arith.addf %11, %12 : vector<8x8xf32>
    %cst_12 = arith.constant dense<0xFF800000> : vector<8xf32>
    %14 = vector.multi_reduction <maximumf>, %13, %cst_12 [1] : vector<8x8xf32> to vector<8xf32>
    %15 = vector.shape_cast %14 : vector<8xf32> to vector<8x1xf32>
    %16 = vector.broadcast %15 : vector<8x1xf32> to vector<8x8xf32>
    %17 = arith.subf %13, %16 : vector<8x8xf32>
    %18 = math.exp %17 : vector<8x8xf32>
    %cst_13 = arith.constant dense<0.000000e+00> : vector<8xf32>
    %19 = vector.multi_reduction <add>, %18, %cst_13 [1] : vector<8x8xf32> to vector<8xf32>
    %20 = vector.shape_cast %19 : vector<8xf32> to vector<8x1xf32>
    %21 = tpu.reciprocal %20 {approx = true} : vector<8x1xf32> -> vector<8x1xf32>
    %22 = vector.broadcast %21 : vector<8x1xf32> to vector<8x8xf32>
    %23 = arith.mulf %18, %22 : vector<8x8xf32>
    %24 = arith.truncf %23 : vector<8x8xf32> to vector<8x8xbf16>
    %cst_14 = arith.constant dense<0.000000e+00> : vector<8x32xf32>
    %25 = tpu.matmul %24, %9, %cst_14 {dimension_numbers = #tpu.dot_dimension_numbers<[1], [0], [0], [1], [0, 0, 1, 1], [], []>} : vector<8x8xbf16>, vector<8x32xbf16>, vector<8x32xf32> -> vector<8x32xf32>
    %26 = arith.truncf %25 : vector<8x32xf32> to vector<8x32xbf16>
    %c0_15 = arith.constant 0 : index
    %c0_16 = arith.constant 0 : index
    %c0_17 = arith.constant 0 : index
    %27 = vector.load %arg6[%c0_15, %c0_16, %c0_17] : memref<1x8x128xbf16, #tpu.memory_space<vmem>>, vector<1x8x32xbf16>
    %28 = vector.shape_cast %27 : vector<1x8x32xbf16> to vector<8x32xbf16>
    %29 = vector.shape_cast %26 : vector<8x32xbf16> to vector<1x8x32xbf16>
    tpu.vector_store %arg6[%c0_15, %c0_16, %c0_17], %29 {strides = array<i32>} : memref<1x8x128xbf16, #tpu.memory_space<vmem>>, vector<1x8x32xbf16>,
    %c0_18 = arith.constant 0 : index
    %c0_19 = arith.constant 0 : index
    %c32 = arith.constant 32 : index
    %30 = vector.load %arg2[%c0_18, %c0_19, %c32] : memref<1x8x128xbf16, #tpu.memory_space<vmem>>, vector<1x8x32xbf16>
    %31 = vector.shape_cast %30 : vector<1x8x32xbf16> to vector<8x32xbf16>
    %cst_20 = arith.constant 1.767580e-01 : bf16
    %32 = vector.broadcast %cst_20 : bf16 to vector<8x32xbf16>
    %33 = arith.mulf %31, %32 : vector<8x32xbf16>
    %c0_21 = arith.constant 0 : index
    %c0_22 = arith.constant 0 : index
    %c32_23 = arith.constant 32 : index
    %34 = vector.load %arg3[%c0_21, %c0_22, %c32_23] : memref<1x8x128xbf16, #tpu.memory_space<vmem>>, vector<1x8x32xbf16>
    %35 = vector.shape_cast %34 : vector<1x8x32xbf16> to vector<8x32xbf16>
    %c0_24 = arith.constant 0 : index
    %c0_25 = arith.constant 0 : index
    %c32_26 = arith.constant 32 : index
    %36 = vector.load %arg4[%c0_24, %c0_25, %c32_26] : memref<1x8x128xbf16, #tpu.memory_space<vmem>>, vector<1x8x32xbf16>
    %37 = vector.shape_cast %36 : vector<1x8x32xbf16> to vector<8x32xbf16>
    %38 = tpu.transpose %35, [1, 0] : vector<8x32xbf16> -> vector<32x8xbf16>
    %cst_27 = arith.constant dense<0.000000e+00> : vector<8x8xf32>
    %39 = tpu.matmul %33, %38, %cst_27 {dimension_numbers = #tpu.dot_dimension_numbers<[1], [0], [0], [1], [0, 0, 1, 1], [], []>} : vector<8x32xbf16>, vector<32x8xbf16>, vector<8x8xf32> -> vector<8x8xf32>
    %40 = vector.broadcast %1 : vector<1x8xf32> to vector<8x8xf32>
    %41 = arith.addf %39, %40 : vector<8x8xf32>
    %cst_28 = arith.constant dense<0xFF800000> : vector<8xf32>
    %42 = vector.multi_reduction <maximumf>, %41, %cst_28 [1] : vector<8x8xf32> to vector<8xf32>
    %43 = vector.shape_cast %42 : vector<8xf32> to vector<8x1xf32>
    %44 = vector.broadcast %43 : vector<8x1xf32> to vector<8x8xf32>
    %45 = arith.subf %41, %44 : vector<8x8xf32>
    %46 = math.exp %45 : vector<8x8xf32>
    %cst_29 = arith.constant dense<0.000000e+00> : vector<8xf32>
    %47 = vector.multi_reduction <add>, %46, %cst_29 [1] : vector<8x8xf32> to vector<8xf32>
    %48 = vector.shape_cast %47 : vector<8xf32> to vector<8x1xf32>
    %49 = tpu.reciprocal %48 {approx = true} : vector<8x1xf32> -> vector<8x1xf32>
    %50 = vector.broadcast %49 : vector<8x1xf32> to vector<8x8xf32>
    %51 = arith.mulf %46, %50 : vector<8x8xf32>
    %52 = arith.truncf %51 : vector<8x8xf32> to vector<8x8xbf16>
    %cst_30 = arith.constant dense<0.000000e+00> : vector<8x32xf32>
    %53 = tpu.matmul %52, %37, %cst_30 {dimension_numbers = #tpu.dot_dimension_numbers<[1], [0], [0], [1], [0, 0, 1, 1], [], []>} : vector<8x8xbf16>, vector<8x32xbf16>, vector<8x32xf32> -> vector<8x32xf32>
    %54 = arith.truncf %53 : vector<8x32xf32> to vector<8x32xbf16>
    %c0_31 = arith.constant 0 : index
    %c0_32 = arith.constant 0 : index
    %c32_33 = arith.constant 32 : index
    %55 = vector.load %arg6[%c0_31, %c0_32, %c32_33] : memref<1x8x128xbf16, #tpu.memory_space<vmem>>, vector<1x8x32xbf16>
    %56 = vector.shape_cast %55 : vector<1x8x32xbf16> to vector<8x32xbf16>
    %57 = vector.shape_cast %54 : vector<8x32xbf16> to vector<1x8x32xbf16>
    tpu.vector_store %arg6[%c0_31, %c0_32, %c32_33], %57 {strides = array<i32>} : memref<1x8x128xbf16, #tpu.memory_space<vmem>>, vector<1x8x32xbf16>,
    %c0_34 = arith.constant 0 : index
    %c0_35 = arith.constant 0 : index
    %c64 = arith.constant 64 : index
    %58 = vector.load %arg2[%c0_34, %c0_35, %c64] : memref<1x8x128xbf16, #tpu.memory_space<vmem>>, vector<1x8x32xbf16>
    %59 = vector.shape_cast %58 : vector<1x8x32xbf16> to vector<8x32xbf16>
    %cst_36 = arith.constant 1.767580e-01 : bf16
    %60 = vector.broadcast %cst_36 : bf16 to vector<8x32xbf16>
    %61 = arith.mulf %59, %60 : vector<8x32xbf16>
    %c0_37 = arith.constant 0 : index
    %c0_38 = arith.constant 0 : index
    %c64_39 = arith.constant 64 : index
    %62 = vector.load %arg3[%c0_37, %c0_38, %c64_39] : memref<1x8x128xbf16, #tpu.memory_space<vmem>>, vector<1x8x32xbf16>
    %63 = vector.shape_cast %62 : vector<1x8x32xbf16> to vector<8x32xbf16>
    %c0_40 = arith.constant 0 : index
    %c0_41 = arith.constant 0 : index
    %c64_42 = arith.constant 64 : index
    %64 = vector.load %arg4[%c0_40, %c0_41, %c64_42] : memref<1x8x128xbf16, #tpu.memory_space<vmem>>, vector<1x8x32xbf16>
    %65 = vector.shape_cast %64 : vector<1x8x32xbf16> to vector<8x32xbf16>
    %66 = tpu.transpose %63, [1, 0] : vector<8x32xbf16> -> vector<32x8xbf16>
    %cst_43 = arith.constant dense<0.000000e+00> : vector<8x8xf32>
    %67 = tpu.matmul %61, %66, %cst_43 {dimension_numbers = #tpu.dot_dimension_numbers<[1], [0], [0], [1], [0, 0, 1, 1], [], []>} : vector<8x32xbf16>, vector<32x8xbf16>, vector<8x8xf32> -> vector<8x8xf32>
    %68 = vector.broadcast %1 : vector<1x8xf32> to vector<8x8xf32>
    %69 = arith.addf %67, %68 : vector<8x8xf32>
    %cst_44 = arith.constant dense<0xFF800000> : vector<8xf32>
    %70 = vector.multi_reduction <maximumf>, %69, %cst_44 [1] : vector<8x8xf32> to vector<8xf32>
    %71 = vector.shape_cast %70 : vector<8xf32> to vector<8x1xf32>
    %72 = vector.broadcast %71 : vector<8x1xf32> to vector<8x8xf32>
    %73 = arith.subf %69, %72 : vector<8x8xf32>
    %74 = math.exp %73 : vector<8x8xf32>
    %cst_45 = arith.constant dense<0.000000e+00> : vector<8xf32>
    %75 = vector.multi_reduction <add>, %74, %cst_45 [1] : vector<8x8xf32> to vector<8xf32>
    %76 = vector.shape_cast %75 : vector<8xf32> to vector<8x1xf32>
    %77 = tpu.reciprocal %76 {approx = true} : vector<8x1xf32> -> vector<8x1xf32>
    %78 = vector.broadcast %77 : vector<8x1xf32> to vector<8x8xf32>
    %79 = arith.mulf %74, %78 : vector<8x8xf32>
    %80 = arith.truncf %79 : vector<8x8xf32> to vector<8x8xbf16>
    %cst_46 = arith.constant dense<0.000000e+00> : vector<8x32xf32>
    %81 = tpu.matmul %80, %65, %cst_46 {dimension_numbers = #tpu.dot_dimension_numbers<[1], [0], [0], [1], [0, 0, 1, 1], [], []>} : vector<8x8xbf16>, vector<8x32xbf16>, vector<8x32xf32> -> vector<8x32xf32>
    %82 = arith.truncf %81 : vector<8x32xf32> to vector<8x32xbf16>
    %c0_47 = arith.constant 0 : index
    %c0_48 = arith.constant 0 : index
    %c64_49 = arith.constant 64 : index
    %83 = vector.load %arg6[%c0_47, %c0_48, %c64_49] : memref<1x8x128xbf16, #tpu.memory_space<vmem>>, vector<1x8x32xbf16>
    %84 = vector.shape_cast %83 : vector<1x8x32xbf16> to vector<8x32xbf16>
    %85 = vector.shape_cast %82 : vector<8x32xbf16> to vector<1x8x32xbf16>
    tpu.vector_store %arg6[%c0_47, %c0_48, %c64_49], %85 {strides = array<i32>} : memref<1x8x128xbf16, #tpu.memory_space<vmem>>, vector<1x8x32xbf16>,
    %c0_50 = arith.constant 0 : index
    %c0_51 = arith.constant 0 : index
    %c96 = arith.constant 96 : index
    %86 = vector.load %arg2[%c0_50, %c0_51, %c96] : memref<1x8x128xbf16, #tpu.memory_space<vmem>>, vector<1x8x32xbf16>
    %87 = vector.shape_cast %86 : vector<1x8x32xbf16> to vector<8x32xbf16>
    %cst_52 = arith.constant 1.767580e-01 : bf16
    %88 = vector.broadcast %cst_52 : bf16 to vector<8x32xbf16>
    %89 = arith.mulf %87, %88 : vector<8x32xbf16>
    %c0_53 = arith.constant 0 : index
    %c0_54 = arith.constant 0 : index
    %c96_55 = arith.constant 96 : index
    %90 = vector.load %arg3[%c0_53, %c0_54, %c96_55] : memref<1x8x128xbf16, #tpu.memory_space<vmem>>, vector<1x8x32xbf16>
    %91 = vector.shape_cast %90 : vector<1x8x32xbf16> to vector<8x32xbf16>
    %c0_56 = arith.constant 0 : index
    %c0_57 = arith.constant 0 : index
    %c96_58 = arith.constant 96 : index
    %92 = vector.load %arg4[%c0_56, %c0_57, %c96_58] : memref<1x8x128xbf16, #tpu.memory_space<vmem>>, vector<1x8x32xbf16>
    %93 = vector.shape_cast %92 : vector<1x8x32xbf16> to vector<8x32xbf16>
    %94 = tpu.transpose %91, [1, 0] : vector<8x32xbf16> -> vector<32x8xbf16>
    %cst_59 = arith.constant dense<0.000000e+00> : vector<8x8xf32>
    %95 = tpu.matmul %89, %94, %cst_59 {dimension_numbers = #tpu.dot_dimension_numbers<[1], [0], [0], [1], [0, 0, 1, 1], [], []>} : vector<8x32xbf16>, vector<32x8xbf16>, vector<8x8xf32> -> vector<8x8xf32>
    %96 = vector.broadcast %1 : vector<1x8xf32> to vector<8x8xf32>
    %97 = arith.addf %95, %96 : vector<8x8xf32>
    %cst_60 = arith.constant dense<0xFF800000> : vector<8xf32>
    %98 = vector.multi_reduction <maximumf>, %97, %cst_60 [1] : vector<8x8xf32> to vector<8xf32>
    %99 = vector.shape_cast %98 : vector<8xf32> to vector<8x1xf32>
    %100 = vector.broadcast %99 : vector<8x1xf32> to vector<8x8xf32>
    %101 = arith.subf %97, %100 : vector<8x8xf32>
    %102 = math.exp %101 : vector<8x8xf32>
    %cst_61 = arith.constant dense<0.000000e+00> : vector<8xf32>
    %103 = vector.multi_reduction <add>, %102, %cst_61 [1] : vector<8x8xf32> to vector<8xf32>
    %104 = vector.shape_cast %103 : vector<8xf32> to vector<8x1xf32>
    %105 = tpu.reciprocal %104 {approx = true} : vector<8x1xf32> -> vector<8x1xf32>
    %106 = vector.broadcast %105 : vector<8x1xf32> to vector<8x8xf32>
    %107 = arith.mulf %102, %106 : vector<8x8xf32>
    %108 = arith.truncf %107 : vector<8x8xf32> to vector<8x8xbf16>
    %cst_62 = arith.constant dense<0.000000e+00> : vector<8x32xf32>
    %109 = tpu.matmul %108, %93, %cst_62 {dimension_numbers = #tpu.dot_dimension_numbers<[1], [0], [0], [1], [0, 0, 1, 1], [], []>} : vector<8x8xbf16>, vector<8x32xbf16>, vector<8x32xf32> -> vector<8x32xf32>
    %110 = arith.truncf %109 : vector<8x32xf32> to vector<8x32xbf16>
    %c0_63 = arith.constant 0 : index
    %c0_64 = arith.constant 0 : index
    %c96_65 = arith.constant 96 : index
    %111 = vector.load %arg6[%c0_63, %c0_64, %c96_65] : memref<1x8x128xbf16, #tpu.memory_space<vmem>>, vector<1x8x32xbf16>
    %112 = vector.shape_cast %111 : vector<1x8x32xbf16> to vector<8x32xbf16>
    %113 = vector.shape_cast %110 : vector<8x32xbf16> to vector<1x8x32xbf16>
    tpu.vector_store %arg6[%c0_63, %c0_64, %c96_65], %113 {strides = array<i32>} : memref<1x8x128xbf16, #tpu.memory_space<vmem>>, vector<1x8x32xbf16>,
    return
  }
  func.func @transform_0(%arg0: i32, %arg1: i32) -> (i32, i32, i32) {
    %c0_i32 = arith.constant 0 : i32
    %c0_i32_0 = arith.constant 0 : i32
    return %arg0, %arg1, %c0_i32 : i32, i32, i32
  }
  func.func @transform_1(%arg0: i32, %arg1: i32) -> (i32, i32, i32) {
    %c0_i32 = arith.constant 0 : i32
    %c0_i32_0 = arith.constant 0 : i32
    %c0_i32_1 = arith.constant 0 : i32
    return %arg0, %c0_i32, %c0_i32_0 : i32, i32, i32
  }
  func.func @transform_2(%arg0: i32, %arg1: i32) -> (i32, i32, i32) {
    %c0_i32 = arith.constant 0 : i32
    %c1_i32 = arith.constant 1 : i32
    %c0_i32_0 = arith.constant 0 : i32
    return %arg0, %c0_i32, %c1_i32 : i32, i32, i32
  }
  func.func @transform_3(%arg0: i32, %arg1: i32) -> (i32, i32, i32) {
    %c0_i32 = arith.constant 0 : i32
    %c0_i32_0 = arith.constant 0 : i32
    %c0_i32_1 = arith.constant 0 : i32
    return %arg0, %c0_i32, %c0_i32_0 : i32, i32, i32
  }
  func.func @transform_4(%arg0: i32, %arg1: i32) -> (i32, i32, i32) {
    %c0_i32 = arith.constant 0 : i32
    %c0_i32_0 = arith.constant 0 : i32
    return %arg0, %arg1, %c0_i32 : i32, i32, i32
  }
}

module attributes {stable_mosaic.version = 11 : i64} {
  func.func @_linear_add_ln_kernel(%arg0: i32, %arg1: i32, %arg2: memref<16x128xbf16, #tpu.memory_space<vmem>>, %arg3: memref<128x128xbf16, #tpu.memory_space<vmem>>, %arg4: memref<1x128xf32, #tpu.memory_space<vmem>>, %arg5: memref<16x128xbf16, #tpu.memory_space<vmem>>, %arg6: memref<1x128xf32, #tpu.memory_space<vmem>>, %arg7: memref<1x128xf32, #tpu.memory_space<vmem>>, %arg8: memref<16x128xbf16, #tpu.memory_space<vmem>>, %arg9: memref<16x128xf32, #tpu.memory_space<vmem>>) attributes {dimension_semantics = [#tpu.dimension_semantics<parallel>, #tpu.dimension_semantics<arbitrary>], iteration_bounds = array<i64: 1, 1>, scalar_prefetch = 0 : i64, scratch_operands = 1 : i64, tpu.core_type = #tpu.core_type<tc>, window_params = [{transform_indices = @transform_0, window_bounds = array<i64: 16, 128>}, {transform_indices = @transform_1, window_bounds = array<i64: 128, 128>}, {pipeline_mode = #tpu.pipeline_mode<synchronous>, transform_indices = @transform_2, window_bounds = array<i64: 1, 128>}, {transform_indices = @transform_3, window_bounds = array<i64: 16, 128>}, {pipeline_mode = #tpu.pipeline_mode<synchronous>, transform_indices = @transform_4, window_bounds = array<i64: 1, 128>}, {pipeline_mode = #tpu.pipeline_mode<synchronous>, transform_indices = @transform_5, window_bounds = array<i64: 1, 128>}, {transform_indices = @transform_6, window_bounds = array<i64: 16, 128>}]} {
    %c0_i32 = arith.constant 0 : i32
    %0 = arith.cmpi eq, %arg1, %c0_i32 : i32
    %1 = arith.extui %0 : i1 to i32
    %c0_i32_0 = arith.constant 0 : i32
    %2 = arith.cmpi ne, %1, %c0_i32_0 : i32
    scf.if %2 {
      %c0_10 = arith.constant 0 : index
      %c0_11 = arith.constant 0 : index
      %12 = vector.load %arg5[%c0_10, %c0_11] : memref<16x128xbf16, #tpu.memory_space<vmem>>, vector<16x128xbf16>
      %13 = arith.extf %12 : vector<16x128xbf16> to vector<16x128xf32>
      %c0_12 = arith.constant 0 : index
      %c0_13 = arith.constant 0 : index
      %14 = vector.load %arg4[%c0_12, %c0_13] : memref<1x128xf32, #tpu.memory_space<vmem>>, vector<1x128xf32>
      %15 = vector.broadcast %14 : vector<1x128xf32> to vector<16x128xf32>
      %16 = arith.addf %13, %15 : vector<16x128xf32>
      %c0_14 = arith.constant 0 : index
      %c0_15 = arith.constant 0 : index
      %17 = vector.load %arg9[%c0_14, %c0_15] : memref<16x128xf32, #tpu.memory_space<vmem>>, vector<16x128xf32>
      tpu.vector_store %arg9[%c0_14, %c0_15], %16 {strides = array<i32>} : memref<16x128xf32, #tpu.memory_space<vmem>>, vector<16x128xf32>,
    } else {
    }
    %c0 = arith.constant 0 : index
    %c0_1 = arith.constant 0 : index
    %3 = vector.load %arg9[%c0, %c0_1] : memref<16x128xf32, #tpu.memory_space<vmem>>, vector<16x128xf32>
    %c0_2 = arith.constant 0 : index
    %c0_3 = arith.constant 0 : index
    %4 = vector.load %arg2[%c0_2, %c0_3] : memref<16x128xbf16, #tpu.memory_space<vmem>>, vector<16x128xbf16>
    %c0_4 = arith.constant 0 : index
    %c0_5 = arith.constant 0 : index
    %5 = vector.load %arg3[%c0_4, %c0_5] : memref<128x128xbf16, #tpu.memory_space<vmem>>, vector<128x128xbf16>
    %cst = arith.constant dense<0.000000e+00> : vector<16x128xf32>
    %6 = tpu.matmul %4, %5, %cst {dimension_numbers = #tpu.dot_dimension_numbers<[1], [0], [0], [1], [0, 0, 1, 1], [], []>} : vector<16x128xbf16>, vector<128x128xbf16>, vector<16x128xf32> -> vector<16x128xf32>
    %7 = arith.addf %3, %6 : vector<16x128xf32>
    %c0_6 = arith.constant 0 : index
    %c0_7 = arith.constant 0 : index
    %8 = vector.load %arg9[%c0_6, %c0_7] : memref<16x128xf32, #tpu.memory_space<vmem>>, vector<16x128xf32>
    tpu.vector_store %arg9[%c0_6, %c0_7], %7 {strides = array<i32>} : memref<16x128xf32, #tpu.memory_space<vmem>>, vector<16x128xf32>,
    %c0_i32_8 = arith.constant 0 : i32
    %9 = arith.cmpi eq, %arg1, %c0_i32_8 : i32
    %10 = arith.extui %9 : i1 to i32
    %c0_i32_9 = arith.constant 0 : i32
    %11 = arith.cmpi ne, %10, %c0_i32_9 : i32
    scf.if %11 {
      %c0_10 = arith.constant 0 : index
      %c0_11 = arith.constant 0 : index
      %12 = vector.load %arg9[%c0_10, %c0_11] : memref<16x128xf32, #tpu.memory_space<vmem>>, vector<16x128xf32>
      %cst_12 = arith.constant dense<0.000000e+00> : vector<16xf32>
      %13 = vector.multi_reduction <add>, %12, %cst_12 [1] : vector<16x128xf32> to vector<16xf32>
      %14 = vector.shape_cast %13 : vector<16xf32> to vector<16x1xf32>
      %cst_13 = arith.constant 1.280000e+02 : f32
      %15 = vector.broadcast %cst_13 : f32 to vector<16x1xf32>
      %16 = arith.divf %14, %15 : vector<16x1xf32>
      %17 = vector.broadcast %16 : vector<16x1xf32> to vector<16x128xf32>
      %18 = arith.subf %12, %17 : vector<16x128xf32>
      %19 = arith.mulf %18, %18 : vector<16x128xf32>
      %cst_14 = arith.constant dense<0.000000e+00> : vector<16xf32>
      %20 = vector.multi_reduction <add>, %19, %cst_14 [1] : vector<16x128xf32> to vector<16xf32>
      %21 = vector.shape_cast %20 : vector<16xf32> to vector<16x1xf32>
      %cst_15 = arith.constant 1.280000e+02 : f32
      %22 = vector.broadcast %cst_15 : f32 to vector<16x1xf32>
      %23 = arith.divf %21, %22 : vector<16x1xf32>
      %cst_16 = arith.constant 9.99999974E-6 : f32
      %24 = vector.broadcast %cst_16 : f32 to vector<16x1xf32>
      %25 = arith.addf %23, %24 : vector<16x1xf32>
      %26 = math.rsqrt %25 : vector<16x1xf32>
      %27 = vector.broadcast %26 : vector<16x1xf32> to vector<16x128xf32>
      %28 = arith.mulf %18, %27 : vector<16x128xf32>
      %c0_17 = arith.constant 0 : index
      %c0_18 = arith.constant 0 : index
      %29 = vector.load %arg6[%c0_17, %c0_18] : memref<1x128xf32, #tpu.memory_space<vmem>>, vector<1x128xf32>
      %30 = vector.broadcast %29 : vector<1x128xf32> to vector<16x128xf32>
      %31 = arith.mulf %28, %30 : vector<16x128xf32>
      %c0_19 = arith.constant 0 : index
      %c0_20 = arith.constant 0 : index
      %32 = vector.load %arg7[%c0_19, %c0_20] : memref<1x128xf32, #tpu.memory_space<vmem>>, vector<1x128xf32>
      %33 = vector.broadcast %32 : vector<1x128xf32> to vector<16x128xf32>
      %34 = arith.addf %31, %33 : vector<16x128xf32>
      %35 = arith.truncf %34 : vector<16x128xf32> to vector<16x128xbf16>
      %c0_21 = arith.constant 0 : index
      %c0_22 = arith.constant 0 : index
      %36 = vector.load %arg8[%c0_21, %c0_22] : memref<16x128xbf16, #tpu.memory_space<vmem>>, vector<16x128xbf16>
      tpu.vector_store %arg8[%c0_21, %c0_22], %35 {strides = array<i32>} : memref<16x128xbf16, #tpu.memory_space<vmem>>, vector<16x128xbf16>,
    } else {
    }
    return
  }
  func.func @transform_0(%arg0: i32, %arg1: i32) -> (i32, i32) {
    %c0_i32 = arith.constant 0 : i32
    return %arg0, %arg1 : i32, i32
  }
  func.func @transform_1(%arg0: i32, %arg1: i32) -> (i32, i32) {
    %c0_i32 = arith.constant 0 : i32
    %c0_i32_0 = arith.constant 0 : i32
    return %arg1, %c0_i32 : i32, i32
  }
  func.func @transform_2(%arg0: i32, %arg1: i32) -> (i32, i32) {
    %c0_i32 = arith.constant 0 : i32
    %c0_i32_0 = arith.constant 0 : i32
    %c0_i32_1 = arith.constant 0 : i32
    return %c0_i32, %c0_i32_0 : i32, i32
  }
  func.func @transform_3(%arg0: i32, %arg1: i32) -> (i32, i32) {
    %c0_i32 = arith.constant 0 : i32
    %c0_i32_0 = arith.constant 0 : i32
    return %arg0, %c0_i32 : i32, i32
  }
  func.func @transform_4(%arg0: i32, %arg1: i32) -> (i32, i32) {
    %c0_i32 = arith.constant 0 : i32
    %c0_i32_0 = arith.constant 0 : i32
    %c0_i32_1 = arith.constant 0 : i32
    return %c0_i32, %c0_i32_0 : i32, i32
  }
  func.func @transform_5(%arg0: i32, %arg1: i32) -> (i32, i32) {
    %c0_i32 = arith.constant 0 : i32
    %c0_i32_0 = arith.constant 0 : i32
    %c0_i32_1 = arith.constant 0 : i32
    return %c0_i32, %c0_i32_0 : i32, i32
  }
  func.func @transform_6(%arg0: i32, %arg1: i32) -> (i32, i32) {
    %c0_i32 = arith.constant 0 : i32
    %c0_i32_0 = arith.constant 0 : i32
    return %arg0, %c0_i32 : i32, i32
  }
}

module attributes {stable_mosaic.version = 11 : i64} {
  func.func @_linear_kernel_direct(%arg0: i32, %arg1: i32, %arg2: i32, %arg3: memref<16x128xbf16, #tpu.memory_space<vmem>>, %arg4: memref<128x256xbf16, #tpu.memory_space<vmem>>, %arg5: memref<1x256xf32, #tpu.memory_space<vmem>>, %arg6: memref<16x256xbf16, #tpu.memory_space<vmem>>) attributes {dimension_semantics = [#tpu.dimension_semantics<parallel>, #tpu.dimension_semantics<parallel>, #tpu.dimension_semantics<arbitrary>], iteration_bounds = array<i64: 1, 1, 1>, scalar_prefetch = 0 : i64, scratch_operands = 0 : i64, tpu.core_type = #tpu.core_type<tc>, window_params = [{transform_indices = @transform_0, window_bounds = array<i64: 16, 128>}, {transform_indices = @transform_1, window_bounds = array<i64: 128, 256>}, {transform_indices = @transform_2, window_bounds = array<i64: 1, 256>}, {transform_indices = @transform_3, window_bounds = array<i64: 16, 256>}]} {
    %c0 = arith.constant 0 : index
    %c0_0 = arith.constant 0 : index
    %0 = vector.load %arg3[%c0, %c0_0] : memref<16x128xbf16, #tpu.memory_space<vmem>>, vector<16x128xbf16>
    %c0_1 = arith.constant 0 : index
    %c0_2 = arith.constant 0 : index
    %1 = vector.load %arg4[%c0_1, %c0_2] : memref<128x256xbf16, #tpu.memory_space<vmem>>, vector<128x256xbf16>
    %cst = arith.constant dense<0.000000e+00> : vector<16x256xf32>
    %2 = tpu.matmul %0, %1, %cst {dimension_numbers = #tpu.dot_dimension_numbers<[1], [0], [0], [1], [0, 0, 1, 1], [], []>} : vector<16x128xbf16>, vector<128x256xbf16>, vector<16x256xf32> -> vector<16x256xf32>
    %c0_3 = arith.constant 0 : index
    %c0_4 = arith.constant 0 : index
    %3 = vector.load %arg5[%c0_3, %c0_4] : memref<1x256xf32, #tpu.memory_space<vmem>>, vector<1x256xf32>
    %4 = vector.broadcast %3 : vector<1x256xf32> to vector<16x256xf32>
    %5 = arith.addf %2, %4 : vector<16x256xf32>
    %cst_5 = arith.constant 0.000000e+00 : f32
    %6 = vector.broadcast %cst_5 : f32 to vector<16x256xf32>
    %7 = arith.maximumf %5, %6 : vector<16x256xf32>
    %8 = arith.truncf %7 : vector<16x256xf32> to vector<16x256xbf16>
    %c0_6 = arith.constant 0 : index
    %c0_7 = arith.constant 0 : index
    %9 = vector.load %arg6[%c0_6, %c0_7] : memref<16x256xbf16, #tpu.memory_space<vmem>>, vector<16x256xbf16>
    tpu.vector_store %arg6[%c0_6, %c0_7], %8 {strides = array<i32>} : memref<16x256xbf16, #tpu.memory_space<vmem>>, vector<16x256xbf16>,
    return
  }
  func.func @transform_0(%arg0: i32, %arg1: i32, %arg2: i32) -> (i32, i32) {
    %c0_i32 = arith.constant 0 : i32
    return %arg1, %arg2 : i32, i32
  }
  func.func @transform_1(%arg0: i32, %arg1: i32, %arg2: i32) -> (i32, i32) {
    %c0_i32 = arith.constant 0 : i32
    return %arg2, %arg0 : i32, i32
  }
  func.func @transform_2(%arg0: i32, %arg1: i32, %arg2: i32) -> (i32, i32) {
    %c0_i32 = arith.constant 0 : i32
    %c0_i32_0 = arith.constant 0 : i32
    return %c0_i32, %arg0 : i32, i32
  }
  func.func @transform_3(%arg0: i32, %arg1: i32, %arg2: i32) -> (i32, i32) {
    %c0_i32 = arith.constant 0 : i32
    return %arg1, %arg0 : i32, i32
  }
}

module attributes {stable_mosaic.version = 11 : i64} {
  func.func @_linear_add_ln_kernel(%arg0: i32, %arg1: i32, %arg2: memref<16x256xbf16, #tpu.memory_space<vmem>>, %arg3: memref<256x128xbf16, #tpu.memory_space<vmem>>, %arg4: memref<1x128xf32, #tpu.memory_space<vmem>>, %arg5: memref<16x128xbf16, #tpu.memory_space<vmem>>, %arg6: memref<1x128xf32, #tpu.memory_space<vmem>>, %arg7: memref<1x128xf32, #tpu.memory_space<vmem>>, %arg8: memref<16x128xbf16, #tpu.memory_space<vmem>>, %arg9: memref<16x128xf32, #tpu.memory_space<vmem>>) attributes {dimension_semantics = [#tpu.dimension_semantics<parallel>, #tpu.dimension_semantics<arbitrary>], iteration_bounds = array<i64: 1, 1>, scalar_prefetch = 0 : i64, scratch_operands = 1 : i64, tpu.core_type = #tpu.core_type<tc>, window_params = [{transform_indices = @transform_0, window_bounds = array<i64: 16, 256>}, {transform_indices = @transform_1, window_bounds = array<i64: 256, 128>}, {pipeline_mode = #tpu.pipeline_mode<synchronous>, transform_indices = @transform_2, window_bounds = array<i64: 1, 128>}, {transform_indices = @transform_3, window_bounds = array<i64: 16, 128>}, {pipeline_mode = #tpu.pipeline_mode<synchronous>, transform_indices = @transform_4, window_bounds = array<i64: 1, 128>}, {pipeline_mode = #tpu.pipeline_mode<synchronous>, transform_indices = @transform_5, window_bounds = array<i64: 1, 128>}, {transform_indices = @transform_6, window_bounds = array<i64: 16, 128>}]} {
    %c0_i32 = arith.constant 0 : i32
    %0 = arith.cmpi eq, %arg1, %c0_i32 : i32
    %1 = arith.extui %0 : i1 to i32
    %c0_i32_0 = arith.constant 0 : i32
    %2 = arith.cmpi ne, %1, %c0_i32_0 : i32
    scf.if %2 {
      %c0_10 = arith.constant 0 : index
      %c0_11 = arith.constant 0 : index
      %12 = vector.load %arg5[%c0_10, %c0_11] : memref<16x128xbf16, #tpu.memory_space<vmem>>, vector<16x128xbf16>
      %13 = arith.extf %12 : vector<16x128xbf16> to vector<16x128xf32>
      %c0_12 = arith.constant 0 : index
      %c0_13 = arith.constant 0 : index
      %14 = vector.load %arg4[%c0_12, %c0_13] : memref<1x128xf32, #tpu.memory_space<vmem>>, vector<1x128xf32>
      %15 = vector.broadcast %14 : vector<1x128xf32> to vector<16x128xf32>
      %16 = arith.addf %13, %15 : vector<16x128xf32>
      %c0_14 = arith.constant 0 : index
      %c0_15 = arith.constant 0 : index
      %17 = vector.load %arg9[%c0_14, %c0_15] : memref<16x128xf32, #tpu.memory_space<vmem>>, vector<16x128xf32>
      tpu.vector_store %arg9[%c0_14, %c0_15], %16 {strides = array<i32>} : memref<16x128xf32, #tpu.memory_space<vmem>>, vector<16x128xf32>,
    } else {
    }
    %c0 = arith.constant 0 : index
    %c0_1 = arith.constant 0 : index
    %3 = vector.load %arg9[%c0, %c0_1] : memref<16x128xf32, #tpu.memory_space<vmem>>, vector<16x128xf32>
    %c0_2 = arith.constant 0 : index
    %c0_3 = arith.constant 0 : index
    %4 = vector.load %arg2[%c0_2, %c0_3] : memref<16x256xbf16, #tpu.memory_space<vmem>>, vector<16x256xbf16>
    %c0_4 = arith.constant 0 : index
    %c0_5 = arith.constant 0 : index
    %5 = vector.load %arg3[%c0_4, %c0_5] : memref<256x128xbf16, #tpu.memory_space<vmem>>, vector<256x128xbf16>
    %cst = arith.constant dense<0.000000e+00> : vector<16x128xf32>
    %6 = tpu.matmul %4, %5, %cst {dimension_numbers = #tpu.dot_dimension_numbers<[1], [0], [0], [1], [0, 0, 1, 1], [], []>} : vector<16x256xbf16>, vector<256x128xbf16>, vector<16x128xf32> -> vector<16x128xf32>
    %7 = arith.addf %3, %6 : vector<16x128xf32>
    %c0_6 = arith.constant 0 : index
    %c0_7 = arith.constant 0 : index
    %8 = vector.load %arg9[%c0_6, %c0_7] : memref<16x128xf32, #tpu.memory_space<vmem>>, vector<16x128xf32>
    tpu.vector_store %arg9[%c0_6, %c0_7], %7 {strides = array<i32>} : memref<16x128xf32, #tpu.memory_space<vmem>>, vector<16x128xf32>,
    %c0_i32_8 = arith.constant 0 : i32
    %9 = arith.cmpi eq, %arg1, %c0_i32_8 : i32
    %10 = arith.extui %9 : i1 to i32
    %c0_i32_9 = arith.constant 0 : i32
    %11 = arith.cmpi ne, %10, %c0_i32_9 : i32
    scf.if %11 {
      %c0_10 = arith.constant 0 : index
      %c0_11 = arith.constant 0 : index
      %12 = vector.load %arg9[%c0_10, %c0_11] : memref<16x128xf32, #tpu.memory_space<vmem>>, vector<16x128xf32>
      %cst_12 = arith.constant dense<0.000000e+00> : vector<16xf32>
      %13 = vector.multi_reduction <add>, %12, %cst_12 [1] : vector<16x128xf32> to vector<16xf32>
      %14 = vector.shape_cast %13 : vector<16xf32> to vector<16x1xf32>
      %cst_13 = arith.constant 1.280000e+02 : f32
      %15 = vector.broadcast %cst_13 : f32 to vector<16x1xf32>
      %16 = arith.divf %14, %15 : vector<16x1xf32>
      %17 = vector.broadcast %16 : vector<16x1xf32> to vector<16x128xf32>
      %18 = arith.subf %12, %17 : vector<16x128xf32>
      %19 = arith.mulf %18, %18 : vector<16x128xf32>
      %cst_14 = arith.constant dense<0.000000e+00> : vector<16xf32>
      %20 = vector.multi_reduction <add>, %19, %cst_14 [1] : vector<16x128xf32> to vector<16xf32>
      %21 = vector.shape_cast %20 : vector<16xf32> to vector<16x1xf32>
      %cst_15 = arith.constant 1.280000e+02 : f32
      %22 = vector.broadcast %cst_15 : f32 to vector<16x1xf32>
      %23 = arith.divf %21, %22 : vector<16x1xf32>
      %cst_16 = arith.constant 9.99999974E-6 : f32
      %24 = vector.broadcast %cst_16 : f32 to vector<16x1xf32>
      %25 = arith.addf %23, %24 : vector<16x1xf32>
      %26 = math.rsqrt %25 : vector<16x1xf32>
      %27 = vector.broadcast %26 : vector<16x1xf32> to vector<16x128xf32>
      %28 = arith.mulf %18, %27 : vector<16x128xf32>
      %c0_17 = arith.constant 0 : index
      %c0_18 = arith.constant 0 : index
      %29 = vector.load %arg6[%c0_17, %c0_18] : memref<1x128xf32, #tpu.memory_space<vmem>>, vector<1x128xf32>
      %30 = vector.broadcast %29 : vector<1x128xf32> to vector<16x128xf32>
      %31 = arith.mulf %28, %30 : vector<16x128xf32>
      %c0_19 = arith.constant 0 : index
      %c0_20 = arith.constant 0 : index
      %32 = vector.load %arg7[%c0_19, %c0_20] : memref<1x128xf32, #tpu.memory_space<vmem>>, vector<1x128xf32>
      %33 = vector.broadcast %32 : vector<1x128xf32> to vector<16x128xf32>
      %34 = arith.addf %31, %33 : vector<16x128xf32>
      %35 = arith.truncf %34 : vector<16x128xf32> to vector<16x128xbf16>
      %c0_21 = arith.constant 0 : index
      %c0_22 = arith.constant 0 : index
      %36 = vector.load %arg8[%c0_21, %c0_22] : memref<16x128xbf16, #tpu.memory_space<vmem>>, vector<16x128xbf16>
      tpu.vector_store %arg8[%c0_21, %c0_22], %35 {strides = array<i32>} : memref<16x128xbf16, #tpu.memory_space<vmem>>, vector<16x128xbf16>,
    } else {
    }
    return
  }
  func.func @transform_0(%arg0: i32, %arg1: i32) -> (i32, i32) {
    %c0_i32 = arith.constant 0 : i32
    return %arg0, %arg1 : i32, i32
  }
  func.func @transform_1(%arg0: i32, %arg1: i32) -> (i32, i32) {
    %c0_i32 = arith.constant 0 : i32
    %c0_i32_0 = arith.constant 0 : i32
    return %arg1, %c0_i32 : i32, i32
  }
  func.func @transform_2(%arg0: i32, %arg1: i32) -> (i32, i32) {
    %c0_i32 = arith.constant 0 : i32
    %c0_i32_0 = arith.constant 0 : i32
    %c0_i32_1 = arith.constant 0 : i32
    return %c0_i32, %c0_i32_0 : i32, i32
  }
  func.func @transform_3(%arg0: i32, %arg1: i32) -> (i32, i32) {
    %c0_i32 = arith.constant 0 : i32
    %c0_i32_0 = arith.constant 0 : i32
    return %arg0, %c0_i32 : i32, i32
  }
  func.func @transform_4(%arg0: i32, %arg1: i32) -> (i32, i32) {
    %c0_i32 = arith.constant 0 : i32
    %c0_i32_0 = arith.constant 0 : i32
    %c0_i32_1 = arith.constant 0 : i32
    return %c0_i32, %c0_i32_0 : i32, i32
  }
  func.func @transform_5(%arg0: i32, %arg1: i32) -> (i32, i32) {
    %c0_i32 = arith.constant 0 : i32
    %c0_i32_0 = arith.constant 0 : i32
    %c0_i32_1 = arith.constant 0 : i32
    return %c0_i32, %c0_i32_0 : i32, i32
  }
  func.func @transform_6(%arg0: i32, %arg1: i32) -> (i32, i32) {
    %c0_i32 = arith.constant 0 : i32
    %c0_i32_0 = arith.constant 0 : i32
    return %arg0, %c0_i32 : i32, i32
  }
}

module attributes {stable_mosaic.version = 11 : i64} {
  func.func @_cross_attn_kernel(%arg0: i32, %arg1: i32, %arg2: memref<1x8x128xbf16, #tpu.memory_space<vmem>>, %arg3: memref<1x8x128xbf16, #tpu.memory_space<vmem>>, %arg4: memref<1x8x128xbf16, #tpu.memory_space<vmem>>, %arg5: memref<1x1x8xf32, #tpu.memory_space<vmem>>, %arg6: memref<1x8x128xbf16, #tpu.memory_space<vmem>>, %arg7: memref<1x8x8xf32, #tpu.memory_space<vmem>>) attributes {dimension_semantics = [#tpu.dimension_semantics<parallel>, #tpu.dimension_semantics<parallel>], iteration_bounds = array<i64: 2, 1>, scalar_prefetch = 0 : i64, scratch_operands = 0 : i64, tpu.core_type = #tpu.core_type<tc>, window_params = [{transform_indices = @transform_0, window_bounds = array<i64: 1, 8, 128>}, {transform_indices = @transform_1, window_bounds = array<i64: 1, 8, 128>}, {transform_indices = @transform_2, window_bounds = array<i64: 1, 8, 128>}, {transform_indices = @transform_3, window_bounds = array<i64: 1, 1, 8>}, {transform_indices = @transform_4, window_bounds = array<i64: 1, 8, 128>}, {transform_indices = @transform_5, window_bounds = array<i64: 1, 8, 8>}]} {
    %c0 = arith.constant 0 : index
    %c0_0 = arith.constant 0 : index
    %c0_1 = arith.constant 0 : index
    %0 = vector.load %arg5[%c0, %c0_0, %c0_1] : memref<1x1x8xf32, #tpu.memory_space<vmem>>, vector<1x1x8xf32>
    %1 = vector.shape_cast %0 : vector<1x1x8xf32> to vector<1x8xf32>
    %cst = arith.constant 0.000000e+00 : f32
    %2 = vector.broadcast %cst : f32 to vector<8x8xf32>
    %c0_2 = arith.constant 0 : index
    %c0_3 = arith.constant 0 : index
    %c0_4 = arith.constant 0 : index
    %3 = vector.load %arg2[%c0_2, %c0_3, %c0_4] : memref<1x8x128xbf16, #tpu.memory_space<vmem>>, vector<1x8x32xbf16>
    %4 = vector.shape_cast %3 : vector<1x8x32xbf16> to vector<8x32xbf16>
    %cst_5 = arith.constant 1.767580e-01 : bf16
    %5 = vector.broadcast %cst_5 : bf16 to vector<8x32xbf16>
    %6 = arith.mulf %4, %5 : vector<8x32xbf16>
    %c0_6 = arith.constant 0 : index
    %c0_7 = arith.constant 0 : index
    %c0_8 = arith.constant 0 : index
    %7 = vector.load %arg3[%c0_6, %c0_7, %c0_8] : memref<1x8x128xbf16, #tpu.memory_space<vmem>>, vector<1x8x32xbf16>
    %8 = vector.shape_cast %7 : vector<1x8x32xbf16> to vector<8x32xbf16>
    %c0_9 = arith.constant 0 : index
    %c0_10 = arith.constant 0 : index
    %c0_11 = arith.constant 0 : index
    %9 = vector.load %arg4[%c0_9, %c0_10, %c0_11] : memref<1x8x128xbf16, #tpu.memory_space<vmem>>, vector<1x8x32xbf16>
    %10 = vector.shape_cast %9 : vector<1x8x32xbf16> to vector<8x32xbf16>
    %11 = tpu.transpose %8, [1, 0] : vector<8x32xbf16> -> vector<32x8xbf16>
    %cst_12 = arith.constant dense<0.000000e+00> : vector<8x8xf32>
    %12 = tpu.matmul %6, %11, %cst_12 {dimension_numbers = #tpu.dot_dimension_numbers<[1], [0], [0], [1], [0, 0, 1, 1], [], []>} : vector<8x32xbf16>, vector<32x8xbf16>, vector<8x8xf32> -> vector<8x8xf32>
    %13 = vector.broadcast %1 : vector<1x8xf32> to vector<8x8xf32>
    %14 = arith.addf %12, %13 : vector<8x8xf32>
    %cst_13 = arith.constant dense<0xFF800000> : vector<8xf32>
    %15 = vector.multi_reduction <maximumf>, %14, %cst_13 [1] : vector<8x8xf32> to vector<8xf32>
    %16 = vector.shape_cast %15 : vector<8xf32> to vector<8x1xf32>
    %17 = vector.broadcast %16 : vector<8x1xf32> to vector<8x8xf32>
    %18 = arith.subf %14, %17 : vector<8x8xf32>
    %19 = math.exp %18 : vector<8x8xf32>
    %cst_14 = arith.constant dense<0.000000e+00> : vector<8xf32>
    %20 = vector.multi_reduction <add>, %19, %cst_14 [1] : vector<8x8xf32> to vector<8xf32>
    %21 = vector.shape_cast %20 : vector<8xf32> to vector<8x1xf32>
    %22 = tpu.reciprocal %21 {approx = true} : vector<8x1xf32> -> vector<8x1xf32>
    %23 = vector.broadcast %22 : vector<8x1xf32> to vector<8x8xf32>
    %24 = arith.mulf %19, %23 : vector<8x8xf32>
    %25 = arith.addf %2, %24 : vector<8x8xf32>
    %26 = arith.truncf %24 : vector<8x8xf32> to vector<8x8xbf16>
    %cst_15 = arith.constant dense<0.000000e+00> : vector<8x32xf32>
    %27 = tpu.matmul %26, %10, %cst_15 {dimension_numbers = #tpu.dot_dimension_numbers<[1], [0], [0], [1], [0, 0, 1, 1], [], []>} : vector<8x8xbf16>, vector<8x32xbf16>, vector<8x32xf32> -> vector<8x32xf32>
    %28 = arith.truncf %27 : vector<8x32xf32> to vector<8x32xbf16>
    %c0_16 = arith.constant 0 : index
    %c0_17 = arith.constant 0 : index
    %c0_18 = arith.constant 0 : index
    %29 = vector.load %arg6[%c0_16, %c0_17, %c0_18] : memref<1x8x128xbf16, #tpu.memory_space<vmem>>, vector<1x8x32xbf16>
    %30 = vector.shape_cast %29 : vector<1x8x32xbf16> to vector<8x32xbf16>
    %31 = vector.shape_cast %28 : vector<8x32xbf16> to vector<1x8x32xbf16>
    tpu.vector_store %arg6[%c0_16, %c0_17, %c0_18], %31 {strides = array<i32>} : memref<1x8x128xbf16, #tpu.memory_space<vmem>>, vector<1x8x32xbf16>,
    %c0_19 = arith.constant 0 : index
    %c0_20 = arith.constant 0 : index
    %c32 = arith.constant 32 : index
    %32 = vector.load %arg2[%c0_19, %c0_20, %c32] : memref<1x8x128xbf16, #tpu.memory_space<vmem>>, vector<1x8x32xbf16>
    %33 = vector.shape_cast %32 : vector<1x8x32xbf16> to vector<8x32xbf16>
    %cst_21 = arith.constant 1.767580e-01 : bf16
    %34 = vector.broadcast %cst_21 : bf16 to vector<8x32xbf16>
    %35 = arith.mulf %33, %34 : vector<8x32xbf16>
    %c0_22 = arith.constant 0 : index
    %c0_23 = arith.constant 0 : index
    %c32_24 = arith.constant 32 : index
    %36 = vector.load %arg3[%c0_22, %c0_23, %c32_24] : memref<1x8x128xbf16, #tpu.memory_space<vmem>>, vector<1x8x32xbf16>
    %37 = vector.shape_cast %36 : vector<1x8x32xbf16> to vector<8x32xbf16>
    %c0_25 = arith.constant 0 : index
    %c0_26 = arith.constant 0 : index
    %c32_27 = arith.constant 32 : index
    %38 = vector.load %arg4[%c0_25, %c0_26, %c32_27] : memref<1x8x128xbf16, #tpu.memory_space<vmem>>, vector<1x8x32xbf16>
    %39 = vector.shape_cast %38 : vector<1x8x32xbf16> to vector<8x32xbf16>
    %40 = tpu.transpose %37, [1, 0] : vector<8x32xbf16> -> vector<32x8xbf16>
    %cst_28 = arith.constant dense<0.000000e+00> : vector<8x8xf32>
    %41 = tpu.matmul %35, %40, %cst_28 {dimension_numbers = #tpu.dot_dimension_numbers<[1], [0], [0], [1], [0, 0, 1, 1], [], []>} : vector<8x32xbf16>, vector<32x8xbf16>, vector<8x8xf32> -> vector<8x8xf32>
    %42 = vector.broadcast %1 : vector<1x8xf32> to vector<8x8xf32>
    %43 = arith.addf %41, %42 : vector<8x8xf32>
    %cst_29 = arith.constant dense<0xFF800000> : vector<8xf32>
    %44 = vector.multi_reduction <maximumf>, %43, %cst_29 [1] : vector<8x8xf32> to vector<8xf32>
    %45 = vector.shape_cast %44 : vector<8xf32> to vector<8x1xf32>
    %46 = vector.broadcast %45 : vector<8x1xf32> to vector<8x8xf32>
    %47 = arith.subf %43, %46 : vector<8x8xf32>
    %48 = math.exp %47 : vector<8x8xf32>
    %cst_30 = arith.constant dense<0.000000e+00> : vector<8xf32>
    %49 = vector.multi_reduction <add>, %48, %cst_30 [1] : vector<8x8xf32> to vector<8xf32>
    %50 = vector.shape_cast %49 : vector<8xf32> to vector<8x1xf32>
    %51 = tpu.reciprocal %50 {approx = true} : vector<8x1xf32> -> vector<8x1xf32>
    %52 = vector.broadcast %51 : vector<8x1xf32> to vector<8x8xf32>
    %53 = arith.mulf %48, %52 : vector<8x8xf32>
    %54 = arith.addf %25, %53 : vector<8x8xf32>
    %55 = arith.truncf %53 : vector<8x8xf32> to vector<8x8xbf16>
    %cst_31 = arith.constant dense<0.000000e+00> : vector<8x32xf32>
    %56 = tpu.matmul %55, %39, %cst_31 {dimension_numbers = #tpu.dot_dimension_numbers<[1], [0], [0], [1], [0, 0, 1, 1], [], []>} : vector<8x8xbf16>, vector<8x32xbf16>, vector<8x32xf32> -> vector<8x32xf32>
    %57 = arith.truncf %56 : vector<8x32xf32> to vector<8x32xbf16>
    %c0_32 = arith.constant 0 : index
    %c0_33 = arith.constant 0 : index
    %c32_34 = arith.constant 32 : index
    %58 = vector.load %arg6[%c0_32, %c0_33, %c32_34] : memref<1x8x128xbf16, #tpu.memory_space<vmem>>, vector<1x8x32xbf16>
    %59 = vector.shape_cast %58 : vector<1x8x32xbf16> to vector<8x32xbf16>
    %60 = vector.shape_cast %57 : vector<8x32xbf16> to vector<1x8x32xbf16>
    tpu.vector_store %arg6[%c0_32, %c0_33, %c32_34], %60 {strides = array<i32>} : memref<1x8x128xbf16, #tpu.memory_space<vmem>>, vector<1x8x32xbf16>,
    %c0_35 = arith.constant 0 : index
    %c0_36 = arith.constant 0 : index
    %c64 = arith.constant 64 : index
    %61 = vector.load %arg2[%c0_35, %c0_36, %c64] : memref<1x8x128xbf16, #tpu.memory_space<vmem>>, vector<1x8x32xbf16>
    %62 = vector.shape_cast %61 : vector<1x8x32xbf16> to vector<8x32xbf16>
    %cst_37 = arith.constant 1.767580e-01 : bf16
    %63 = vector.broadcast %cst_37 : bf16 to vector<8x32xbf16>
    %64 = arith.mulf %62, %63 : vector<8x32xbf16>
    %c0_38 = arith.constant 0 : index
    %c0_39 = arith.constant 0 : index
    %c64_40 = arith.constant 64 : index
    %65 = vector.load %arg3[%c0_38, %c0_39, %c64_40] : memref<1x8x128xbf16, #tpu.memory_space<vmem>>, vector<1x8x32xbf16>
    %66 = vector.shape_cast %65 : vector<1x8x32xbf16> to vector<8x32xbf16>
    %c0_41 = arith.constant 0 : index
    %c0_42 = arith.constant 0 : index
    %c64_43 = arith.constant 64 : index
    %67 = vector.load %arg4[%c0_41, %c0_42, %c64_43] : memref<1x8x128xbf16, #tpu.memory_space<vmem>>, vector<1x8x32xbf16>
    %68 = vector.shape_cast %67 : vector<1x8x32xbf16> to vector<8x32xbf16>
    %69 = tpu.transpose %66, [1, 0] : vector<8x32xbf16> -> vector<32x8xbf16>
    %cst_44 = arith.constant dense<0.000000e+00> : vector<8x8xf32>
    %70 = tpu.matmul %64, %69, %cst_44 {dimension_numbers = #tpu.dot_dimension_numbers<[1], [0], [0], [1], [0, 0, 1, 1], [], []>} : vector<8x32xbf16>, vector<32x8xbf16>, vector<8x8xf32> -> vector<8x8xf32>
    %71 = vector.broadcast %1 : vector<1x8xf32> to vector<8x8xf32>
    %72 = arith.addf %70, %71 : vector<8x8xf32>
    %cst_45 = arith.constant dense<0xFF800000> : vector<8xf32>
    %73 = vector.multi_reduction <maximumf>, %72, %cst_45 [1] : vector<8x8xf32> to vector<8xf32>
    %74 = vector.shape_cast %73 : vector<8xf32> to vector<8x1xf32>
    %75 = vector.broadcast %74 : vector<8x1xf32> to vector<8x8xf32>
    %76 = arith.subf %72, %75 : vector<8x8xf32>
    %77 = math.exp %76 : vector<8x8xf32>
    %cst_46 = arith.constant dense<0.000000e+00> : vector<8xf32>
    %78 = vector.multi_reduction <add>, %77, %cst_46 [1] : vector<8x8xf32> to vector<8xf32>
    %79 = vector.shape_cast %78 : vector<8xf32> to vector<8x1xf32>
    %80 = tpu.reciprocal %79 {approx = true} : vector<8x1xf32> -> vector<8x1xf32>
    %81 = vector.broadcast %80 : vector<8x1xf32> to vector<8x8xf32>
    %82 = arith.mulf %77, %81 : vector<8x8xf32>
    %83 = arith.addf %54, %82 : vector<8x8xf32>
    %84 = arith.truncf %82 : vector<8x8xf32> to vector<8x8xbf16>
    %cst_47 = arith.constant dense<0.000000e+00> : vector<8x32xf32>
    %85 = tpu.matmul %84, %68, %cst_47 {dimension_numbers = #tpu.dot_dimension_numbers<[1], [0], [0], [1], [0, 0, 1, 1], [], []>} : vector<8x8xbf16>, vector<8x32xbf16>, vector<8x32xf32> -> vector<8x32xf32>
    %86 = arith.truncf %85 : vector<8x32xf32> to vector<8x32xbf16>
    %c0_48 = arith.constant 0 : index
    %c0_49 = arith.constant 0 : index
    %c64_50 = arith.constant 64 : index
    %87 = vector.load %arg6[%c0_48, %c0_49, %c64_50] : memref<1x8x128xbf16, #tpu.memory_space<vmem>>, vector<1x8x32xbf16>
    %88 = vector.shape_cast %87 : vector<1x8x32xbf16> to vector<8x32xbf16>
    %89 = vector.shape_cast %86 : vector<8x32xbf16> to vector<1x8x32xbf16>
    tpu.vector_store %arg6[%c0_48, %c0_49, %c64_50], %89 {strides = array<i32>} : memref<1x8x128xbf16, #tpu.memory_space<vmem>>, vector<1x8x32xbf16>,
    %c0_51 = arith.constant 0 : index
    %c0_52 = arith.constant 0 : index
    %c96 = arith.constant 96 : index
    %90 = vector.load %arg2[%c0_51, %c0_52, %c96] : memref<1x8x128xbf16, #tpu.memory_space<vmem>>, vector<1x8x32xbf16>
    %91 = vector.shape_cast %90 : vector<1x8x32xbf16> to vector<8x32xbf16>
    %cst_53 = arith.constant 1.767580e-01 : bf16
    %92 = vector.broadcast %cst_53 : bf16 to vector<8x32xbf16>
    %93 = arith.mulf %91, %92 : vector<8x32xbf16>
    %c0_54 = arith.constant 0 : index
    %c0_55 = arith.constant 0 : index
    %c96_56 = arith.constant 96 : index
    %94 = vector.load %arg3[%c0_54, %c0_55, %c96_56] : memref<1x8x128xbf16, #tpu.memory_space<vmem>>, vector<1x8x32xbf16>
    %95 = vector.shape_cast %94 : vector<1x8x32xbf16> to vector<8x32xbf16>
    %c0_57 = arith.constant 0 : index
    %c0_58 = arith.constant 0 : index
    %c96_59 = arith.constant 96 : index
    %96 = vector.load %arg4[%c0_57, %c0_58, %c96_59] : memref<1x8x128xbf16, #tpu.memory_space<vmem>>, vector<1x8x32xbf16>
    %97 = vector.shape_cast %96 : vector<1x8x32xbf16> to vector<8x32xbf16>
    %98 = tpu.transpose %95, [1, 0] : vector<8x32xbf16> -> vector<32x8xbf16>
    %cst_60 = arith.constant dense<0.000000e+00> : vector<8x8xf32>
    %99 = tpu.matmul %93, %98, %cst_60 {dimension_numbers = #tpu.dot_dimension_numbers<[1], [0], [0], [1], [0, 0, 1, 1], [], []>} : vector<8x32xbf16>, vector<32x8xbf16>, vector<8x8xf32> -> vector<8x8xf32>
    %100 = vector.broadcast %1 : vector<1x8xf32> to vector<8x8xf32>
    %101 = arith.addf %99, %100 : vector<8x8xf32>
    %cst_61 = arith.constant dense<0xFF800000> : vector<8xf32>
    %102 = vector.multi_reduction <maximumf>, %101, %cst_61 [1] : vector<8x8xf32> to vector<8xf32>
    %103 = vector.shape_cast %102 : vector<8xf32> to vector<8x1xf32>
    %104 = vector.broadcast %103 : vector<8x1xf32> to vector<8x8xf32>
    %105 = arith.subf %101, %104 : vector<8x8xf32>
    %106 = math.exp %105 : vector<8x8xf32>
    %cst_62 = arith.constant dense<0.000000e+00> : vector<8xf32>
    %107 = vector.multi_reduction <add>, %106, %cst_62 [1] : vector<8x8xf32> to vector<8xf32>
    %108 = vector.shape_cast %107 : vector<8xf32> to vector<8x1xf32>
    %109 = tpu.reciprocal %108 {approx = true} : vector<8x1xf32> -> vector<8x1xf32>
    %110 = vector.broadcast %109 : vector<8x1xf32> to vector<8x8xf32>
    %111 = arith.mulf %106, %110 : vector<8x8xf32>
    %112 = arith.addf %83, %111 : vector<8x8xf32>
    %113 = arith.truncf %111 : vector<8x8xf32> to vector<8x8xbf16>
    %cst_63 = arith.constant dense<0.000000e+00> : vector<8x32xf32>
    %114 = tpu.matmul %113, %97, %cst_63 {dimension_numbers = #tpu.dot_dimension_numbers<[1], [0], [0], [1], [0, 0, 1, 1], [], []>} : vector<8x8xbf16>, vector<8x32xbf16>, vector<8x32xf32> -> vector<8x32xf32>
    %115 = arith.truncf %114 : vector<8x32xf32> to vector<8x32xbf16>
    %c0_64 = arith.constant 0 : index
    %c0_65 = arith.constant 0 : index
    %c96_66 = arith.constant 96 : index
    %116 = vector.load %arg6[%c0_64, %c0_65, %c96_66] : memref<1x8x128xbf16, #tpu.memory_space<vmem>>, vector<1x8x32xbf16>
    %117 = vector.shape_cast %116 : vector<1x8x32xbf16> to vector<8x32xbf16>
    %118 = vector.shape_cast %115 : vector<8x32xbf16> to vector<1x8x32xbf16>
    tpu.vector_store %arg6[%c0_64, %c0_65, %c96_66], %118 {strides = array<i32>} : memref<1x8x128xbf16, #tpu.memory_space<vmem>>, vector<1x8x32xbf16>,
    %cst_67 = arith.constant 2.500000e-01 : f32
    %119 = vector.broadcast %cst_67 : f32 to vector<8x8xf32>
    %120 = arith.mulf %112, %119 : vector<8x8xf32>
    %c0_68 = arith.constant 0 : index
    %c0_69 = arith.constant 0 : index
    %c0_70 = arith.constant 0 : index
    %121 = vector.load %arg7[%c0_68, %c0_69, %c0_70] : memref<1x8x8xf32, #tpu.memory_space<vmem>>, vector<1x8x8xf32>
    %122 = vector.shape_cast %121 : vector<1x8x8xf32> to vector<8x8xf32>
    %123 = vector.shape_cast %120 : vector<8x8xf32> to vector<1x8x8xf32>
    tpu.vector_store %arg7[%c0_68, %c0_69, %c0_70], %123 {strides = array<i32>} : memref<1x8x8xf32, #tpu.memory_space<vmem>>, vector<1x8x8xf32>,
    return
  }
  func.func @transform_0(%arg0: i32, %arg1: i32) -> (i32, i32, i32) {
    %c0_i32 = arith.constant 0 : i32
    %c0_i32_0 = arith.constant 0 : i32
    return %arg0, %arg1, %c0_i32 : i32, i32, i32
  }
  func.func @transform_1(%arg0: i32, %arg1: i32) -> (i32, i32, i32) {
    %c0_i32 = arith.constant 0 : i32
    %c0_i32_0 = arith.constant 0 : i32
    %c0_i32_1 = arith.constant 0 : i32
    return %arg0, %c0_i32, %c0_i32_0 : i32, i32, i32
  }
  func.func @transform_2(%arg0: i32, %arg1: i32) -> (i32, i32, i32) {
    %c0_i32 = arith.constant 0 : i32
    %c1_i32 = arith.constant 1 : i32
    %c0_i32_0 = arith.constant 0 : i32
    return %arg0, %c0_i32, %c1_i32 : i32, i32, i32
  }
  func.func @transform_3(%arg0: i32, %arg1: i32) -> (i32, i32, i32) {
    %c0_i32 = arith.constant 0 : i32
    %c0_i32_0 = arith.constant 0 : i32
    %c0_i32_1 = arith.constant 0 : i32
    return %arg0, %c0_i32, %c0_i32_0 : i32, i32, i32
  }
  func.func @transform_4(%arg0: i32, %arg1: i32) -> (i32, i32, i32) {
    %c0_i32 = arith.constant 0 : i32
    %c0_i32_0 = arith.constant 0 : i32
    return %arg0, %arg1, %c0_i32 : i32, i32, i32
  }
  func.func @transform_5(%arg0: i32, %arg1: i32) -> (i32, i32, i32) {
    %c0_i32 = arith.constant 0 : i32
    %c0_i32_0 = arith.constant 0 : i32
    return %arg0, %arg1, %c0_i32 : i32, i32, i32
  }
}

module attributes {stable_mosaic.version = 11 : i64} {
  func.func @_vocab_tbv_kernel(%arg0: i32, %arg1: i32, %arg2: i32, %arg3: memref<1x8x128xbf16, #tpu.memory_space<vmem>>, %arg4: memref<128x128xbf16, #tpu.memory_space<vmem>>, %arg5: memref<1x128xf32, #tpu.memory_space<vmem>>, %arg6: memref<8x128xf32, #tpu.memory_space<vmem>>) attributes {dimension_semantics = [#tpu.dimension_semantics<parallel>, #tpu.dimension_semantics<parallel>, #tpu.dimension_semantics<parallel>], iteration_bounds = array<i64: 1, 2, 1>, scalar_prefetch = 0 : i64, scratch_operands = 0 : i64, tpu.core_type = #tpu.core_type<tc>, window_params = [{transform_indices = @transform_0, window_bounds = array<i64: 1, 8, 128>}, {transform_indices = @transform_1, window_bounds = array<i64: 128, 128>}, {transform_indices = @transform_2, window_bounds = array<i64: 1, 128>}, {transform_indices = @transform_3, window_bounds = array<i64: 8, 128>}]} {
    %c0 = arith.constant 0 : index
    %c0_0 = arith.constant 0 : index
    %c0_1 = arith.constant 0 : index
    %0 = vector.load %arg3[%c0, %c0_0, %c0_1] : memref<1x8x128xbf16, #tpu.memory_space<vmem>>, vector<1x8x128xbf16>
    %1 = vector.shape_cast %0 : vector<1x8x128xbf16> to vector<8x128xbf16>
    %c0_2 = arith.constant 0 : index
    %c0_3 = arith.constant 0 : index
    %2 = vector.load %arg4[%c0_2, %c0_3] : memref<128x128xbf16, #tpu.memory_space<vmem>>, vector<128x128xbf16>
    %cst = arith.constant dense<0.000000e+00> : vector<8x128xf32>
    %3 = tpu.matmul %1, %2, %cst {dimension_numbers = #tpu.dot_dimension_numbers<[1], [0], [0], [1], [0, 0, 1, 1], [], []>} : vector<8x128xbf16>, vector<128x128xbf16>, vector<8x128xf32> -> vector<8x128xf32>
    %c0_4 = arith.constant 0 : index
    %c0_5 = arith.constant 0 : index
    %4 = vector.load %arg5[%c0_4, %c0_5] : memref<1x128xf32, #tpu.memory_space<vmem>>, vector<1x128xf32>
    %5 = vector.broadcast %4 : vector<1x128xf32> to vector<8x128xf32>
    %6 = arith.addf %3, %5 : vector<8x128xf32>
    %c0_6 = arith.constant 0 : index
    %c0_7 = arith.constant 0 : index
    %7 = vector.load %arg6[%c0_6, %c0_7] : memref<8x128xf32, #tpu.memory_space<vmem>>, vector<8x128xf32>
    tpu.vector_store %arg6[%c0_6, %c0_7], %6 {strides = array<i32>} : memref<8x128xf32, #tpu.memory_space<vmem>>, vector<8x128xf32>,
    return
  }
  func.func @transform_0(%arg0: i32, %arg1: i32, %arg2: i32) -> (i32, i32, i32) {
    %c0_i32 = arith.constant 0 : i32
    %c0_i32_0 = arith.constant 0 : i32
    return %arg1, %arg2, %c0_i32 : i32, i32, i32
  }
  func.func @transform_1(%arg0: i32, %arg1: i32, %arg2: i32) -> (i32, i32) {
    %c0_i32 = arith.constant 0 : i32
    %c0_i32_0 = arith.constant 0 : i32
    return %c0_i32, %arg0 : i32, i32
  }
  func.func @transform_2(%arg0: i32, %arg1: i32, %arg2: i32) -> (i32, i32) {
    %c0_i32 = arith.constant 0 : i32
    %c0_i32_0 = arith.constant 0 : i32
    return %c0_i32, %arg0 : i32, i32
  }
  func.func @transform_3(%arg0: i32, %arg1: i32, %arg2: i32) -> (i32, i32) {
    %c1_i32 = arith.constant 1 : i32
    %0 = arith.muli %arg1, %c1_i32 : i32
    %1 = arith.addi %0, %arg0 : i32
    %c0_i32 = arith.constant 0 : i32
    return %arg2, %1 : i32, i32
  }
}

</mosaic_0001>

<llo_original>
// kernel: decoder_forward.26
$region0: #{decoder_forward.26}
  #allocation0 [shape = 'u32[]', space=smem, size = 0x4, offset = 0x4, fixed_abs, tag = 'smem constant byte address 0x4 - core index']
  #allocation1 [shape = 'u32[72,128]{1,0:T(1,128)}', space=vmem, size = 0x9000, scoped, tag = 'internal scratch']
  %s0 = inlined_call_operand.vmem [shape: bf16[16,128], index: 0, kind: input, shape index: {}]
  %s1 = inlined_call_operand.hbm [shape: bf16[128,128], index: 1, kind: input, shape index: {}]
  %s2 = inlined_call_operand.vmem [shape: f32[1,128], index: 2, kind: input, shape index: {}]
  %s3 = inlined_call_operand.vmem [shape: bf16[16,128], index: 3, kind: output, shape index: {}]
  %s4 = sld [smem:[#allocation0]]
  $region26: #{decoder_forward.26} parent=0
    _
  %s6 = ssub.s32 1, %s4
  %s7 = scalar_select 0, %s6, %s4
  $region1: #{decoder_forward.26} parent=0
    #allocation2 [shape = 'u8[32768]{0}', space=vmem, size = 0x8000, scoped, tag = 'input window, operand 1, single buffered']
    #allocation3 [shape = 's32[1]{0}', space=sflag, size = 0x4, scoped, tag = 'scoped memory for decoder_forward.26']
    %8 = vsyncpa [#allocation3], 0
    // Predicated region
    $region2: #{decoder_forward.26} parent=1 // pred_check
      _
    $region3: #{decoder_forward.26} parent=1 // pred_check_branch
      %10 = sbr.rel (0) target = $region5
    $region4: #{decoder_forward.26} parent=1 // pred_region
      _
    $region5: #{decoder_forward.26} parent=1 // pred_fallthru
      _
    // Predicated region
    $region6: #{decoder_forward.26} parent=1 // pred_check
      _
    $region7: #{decoder_forward.26} parent=1 // pred_check_branch
      %12 = sbr.rel (0) target = $region9
    $region8: #{decoder_forward.26} parent=1 // pred_region
      %14 = vsyncadd [#allocation3], 0
      %s15 = sshll.u32 %s1, 4
      %s16 = int_to_ptr.hbm [resolvable:$true] %s15
      %s17 = sshll.u32 [#allocation2], 4
      %s18 = int_to_ptr.vmem [resolvable:$true] %s17
      %23 = dma.hbm_to_vmem [thread:$0]  %s16, 1024, %s18, [#allocation3], 64, 64, 4
    $region9: #{decoder_forward.26} parent=1 // pred_fallthru
      _
    // Predicated region
    $region10: #{decoder_forward.26} parent=1 // pred_check
      _
    $region11: #{decoder_forward.26} parent=1 // pred_check_branch
      %25 = sbr.rel (0) target = $region13
    $region12: #{decoder_forward.26} parent=1 // pred_region
      _
    $region13: #{decoder_forward.26} parent=1 // pred_fallthru
      _
    // Predicated region
    $region14: #{decoder_forward.26} parent=1 // pred_check
      _
    $region15: #{decoder_forward.26} parent=1 // pred_check_branch
      %27 = sbr.rel (0) target = $region17
    $region16: #{decoder_forward.26} parent=1 // pred_region
      %29 = dma.done [#allocation3], 1024
    $region17: #{decoder_forward.26} parent=1 // pred_fallthru
      _
    %v30 = vld [vmem:[%s0] sm:$0xf]
    %v31 = vld [vmem:[%s0 + $0x4] sm:$0xf]
    %v32 = vld [vmem:[#allocation2] sm:$0xf]
    %v33 = vld [vmem:[#allocation2 + $0x4] sm:$0xf]
    %v34 = vld [vmem:[#allocation2 + $0x8] sm:$0xf]
    %v35 = vld [vmem:[#allocation2 + $0xc] sm:$0xf]
    %v36 = vld [vmem:[#allocation2 + $0x10] sm:$0xf]
    %v37 = vld [vmem:[#allocation2 + $0x14] sm:$0xf]
    %v38 = vld [vmem:[#allocation2 + $0x18] sm:$0xf]
    %v39 = vld [vmem:[#allocation2 + $0x1c] sm:$0xf]
    %v40 = vld [vmem:[#allocation2 + $0x20] sm:$0xf]
    %v41 = vld [vmem:[#allocation2 + $0x24] sm:$0xf]
    %v42 = vld [vmem:[#allocation2 + $0x28] sm:$0xf]
    %v43 = vld [vmem:[#allocation2 + $0x2c] sm:$0xf]
    %v44 = vld [vmem:[#allocation2 + $0x30] sm:$0xf]
    %v45 = vld [vmem:[#allocation2 + $0x34] sm:$0xf]
    %v46 = vld [vmem:[#allocation2 + $0x38] sm:$0xf]
    %v47 = vld [vmem:[#allocation2 + $0x3c] sm:$0xf]
    %v48 = vld [vmem:[%s2] sm:$0x1]
    %v50 = vperm.slane %v48, 0
    %v54 = vunpack.c.l.b16 %v30
    %v55 = vunpack.c.l.b16 %v31
    %v56 = vpack.c.b16 %v55, %v54
    %v74 = vunpack.c.l.b16 %v32
    %v75 = vunpack.c.l.b16 %v33
    %v76 = vunpack.c.l.b16 %v34
    %v77 = vunpack.c.l.b16 %v35
    %v78 = vunpack.c.l.b16 %v36
    %v79 = vunpack.c.l.b16 %v37
    %v80 = vunpack.c.l.b16 %v38
    %v81 = vunpack.c.l.b16 %v39
    %v82 = vunpack.c.l.b16 %v40
    %v83 = vunpack.c.l.b16 %v41
    %v84 = vunpack.c.l.b16 %v42
    %v85 = vunpack.c.l.b16 %v43
    %v86 = vunpack.c.l.b16 %v44
    %v87 = vunpack.c.l.b16 %v45
    %v88 = vunpack.c.l.b16 %v46
    %v89 = vunpack.c.l.b16 %v47
    %v90 = vpack.c.b16 %v75, %v74
    %v91 = vpack.c.b16 %v77, %v76
    %v92 = vpack.c.b16 %v79, %v78
    %v93 = vpack.c.b16 %v81, %v80
    %v94 = vpack.c.b16 %v83, %v82
    %v95 = vpack.c.b16 %v85, %v84
    %v96 = vpack.c.b16 %v87, %v86
    %v97 = vpack.c.b16 %v89, %v88
    %106 = vmatpush.bf16.msra.mxu0 %v97
    %107 = vmatpush.bf16.msra.mxu0 %v96
    %108 = vmatpush.bf16.msra.mxu0 %v95
    %109 = vmatpush.bf16.msra.mxu0 %v94
    %110 = vmatpush.bf16.msra.mxu0 %v93
    %111 = vmatpush.bf16.msra.mxu0 %v92
    %112 = vmatpush.bf16.msra.mxu0 %v91
    %113 = vmatpush.bf16.msra.mxu0 %v90
    %114 = vmatmul.bf16.gmra.mxu0 %v56
    %v115 = vpop.f32.mrf.mxu0
    %v116 = vadd.f32 %v50, %v115
    %v117 = vpop.f32.mrf.mxu0
    %v118 = vadd.f32 %v50, %v117
    %119 = vdwg.mxu0
    %v120 = vpack.c.bf16 %v116, %v116
    %v121 = vpack.c.bf16 %v118, %v118
    %122 = vst [vmem:[%s3] sm:$0xf] %v120
    %123 = vst [vmem:[%s3 + $0x4] sm:$0xf] %v121
    // Predicated region
    $region18: #{decoder_forward.26} parent=1 // pred_check
      _
    $region19: #{decoder_forward.26} parent=1 // pred_check_branch
      %125 = sbr.rel (0) target = $region21
    $region20: #{decoder_forward.26} parent=1 // pred_region
      _
    $region21: #{decoder_forward.26} parent=1 // pred_fallthru
      _
    // Predicated region
    $region22: #{decoder_forward.26} parent=1 // pred_check
      _
    $region23: #{decoder_forward.26} parent=1 // pred_check_branch
      %127 = sbr.rel (0) target = $region25
    $region24: #{decoder_forward.26} parent=1 // pred_region
      _
    $region25: #{decoder_forward.26} parent=1 // pred_fallthru
      _
    %128 = vsyncpa [#allocation3], 1

// kernel: decoder_forward.23
$region0: #{decoder_forward.23}
  #allocation0 [shape = 'u32[]', space=smem, size = 0x4, offset = 0x4, fixed_abs, tag = 'smem constant byte address 0x4 - core index']
  #allocation1 [shape = 'u32[72,128]{1,0:T(1,128)}', space=vmem, size = 0x9000, scoped, tag = 'internal scratch']
  %s0 = inlined_call_operand.vmem [shape: bf16[16,128], index: 0, kind: input, shape index: {}]
  %s1 = inlined_call_operand.hbm [shape: bf16[128,384], index: 1, kind: input, shape index: {}]
  %s2 = inlined_call_operand.vmem [shape: f32[1,384], index: 2, kind: input, shape index: {}]
  %s3 = inlined_call_operand.vmem [shape: bf16[16,384], index: 3, kind: output, shape index: {}]
  %s4 = sld [smem:[#allocation0]]
  $region86: #{decoder_forward.23} parent=0
    _
  %s6 = ssub.s32 1, %s4
  %s7 = scalar_select 0, %s6, %s4
  $region1: #{decoder_forward.23} parent=0
    #allocation2 [shape = 'u8[65536]{0}', space=vmem, size = 0x10000, scoped, tag = 'input window, operand 1']
    #allocation3 [shape = 's32[2]{0}', space=sflag, size = 0x8, scoped, tag = 'scoped memory for decoder_forward.23']
    #allocation4 [shape = 'u8[8192]{0}', space=vmem, size = 0x2000, scoped, tag = 'output window, operand 0']
    %8 = vsyncpa [#allocation3], 0
    %s9 = scalar_lea.sflag [#allocation3], 1
    %10 = vsyncpa %s9, 0
    loop: start=0, step=1, limit=5
    $region2: #{decoder_forward.23} parent=1 // loop_pre_header
      _
    $region3: #{decoder_forward.23} parent=1 // loop_header
      %s12 = sphi 0, %s16
      %p13 = scmp.ge.s32.totalorder %s12, 5
      %s19 = sphi 0, %s38
      %s20 = sphi 0, %s34
      %s21 = sphi 0, %s30
      %s22 = sphi 0, %s19
      %s23 = sphi 0, %s20
      %s24 = sphi 0, %s21
      %s25 = sphi 0, %s22
      %s26 = sphi 0, %s23
      %s27 = sphi 0, %s24
      %s43 = sphi 0, %s45
      %s46 = sphi 0, %s43
      %s47 = sphi 0, %s46
      %s63 = sphi 0, %s47
      %s71 = sphi 0, %s73
      %s74 = sphi 0, %s71
      %s75 = sphi 0, %s74
      %s91 = sphi 0, %s75
      %s97 = sphi 0, %s99
      %s100 = sphi 0, %s97
      %s101 = sphi 0, %s100
      %s117 = sphi 0, %s101
      %s125 = sphi 0, %s127
      %s128 = sphi 0, %s125
      %s129 = sphi 0, %s128
      %s145 = sphi 0, %s129
    $region4: #{decoder_forward.23} parent=1 // loop_header_branch
      %15 = sbr.rel (%p13) target = $region8
    $region5: #{decoder_forward.23} parent=1 // loop_body
      %s17 = ssub.s32 %s12, 1
      %s18 = ssub.s32 %s12, 2
      %s28 = sadd.s32 1, %s21
      %p29 = scmp.ge.s32.totalorder %s28, 1
      %s30 = scalar_select %p29, 0, %s28
      %s31 = sadd.s32 1, %s20
      %s32 = scalar_select %p29, %s31, %s20
      %p33 = scmp.ge.s32.totalorder %s32, 1
      %s34 = scalar_select %p33, 0, %s32
      %s35 = sadd.s32 1, %s19
      %s36 = scalar_select %p33, %s35, %s19
      %p37 = scmp.ge.s32.totalorder %s36, 3
      %s38 = scalar_select %p37, 0, %s36
      %s39 = ssub.s32 %s20, %s34
      %s40 = ssub.s32 %s21, %s30
      %s41 = sor.u32 %s39, %s40
      %p42 = scmp.eq.s32.totalorder %s41, 0
      %s44 = sadd.s32 %s43, 1
      %s45 = scalar_select %p42, %s43, %s44
      %p48 = pneg %p42
      %p49 = scmp.eq.s32.totalorder %s12, 2
      %p50 = por %p48, %p49
      %p51 = scmp.ne.s32.totalorder %s43, %s46
      %p52 = scmp.eq.s32.totalorder %s12, 0
      %p53 = por %p51, %p52
      %p54 = scmp.ne.s32.totalorder %s43, %s46
      %p55 = scmp.eq.s32.totalorder %s17, 2
      %p56 = por %p54, %p55
      %p57 = scmp.ne.s32.totalorder %s46, %s47
      %p58 = scmp.eq.s32.totalorder %s17, 0
      %p59 = por %p57, %p58
      %p60 = scmp.ne.s32.totalorder %s46, %s47
      %p61 = scmp.eq.s32.totalorder %s18, 2
      %p62 = por %p60, %p61
      %p64 = scmp.ne.s32.totalorder %s47, %s63
      %p65 = scmp.eq.s32.totalorder %s18, 0
      %p66 = por %p64, %p65
      %s67 = ssub.s32 %s21, %s30
      %s68 = ssub.s32 %s19, %s38
      %s69 = sor.u32 %s67, %s68
      %p70 = scmp.eq.s32.totalorder %s69, 0
      %s72 = sadd.s32 %s71, 1
      %s73 = scalar_select %p70, %s71, %s72
      %p76 = pneg %p70
      %p77 = scmp.eq.s32.totalorder %s12, 2
      %p78 = por %p76, %p77
      %p79 = scmp.ne.s32.totalorder %s71, %s74
      %p80 = scmp.eq.s32.totalorder %s12, 0
      %p81 = por %p79, %p80
      %p82 = scmp.ne.s32.totalorder %s71, %s74
      %p83 = scmp.eq.s32.totalorder %s17, 2
      %p84 = por %p82, %p83
      %p85 = scmp.ne.s32.totalorder %s74, %s75
      %p86 = scmp.eq.s32.totalorder %s17, 0
      %p87 = por %p85, %p86
      %p88 = scmp.ne.s32.totalorder %s74, %s75
      %p89 = scmp.eq.s32.totalorder %s18, 2
      %p90 = por %p88, %p89
      %p92 = scmp.ne.s32.totalorder %s75, %s91
      %p93 = scmp.eq.s32.totalorder %s18, 0
      %p94 = por %p92, %p93
      %s95 = ssub.s32 %s19, %s38
      %p96 = scmp.eq.s32.totalorder %s95, 0
      %s98 = sadd.s32 %s97, 1
      %s99 = scalar_select %p96, %s97, %s98
      %p102 = pneg %p96
      %p103 = scmp.eq.s32.totalorder %s12, 2
      %p104 = por %p102, %p103
      %p105 = scmp.ne.s32.totalorder %s97, %s100
      %p106 = scmp.eq.s32.totalorder %s12, 0
      %p107 = por %p105, %p106
      %p108 = scmp.ne.s32.totalorder %s97, %s100
      %p109 = scmp.eq.s32.totalorder %s17, 2
      %p110 = por %p108, %p109
      %p111 = scmp.ne.s32.totalorder %s100, %s101
      %p112 = scmp.eq.s32.totalorder %s17, 0
      %p113 = por %p111, %p112
      %p114 = scmp.ne.s32.totalorder %s100, %s101
      %p115 = scmp.eq.s32.totalorder %s18, 2
      %p116 = por %p114, %p115
      %p118 = scmp.ne.s32.totalorder %s101, %s117
      %p119 = scmp.eq.s32.totalorder %s18, 0
      %p120 = por %p118, %p119
      %s121 = ssub.s32 %s20, %s34
      %s122 = ssub.s32 %s19, %s38
      %s123 = sor.u32 %s121, %s122
      %p124 = scmp.eq.s32.totalorder %s123, 0
      %s126 = sadd.s32 %s125, 1
      %s127 = scalar_select %p124, %s125, %s126
      %p130 = pneg %p124
      %p131 = scmp.eq.s32.totalorder %s12, 2
      %p132 = por %p130, %p131
      %p133 = scmp.ne.s32.totalorder %s125, %s128
      %p134 = scmp.eq.s32.totalorder %s12, 0
      %p135 = por %p133, %p134
      %p136 = scmp.ne.s32.totalorder %s125, %s128
      %p137 = scmp.eq.s32.totalorder %s17, 2
      %p138 = por %p136, %p137
      %p139 = scmp.ne.s32.totalorder %s128, %s129
      %p140 = scmp.eq.s32.totalorder %s17, 0
      %p141 = por %p139, %p140
      %p142 = scmp.ne.s32.totalorder %s128, %s129
      %p143 = scmp.eq.s32.totalorder %s18, 2
      %p144 = por %p142, %p143
      %p146 = scmp.ne.s32.totalorder %s129, %s145
      %p147 = scmp.eq.s32.totalorder %s18, 0
      %p148 = por %p146, %p147
      %p149 = scmp.le.s32.totalorder 1, %s12
      %p150 = scmp.lt.s32.totalorder %s12, 4
      %p151 = pnand %p149, %p150
      %p152 = pneg %p151
      // Predicated region
      $region9: #{decoder_forward.23} parent=5 // pred_check
        _
      $region10: #{decoder_forward.23} parent=5 // pred_check_branch
        %154 = sbr.rel (%p151) target = $region12
      $region11: #{decoder_forward.23} parent=5 // pred_region
        %s155 = ssub.s32 %s12, 1
        // Predicated region
        $region13: #{decoder_forward.23} parent=11 // pred_check
          %p156 = pneg %p59
        $region14: #{decoder_forward.23} parent=11 // pred_check_branch
          %158 = sbr.rel (%p156) target = $region16
        $region15: #{decoder_forward.23} parent=11 // pred_region
          %s159 = smul.u32 2, %s23
          %p160 = scmp.lt.s32.totalorder %s159, 1
          %s161 = scalar_select %p160, %s159, 1
          %p162 = scmp.lt.s32.totalorder %s24, 0
          %s163 = scalar_select %p162, %s24, 0
          %s164 = sadd.s32 %s163, %s161
          %s165 = smul.addr %s164, 4
          %s166 = scalar_lea.vmem %s0, %s165
          %s167 = smul.u32 2, %s23
        $region16: #{decoder_forward.23} parent=11 // pred_fallthru
          _
      $region12: #{decoder_forward.23} parent=5 // pred_fallthru
        _
      %p168 = scmp.lt.s32.totalorder %s12, 3
      // Predicated region
      $region17: #{decoder_forward.23} parent=5 // pred_check
        %p169 = pneg %p168
      $region18: #{decoder_forward.23} parent=5 // pred_check_branch
        %171 = sbr.rel (%p169) target = $region20
      $region19: #{decoder_forward.23} parent=5 // pred_region
        // Predicated region
        $region21: #{decoder_forward.23} parent=19 // pred_check
          %p172 = pneg %p81
        $region22: #{decoder_forward.23} parent=19 // pred_check_branch
          %174 = sbr.rel (%p172) target = $region24
        $region23: #{decoder_forward.23} parent=19 // pred_region
          %s175 = sand.u32 %s71, 1
          %s176 = scalar_lea.sflag [#allocation3], %s175
          %s177 = sand.u32 %s71, 1
          %s178 = smul.addr %s177, 64
          %s179 = scalar_lea.vmem [#allocation2], %s178
          %s180 = smul.u32 16, %s21
          %182 = vsyncadd %s176, 0
          %s183 = smul.addr %s180, 3
          %s184 = sadd.s32 %s19, %s183
          %s185 = smul.addr %s184, 4
          %s186 = scalar_lea.hbm %s1, %s185
          %s187 = sshll.u32 %s186, 4
          %s188 = int_to_ptr.hbm [resolvable:$true] %s187
          %s189 = sshll.u32 %s179, 4
          %s190 = int_to_ptr.vmem [resolvable:$true] %s189
          %195 = dma.hbm_to_vmem [thread:$0]  %s188, 1024, %s190, %s176, 192, 64, 4
        $region24: #{decoder_forward.23} parent=19 // pred_fallthru
          _
        // Predicated region
        $region25: #{decoder_forward.23} parent=19 // pred_check
          %p196 = pneg %p107
        $region26: #{decoder_forward.23} parent=19 // pred_check_branch
          %198 = sbr.rel (%p196) target = $region28
        $region27: #{decoder_forward.23} parent=19 // pred_region
          %p199 = scmp.lt.s32.totalorder %s19, 2
          %s200 = scalar_select %p199, %s19, 2
          %s201 = scalar_lea.vmem %s2, %s200
        $region28: #{decoder_forward.23} parent=19 // pred_fallthru
          _
      $region20: #{decoder_forward.23} parent=5 // pred_fallthru
        _
      %p202 = scmp.le.s32.totalorder 1, %s12
      %p203 = scmp.lt.s32.totalorder %s12, 4
      %p204 = pnand %p202, %p203
      %p205 = pneg %p204
      // Predicated region
      $region29: #{decoder_forward.23} parent=5 // pred_check
        _
      $region30: #{decoder_forward.23} parent=5 // pred_check_branch
        %207 = sbr.rel (%p204) target = $region32
      $region31: #{decoder_forward.23} parent=5 // pred_region
        %s208 = ssub.s32 %s12, 1
        %s209 = sand.u32 %s74, 1
        %s210 = scalar_lea.sflag [#allocation3], %s209
        %s211 = sand.u32 %s74, 1
        %s212 = smul.addr %s211, 64
        %s213 = scalar_lea.vmem [#allocation2], %s212
        // Predicated region
        $region33: #{decoder_forward.23} parent=31 // pred_check
          %p214 = pneg %p87
        $region34: #{decoder_forward.23} parent=31 // pred_check_branch
          %216 = sbr.rel (%p214) target = $region36
        $region35: #{decoder_forward.23} parent=31 // pred_region
          %218 = dma.done %s210, 1024
        $region36: #{decoder_forward.23} parent=31 // pred_fallthru
          _
        %s219 = smul.u32 2, %s23
        %p220 = scmp.lt.s32.totalorder %s219, 1
        %s221 = scalar_select %p220, %s219, 1
        %p222 = scmp.lt.s32.totalorder %s24, 0
        %s223 = scalar_select %p222, %s24, 0
        %s224 = sadd.s32 %s223, %s221
        %s225 = smul.addr %s224, 4
        %s226 = scalar_lea.vmem %s0, %s225
        %p227 = pneg %p59
        %p228 = pneg %p56
        %s229 = sand.u32 %s74, 1
        %s230 = scalar_lea.sflag [#allocation3], %s229
        %s231 = sand.u32 %s74, 1
        %s232 = smul.addr %s231, 64
        %s233 = scalar_lea.vmem [#allocation2], %s232
        %p234 = pneg %p87
        %p235 = pneg %p84
        %p236 = scmp.lt.s32.totalorder %s22, 2
        %s237 = scalar_select %p236, %s22, 2
        %s238 = scalar_lea.vmem %s2, %s237
        %p239 = pneg %p113
        %p240 = pneg %p110
        %p241 = pneg %p141
        %p242 = pneg %p138
        %s243 = sand.u32 %s128, 1
        %s244 = sand.u32 %s128, 1
        %s245 = smul.addr %s244, 8
        %s246 = scalar_lea.vmem [#allocation4], %s245
        %s247 = smul.u32 2, %s23
        %p248 = scmp.lt.s32.totalorder %s247, 1
        %s249 = scalar_select %p248, %s247, 1
        %p250 = scmp.lt.s32.totalorder %s24, 0
        %s251 = scalar_select %p250, %s24, 0
        %s252 = sadd.s32 %s251, %s249
        %s253 = smul.addr %s252, 4
        %s254 = scalar_lea.vmem %s0, %s253
        %s255 = smul.u32 2, %s23
        %s256 = smul.u32 16, %s24
        %p257 = scmp.lt.s32.totalorder %s22, 2
        %s258 = scalar_select %p257, %s22, 2
        %s259 = scalar_lea.vmem %s2, %s258
        %s260 = smul.u32 2, %s23
        %v261 = vld [vmem:[%s254] sm:$0xf]
        %v262 = vld [vmem:[%s254 + $0x4] sm:$0xf]
        %v263 = vld [vmem:[%s213] sm:$0xf]
        %v264 = vld [vmem:[%s213 + $0x4] sm:$0xf]
        %v265 = vld [vmem:[%s213 + $0x8] sm:$0xf]
        %v266 = vld [vmem:[%s213 + $0xc] sm:$0xf]
        %v267 = vld [vmem:[%s213 + $0x10] sm:$0xf]
        %v268 = vld [vmem:[%s213 + $0x14] sm:$0xf]
        %v269 = vld [vmem:[%s213 + $0x18] sm:$0xf]
        %v270 = vld [vmem:[%s213 + $0x1c] sm:$0xf]
        %v271 = vld [vmem:[%s213 + $0x20] sm:$0xf]
        %v272 = vld [vmem:[%s213 + $0x24] sm:$0xf]
        %v273 = vld [vmem:[%s213 + $0x28] sm:$0xf]
        %v274 = vld [vmem:[%s213 + $0x2c] sm:$0xf]
        %v275 = vld [vmem:[%s213 + $0x30] sm:$0xf]
        %v276 = vld [vmem:[%s213 + $0x34] sm:$0xf]
        %v277 = vld [vmem:[%s213 + $0x38] sm:$0xf]
        %v278 = vld [vmem:[%s213 + $0x3c] sm:$0xf]
        %v279 = vld [vmem:[%s259] sm:$0x1]
        %v281 = vperm.slane %v279, 0
        %v285 = vunpack.c.l.b16 %v261
        %v286 = vunpack.c.l.b16 %v262
        %v287 = vpack.c.b16 %v286, %v285
        %v305 = vunpack.c.l.b16 %v263
        %v306 = vunpack.c.l.b16 %v264
        %v307 = vunpack.c.l.b16 %v265
        %v308 = vunpack.c.l.b16 %v266
        %v309 = vunpack.c.l.b16 %v267
        %v310 = vunpack.c.l.b16 %v268
        %v311 = vunpack.c.l.b16 %v269
        %v312 = vunpack.c.l.b16 %v270
        %v313 = vunpack.c.l.b16 %v271
        %v314 = vunpack.c.l.b16 %v272
        %v315 = vunpack.c.l.b16 %v273
        %v316 = vunpack.c.l.b16 %v274
        %v317 = vunpack.c.l.b16 %v275
        %v318 = vunpack.c.l.b16 %v276
        %v319 = vunpack.c.l.b16 %v277
        %v320 = vunpack.c.l.b16 %v278
        %v321 = vpack.c.b16 %v306, %v305
        %v322 = vpack.c.b16 %v308, %v307
        %v323 = vpack.c.b16 %v310, %v309
        %v324 = vpack.c.b16 %v312, %v311
        %v325 = vpack.c.b16 %v314, %v313
        %v326 = vpack.c.b16 %v316, %v315
        %v327 = vpack.c.b16 %v318, %v317
        %v328 = vpack.c.b16 %v320, %v319
        %337 = vmatpush.bf16.msra.mxu0 %v328
        %338 = vmatpush.bf16.msra.mxu0 %v327
        %339 = vmatpush.bf16.msra.mxu0 %v326
        %340 = vmatpush.bf16.msra.mxu0 %v325
        %341 = vmatpush.bf16.msra.mxu0 %v324
        %342 = vmatpush.bf16.msra.mxu0 %v323
        %343 = vmatpush.bf16.msra.mxu0 %v322
        %344 = vmatpush.bf16.msra.mxu0 %v321
        %345 = vmatmul.bf16.gmra.mxu0 %v287
        %v346 = vpop.f32.mrf.mxu0
        %v347 = vadd.f32 %v281, %v346
        %v348 = vpop.f32.mrf.mxu0
        %v349 = vadd.f32 %v281, %v348
        %350 = vdwg.mxu0
        %v351 = vpack.c.bf16 %v347, %v347
        %v352 = vpack.c.bf16 %v349, %v349
        %353 = vst [vmem:[%s246] sm:$0xf] %v351
        %354 = vst [vmem:[%s246 + $0x4] sm:$0xf] %v352
        %s355 = sand.u32 %s128, 1
        %s356 = sand.u32 %s128, 1
        %s357 = smul.addr %s356, 8
        %s358 = scalar_lea.vmem [#allocation4], %s357
        // Predicated region
        $region37: #{decoder_forward.23} parent=31 // pred_check
          %p359 = pneg %p138
        $region38: #{decoder_forward.23} parent=31 // pred_check_branch
          %361 = sbr.rel (%p359) target = $region40
        $region39: #{decoder_forward.23} parent=31 // pred_region
          %s362 = smul.u32 2, %s23
          %s363 = smul.addr %s362, 3
          %s364 = sadd.s32 %s22, %s363
          %s365 = smul.addr %s364, 4
          %s366 = scalar_lea.vmem %s3, %s365
          // Predicated region
          $region41: #{decoder_forward.23} parent=39 // pred_check
            _
          $region42: #{decoder_forward.23} parent=39 // pred_check_branch
            %368 = sbr.rel (0) target = $region44
          $region43: #{decoder_forward.23} parent=39 // pred_region
            // Predicated region
            $region45: #{decoder_forward.23} parent=43 // pred_check
              _
            $region46: #{decoder_forward.23} parent=43 // pred_check_branch
              %370 = sbr.rel target = $region48
            $region47: #{decoder_forward.23} parent=43 // pred_region
              // Predicated region
              $region60: #{decoder_forward.23} parent=47 // pred_check
                _
              $region61: #{decoder_forward.23} parent=47 // pred_check_branch
                %388 = sbr.rel (0) target = $region63
              $region62: #{decoder_forward.23} parent=47 // pred_region
                loop: start=0, step=1, limit=1
                $region64: #{decoder_forward.23} parent=62 // loop_pre_header
                  _
                $region65: #{decoder_forward.23} parent=62 // loop_header
                  %s390 = sphi 0, %s394
                  %p391 = scmp.ge.s32.totalorder %s390, 1
                  %s395 = sphi %s358, %s358
                  %s396 = sphi %s366, %s366
                $region66: #{decoder_forward.23} parent=62 // loop_header_branch
                  %393 = sbr.rel (%p391) target = $region70
                $region67: #{decoder_forward.23} parent=62 // loop_body
                  _
                $region68: #{decoder_forward.23} parent=62 // loop_footer
                  %s394 = sadd.s32 1, %s390
                $region69: #{decoder_forward.23} parent=62 // loop_footer_branch
                  %389 = sbr.rel target = $region65
                $region70: #{decoder_forward.23} parent=62 // loop_exit
                  _
                %s398 = ssub.s32 16, 1
                loop: start=0, step=1, limit=1
                $region71: #{decoder_forward.23} parent=62 // loop_pre_header
                  _
                $region72: #{decoder_forward.23} parent=62 // loop_header
                  %s400 = sphi 0, %s404
                  %p401 = scmp.ge.s32.totalorder %s400, 1
                  %s405 = sphi %s358, %s358
                  %s406 = sphi %s366, %s366
                $region73: #{decoder_forward.23} parent=62 // loop_header_branch
                  %403 = sbr.rel (%p401) target = $region77
                $region74: #{decoder_forward.23} parent=62 // loop_body
                  %v407 = vld [vmem:[%s405] sm:%s398]
                  %408 = vst [vmem:[%s406] sm:%s398] %v407
                  %v409 = vld [vmem:[%s405 + $0x4] sm:%s398]
                  %410 = vst [vmem:[%s406 + $0xc] sm:%s398] %v409
                $region75: #{decoder_forward.23} parent=62 // loop_footer
                  %s404 = sadd.s32 1, %s400
                $region76: #{decoder_forward.23} parent=62 // loop_footer_branch
                  %399 = sbr.rel target = $region72
                $region77: #{decoder_forward.23} parent=62 // loop_exit
                  _
              $region63: #{decoder_forward.23} parent=47 // pred_fallthru
                _
            $region48: #{decoder_forward.23} parent=43 // pred_fallthru
              _
            // Predicated region
            $region49: #{decoder_forward.23} parent=43 // pred_check
              _
            $region50: #{decoder_forward.23} parent=43 // pred_check_branch
              %372 = sbr.rel (0) target = $region52
            $region51: #{decoder_forward.23} parent=43 // pred_region
              %s374 = ssub.s32 16, 1
              loop: start=0, step=1, limit=1
              $region53: #{decoder_forward.23} parent=51 // loop_pre_header
                _
              $region54: #{decoder_forward.23} parent=51 // loop_header
                %s376 = sphi 0, %s380
                %p377 = scmp.ge.s32.totalorder %s376, 1
                %s381 = sphi %s358, %s358
                %s382 = sphi %s366, %s366
              $region55: #{decoder_forward.23} parent=51 // loop_header_branch
                %379 = sbr.rel (%p377) target = $region59
              $region56: #{decoder_forward.23} parent=51 // loop_body
                %v383 = vld [vmem:[%s381] sm:%s374]
                %384 = vst [vmem:[%s382] sm:%s374] %v383
                %v385 = vld [vmem:[%s381 + $0x4] sm:%s374]
                %386 = vst [vmem:[%s382 + $0xc] sm:%s374] %v385
              $region57: #{decoder_forward.23} parent=51 // loop_footer
                %s380 = sadd.s32 1, %s376
              $region58: #{decoder_forward.23} parent=51 // loop_footer_branch
                %375 = sbr.rel target = $region54
              $region59: #{decoder_forward.23} parent=51 // loop_exit
                _
            $region52: #{decoder_forward.23} parent=43 // pred_fallthru
              _
          $region44: #{decoder_forward.23} parent=39 // pred_fallthru
            _
          %411 = vnop
        $region40: #{decoder_forward.23} parent=31 // pred_fallthru
          _
      $region32: #{decoder_forward.23} parent=5 // pred_fallthru
        _
      %p412 = scmp.le.s32.totalorder 2, %s12
      // Predicated region
      $region78: #{decoder_forward.23} parent=5 // pred_check
        %p413 = pneg %p412
      $region79: #{decoder_forward.23} parent=5 // pred_check_branch
        %415 = sbr.rel (%p413) target = $region81
      $region80: #{decoder_forward.23} parent=5 // pred_region
        %s416 = ssub.s32 %s12, 2
        // Predicated region
        $region82: #{decoder_forward.23} parent=80 // pred_check
          %p417 = pneg %p144
        $region83: #{decoder_forward.23} parent=80 // pred_check_branch
          %419 = sbr.rel (%p417) target = $region85
        $region84: #{decoder_forward.23} parent=80 // pred_region
          %s420 = sand.u32 %s129, 1
          %s421 = sand.u32 %s129, 1
          %s422 = smul.addr %s421, 8
          %s423 = scalar_lea.vmem [#allocation4], %s422
        $region85: #{decoder_forward.23} parent=80 // pred_fallthru
          _
      $region81: #{decoder_forward.23} parent=5 // pred_fallthru
        _
    $region6: #{decoder_forward.23} parent=1 // loop_footer
      %s16 = sadd.s32 1, %s12
    $region7: #{decoder_forward.23} parent=1 // loop_footer_branch
      %11 = sbr.rel target = $region3
    $region8: #{decoder_forward.23} parent=1 // loop_exit
      _
    %424 = vsyncpa [#allocation3], 1
    %s425 = scalar_lea.sflag [#allocation3], 1
    %426 = vsyncpa %s425, 1

// kernel: decoder_forward.24
$region0: #{decoder_forward.24}
  #allocation0 [shape = 'u32[]', space=smem, size = 0x4, offset = 0x4, fixed_abs, tag = 'smem constant byte address 0x4 - core index']
  #allocation1 [shape = 'u32[72,128]{1,0:T(1,128)}', space=vmem, size = 0x9000, scoped, tag = 'internal scratch']
  %s0 = inlined_call_operand.vmem [shape: bf16[2,8,384], index: 0, kind: input, shape index: {}, may-alias: {0,1,2}]
  %s1 = inlined_call_operand.vmem [shape: bf16[2,8,384], index: 1, kind: input, shape index: {}, may-alias: {0,1,2}]
  %s2 = inlined_call_operand.vmem [shape: bf16[2,8,384], index: 2, kind: input, shape index: {}, may-alias: {0,1,2}]
  %s3 = inlined_call_operand.vmem [shape: f32[2,1,8], index: 3, kind: input, shape index: {}]
  %s4 = inlined_call_operand.vmem [shape: bf16[2,8,128], index: 4, kind: output, shape index: {}]
  %s5 = sld [smem:[#allocation0]]
  $region49: #{decoder_forward.24} parent=0
    _
  %s7 = ssub.s32 1, %s5
  %s8 = scalar_select 0, %s7, %s5
  loop: start=0, step=1, limit=4
  $region2: #{decoder_forward.24} parent=0 // loop_pre_header
    _
  $region3: #{decoder_forward.24} parent=0 // loop_header
    %s10 = sphi 0, %s14
    %p11 = scmp.ge.s32.totalorder %s10, 4
    %s17 = sphi 0, %s29
    %s18 = sphi 0, %s25
    %s19 = sphi 0, %s17
    %s20 = sphi 0, %s18
    %s21 = sphi 0, %s19
    %s22 = sphi 0, %s20
    %s34 = sphi 0, %s36
    %s37 = sphi 0, %s34
    %s38 = sphi 0, %s37
    %s54 = sphi 0, %s38
    %s60 = sphi 0, %s62
    %s63 = sphi 0, %s60
    %s64 = sphi 0, %s63
    %s80 = sphi 0, %s64
    %s86 = sphi 0, %s88
    %s89 = sphi 0, %s86
    %s90 = sphi 0, %s89
    %s106 = sphi 0, %s90
    %s112 = sphi 0, %s114
    %s115 = sphi 0, %s112
    %s116 = sphi 0, %s115
    %s132 = sphi 0, %s116
    %s140 = sphi 0, %s142
    %s143 = sphi 0, %s140
    %s144 = sphi 0, %s143
    %s160 = sphi 0, %s144
  $region4: #{decoder_forward.24} parent=0 // loop_header_branch
    %13 = sbr.rel (%p11) target = $region8
  $region5: #{decoder_forward.24} parent=0 // loop_body
    %s15 = ssub.s32 %s10, 1
    %s16 = ssub.s32 %s10, 2
    %s23 = sadd.s32 1, %s18
    %p24 = scmp.ge.s32.totalorder %s23, 1
    %s25 = scalar_select %p24, 0, %s23
    %s26 = sadd.s32 1, %s17
    %s27 = scalar_select %p24, %s26, %s17
    %p28 = scmp.ge.s32.totalorder %s27, 2
    %s29 = scalar_select %p28, 0, %s27
    %s30 = ssub.s32 %s17, %s29
    %s31 = ssub.s32 %s18, %s25
    %s32 = sor.u32 %s30, %s31
    %p33 = scmp.eq.s32.totalorder %s32, 0
    %s35 = sadd.s32 %s34, 1
    %s36 = scalar_select %p33, %s34, %s35
    %p39 = pneg %p33
    %p40 = scmp.eq.s32.totalorder %s10, 1
    %p41 = por %p39, %p40
    %p42 = scmp.ne.s32.totalorder %s34, %s37
    %p43 = scmp.eq.s32.totalorder %s10, 0
    %p44 = por %p42, %p43
    %p45 = scmp.ne.s32.totalorder %s34, %s37
    %p46 = scmp.eq.s32.totalorder %s15, 1
    %p47 = por %p45, %p46
    %p48 = scmp.ne.s32.totalorder %s37, %s38
    %p49 = scmp.eq.s32.totalorder %s15, 0
    %p50 = por %p48, %p49
    %p51 = scmp.ne.s32.totalorder %s37, %s38
    %p52 = scmp.eq.s32.totalorder %s16, 1
    %p53 = por %p51, %p52
    %p55 = scmp.ne.s32.totalorder %s38, %s54
    %p56 = scmp.eq.s32.totalorder %s16, 0
    %p57 = por %p55, %p56
    %s58 = ssub.s32 %s17, %s29
    %p59 = scmp.eq.s32.totalorder %s58, 0
    %s61 = sadd.s32 %s60, 1
    %s62 = scalar_select %p59, %s60, %s61
    %p65 = pneg %p59
    %p66 = scmp.eq.s32.totalorder %s10, 1
    %p67 = por %p65, %p66
    %p68 = scmp.ne.s32.totalorder %s60, %s63
    %p69 = scmp.eq.s32.totalorder %s10, 0
    %p70 = por %p68, %p69
    %p71 = scmp.ne.s32.totalorder %s60, %s63
    %p72 = scmp.eq.s32.totalorder %s15, 1
    %p73 = por %p71, %p72
    %p74 = scmp.ne.s32.totalorder %s63, %s64
    %p75 = scmp.eq.s32.totalorder %s15, 0
    %p76 = por %p74, %p75
    %p77 = scmp.ne.s32.totalorder %s63, %s64
    %p78 = scmp.eq.s32.totalorder %s16, 1
    %p79 = por %p77, %p78
    %p81 = scmp.ne.s32.totalorder %s64, %s80
    %p82 = scmp.eq.s32.totalorder %s16, 0
    %p83 = por %p81, %p82
    %s84 = ssub.s32 %s17, %s29
    %p85 = scmp.eq.s32.totalorder %s84, 0
    %s87 = sadd.s32 %s86, 1
    %s88 = scalar_select %p85, %s86, %s87
    %p91 = pneg %p85
    %p92 = scmp.eq.s32.totalorder %s10, 1
    %p93 = por %p91, %p92
    %p94 = scmp.ne.s32.totalorder %s86, %s89
    %p95 = scmp.eq.s32.totalorder %s10, 0
    %p96 = por %p94, %p95
    %p97 = scmp.ne.s32.totalorder %s86, %s89
    %p98 = scmp.eq.s32.totalorder %s15, 1
    %p99 = por %p97, %p98
    %p100 = scmp.ne.s32.totalorder %s89, %s90
    %p101 = scmp.eq.s32.totalorder %s15, 0
    %p102 = por %p100, %p101
    %p103 = scmp.ne.s32.totalorder %s89, %s90
    %p104 = scmp.eq.s32.totalorder %s16, 1
    %p105 = por %p103, %p104
    %p107 = scmp.ne.s32.totalorder %s90, %s106
    %p108 = scmp.eq.s32.totalorder %s16, 0
    %p109 = por %p107, %p108
    %s110 = ssub.s32 %s17, %s29
    %p111 = scmp.eq.s32.totalorder %s110, 0
    %s113 = sadd.s32 %s112, 1
    %s114 = scalar_select %p111, %s112, %s113
    %p117 = pneg %p111
    %p118 = scmp.eq.s32.totalorder %s10, 1
    %p119 = por %p117, %p118
    %p120 = scmp.ne.s32.totalorder %s112, %s115
    %p121 = scmp.eq.s32.totalorder %s10, 0
    %p122 = por %p120, %p121
    %p123 = scmp.ne.s32.totalorder %s112, %s115
    %p124 = scmp.eq.s32.totalorder %s15, 1
    %p125 = por %p123, %p124
    %p126 = scmp.ne.s32.totalorder %s115, %s116
    %p127 = scmp.eq.s32.totalorder %s15, 0
    %p128 = por %p126, %p127
    %p129 = scmp.ne.s32.totalorder %s115, %s116
    %p130 = scmp.eq.s32.totalorder %s16, 1
    %p131 = por %p129, %p130
    %p133 = scmp.ne.s32.totalorder %s116, %s132
    %p134 = scmp.eq.s32.totalorder %s16, 0
    %p135 = por %p133, %p134
    %s136 = ssub.s32 %s17, %s29
    %s137 = ssub.s32 %s18, %s25
    %s138 = sor.u32 %s136, %s137
    %p139 = scmp.eq.s32.totalorder %s138, 0
    %s141 = sadd.s32 %s140, 1
    %s142 = scalar_select %p139, %s140, %s141
    %p145 = pneg %p139
    %p146 = scmp.eq.s32.totalorder %s10, 1
    %p147 = por %p145, %p146
    %p148 = scmp.ne.s32.totalorder %s140, %s143
    %p149 = scmp.eq.s32.totalorder %s10, 0
    %p150 = por %p148, %p149
    %p151 = scmp.ne.s32.totalorder %s140, %s143
    %p152 = scmp.eq.s32.totalorder %s15, 1
    %p153 = por %p151, %p152
    %p154 = scmp.ne.s32.totalorder %s143, %s144
    %p155 = scmp.eq.s32.totalorder %s15, 0
    %p156 = por %p154, %p155
    %p157 = scmp.ne.s32.totalorder %s143, %s144
    %p158 = scmp.eq.s32.totalorder %s16, 1
    %p159 = por %p157, %p158
    %p161 = scmp.ne.s32.totalorder %s144, %s160
    %p162 = scmp.eq.s32.totalorder %s16, 0
    %p163 = por %p161, %p162
    %p164 = scmp.le.s32.totalorder 1, %s10
    %p165 = scmp.lt.s32.totalorder %s10, 3
    %p166 = pnand %p164, %p165
    %p167 = pneg %p166
    // Predicated region
    $region9: #{decoder_forward.24} parent=5 // pred_check
      _
    $region10: #{decoder_forward.24} parent=5 // pred_check_branch
      %169 = sbr.rel (%p166) target = $region12
    $region11: #{decoder_forward.24} parent=5 // pred_region
      %s170 = ssub.s32 %s10, 1
    $region12: #{decoder_forward.24} parent=5 // pred_fallthru
      _
    %p171 = scmp.lt.s32.totalorder %s10, 2
    // Predicated region
    $region13: #{decoder_forward.24} parent=5 // pred_check
      %p172 = pneg %p171
    $region14: #{decoder_forward.24} parent=5 // pred_check_branch
      %174 = sbr.rel (%p172) target = $region16
    $region15: #{decoder_forward.24} parent=5 // pred_region
      // Predicated region
      $region17: #{decoder_forward.24} parent=15 // pred_check
        %p175 = pneg %p44
      $region18: #{decoder_forward.24} parent=15 // pred_check_branch
        %177 = sbr.rel (%p175) target = $region20
      $region19: #{decoder_forward.24} parent=15 // pred_region
        %p178 = scmp.lt.s32.totalorder %s17, 1
        %s179 = scalar_select %p178, %s17, 1
        %p180 = scmp.lt.s32.totalorder %s18, 0
        %s181 = scalar_select %p180, %s18, 0
        %s182 = smul.addr %s181, 3
        %s183 = smul.addr %s179, 3
        %s184 = sadd.s32 %s182, %s183
        %s185 = smul.addr %s184, 4
        %s186 = scalar_lea.vmem %s0, %s185
      $region20: #{decoder_forward.24} parent=15 // pred_fallthru
        _
      // Predicated region
      $region21: #{decoder_forward.24} parent=15 // pred_check
        %p187 = pneg %p70
      $region22: #{decoder_forward.24} parent=15 // pred_check_branch
        %189 = sbr.rel (%p187) target = $region24
      $region23: #{decoder_forward.24} parent=15 // pred_region
        %p190 = scmp.lt.s32.totalorder %s17, 1
        %s191 = scalar_select %p190, %s17, 1
        %s192 = smul.addr %s191, 3
        %s193 = sadd.s32 1, %s192
        %s194 = smul.addr %s193, 4
        %s195 = scalar_lea.vmem %s1, %s194
      $region24: #{decoder_forward.24} parent=15 // pred_fallthru
        _
      // Predicated region
      $region25: #{decoder_forward.24} parent=15 // pred_check
        %p196 = pneg %p96
      $region26: #{decoder_forward.24} parent=15 // pred_check_branch
        %198 = sbr.rel (%p196) target = $region28
      $region27: #{decoder_forward.24} parent=15 // pred_region
        %p199 = scmp.lt.s32.totalorder %s17, 1
        %s200 = scalar_select %p199, %s17, 1
        %s201 = smul.addr %s200, 3
        %s202 = sadd.s32 2, %s201
        %s203 = smul.addr %s202, 4
        %s204 = scalar_lea.vmem %s2, %s203
      $region28: #{decoder_forward.24} parent=15 // pred_fallthru
        _
      // Predicated region
      $region29: #{decoder_forward.24} parent=15 // pred_check
        %p205 = pneg %p122
      $region30: #{decoder_forward.24} parent=15 // pred_check_branch
        %207 = sbr.rel (%p205) target = $region32
      $region31: #{decoder_forward.24} parent=15 // pred_region
        %p208 = scmp.lt.s32.totalorder %s17, 1
        %s209 = scalar_select %p208, %s17, 1
        %s210 = scalar_lea.vmem %s3, %s209
      $region32: #{decoder_forward.24} parent=15 // pred_fallthru
        _
    $region16: #{decoder_forward.24} parent=5 // pred_fallthru
      _
    %p211 = scmp.le.s32.totalorder 1, %s10
    %p212 = scmp.lt.s32.totalorder %s10, 3
    %p213 = pnand %p211, %p212
    %p214 = pneg %p213
    // Predicated region
    $region33: #{decoder_forward.24} parent=5 // pred_check
      _
    $region34: #{decoder_forward.24} parent=5 // pred_check_branch
      %216 = sbr.rel (%p213) target = $region36
    $region35: #{decoder_forward.24} parent=5 // pred_region
      %s217 = ssub.s32 %s10, 1
      %p218 = scmp.lt.s32.totalorder %s19, 1
      %s219 = scalar_select %p218, %s19, 1
      %p220 = scmp.lt.s32.totalorder %s20, 0
      %s221 = scalar_select %p220, %s20, 0
      %s222 = smul.addr %s221, 3
      %s223 = smul.addr %s219, 3
      %s224 = sadd.s32 %s222, %s223
      %s225 = smul.addr %s224, 4
      %s226 = scalar_lea.vmem %s0, %s225
      %p227 = pneg %p50
      %p228 = pneg %p47
      %p229 = scmp.lt.s32.totalorder %s19, 1
      %s230 = scalar_select %p229, %s19, 1
      %s231 = smul.addr %s230, 3
      %s232 = sadd.s32 1, %s231
      %s233 = smul.addr %s232, 4
      %s234 = scalar_lea.vmem %s1, %s233
      %p235 = pneg %p76
      %p236 = pneg %p73
      %p237 = scmp.lt.s32.totalorder %s19, 1
      %s238 = scalar_select %p237, %s19, 1
      %s239 = smul.addr %s238, 3
      %s240 = sadd.s32 2, %s239
      %s241 = smul.addr %s240, 4
      %s242 = scalar_lea.vmem %s2, %s241
      %p243 = pneg %p102
      %p244 = pneg %p99
      %p245 = scmp.lt.s32.totalorder %s19, 1
      %s246 = scalar_select %p245, %s19, 1
      %s247 = scalar_lea.vmem %s3, %s246
      %p248 = pneg %p128
      %p249 = pneg %p125
      %p250 = pneg %p156
      %p251 = pneg %p153
      %p252 = scmp.lt.s32.totalorder %s19, 1
      %s253 = scalar_select %p252, %s19, 1
      %p254 = scmp.lt.s32.totalorder %s20, 0
      %s255 = scalar_select %p254, %s20, 0
      %s256 = sadd.s32 %s255, %s253
      %s257 = smul.addr %s256, 4
      %s258 = scalar_lea.vmem %s4, %s257
      %p259 = scmp.lt.s32.totalorder %s19, 1
      %s260 = scalar_select %p259, %s19, 1
      %p261 = scmp.lt.s32.totalorder %s20, 0
      %s262 = scalar_select %p261, %s20, 0
      %s263 = smul.addr %s262, 3
      %s264 = smul.addr %s260, 3
      %s265 = sadd.s32 %s263, %s264
      %s266 = smul.addr %s265, 4
      %s267 = scalar_lea.vmem %s0, %s266
      %p268 = scmp.lt.s32.totalorder %s19, 1
      %s269 = scalar_select %p268, %s19, 1
      %s270 = smul.addr %s269, 3
      %s271 = sadd.s32 1, %s270
      %s272 = smul.addr %s271, 4
      %s273 = scalar_lea.vmem %s1, %s272
      %p274 = scmp.lt.s32.totalorder %s19, 1
      %s275 = scalar_select %p274, %s19, 1
      %s276 = smul.addr %s275, 3
      %s277 = sadd.s32 2, %s276
      %s278 = smul.addr %s277, 4
      %s279 = scalar_lea.vmem %s2, %s278
      %p280 = scmp.lt.s32.totalorder %s19, 1
      %s281 = scalar_select %p280, %s19, 1
      %s282 = scalar_lea.vmem %s3, %s281
      %p283 = scmp.lt.s32.totalorder %s19, 1
      %s284 = scalar_select %p283, %s19, 1
      %p285 = scmp.lt.s32.totalorder %s20, 0
      %s286 = scalar_select %p285, %s20, 0
      %s287 = sadd.s32 %s286, %s284
      %s288 = smul.addr %s287, 4
      %s289 = scalar_lea.vmem %s4, %s288
      %v291 = vld [vmem:[%s282] sm:$0x1]
      %s292 = smul.u32 %s20, 8
      %v293 = vlaneseq
      %v294 = vshrl.u32 %v293, 7
      %v295 = vstv %s292
      %v296 = vadd.s32 %v295, %v294
      %v297 = vlaneseq
      %v298 = vand.u32 %v297, 127
      %vm299 = vcmp.gt.s32.totalorder %v298, %v296
      %v300 = vsel %vm299, -1e+30, 0.0
      %v302 = vperm.slane %v291, 0
      %v304 = vadd.f32 %v300, %v302
      %v305 = vld [vmem:[%s267] sm:$0xf]
      %v306 = vunpack.c.l.bf16 %v305
      %v307 = vmul.f32 %v306, 0.17675781
      %v308 = vpack.c.bf16 %v307, %v307
      %v309 = vld [vmem:[%s273] sm:$0xf]
      %v310 = vld [vmem:[%s279] sm:$0xf]
      %vm311 = vcmask 261120
      %v313 = vsel %vm311, %v308, 0
      %v316 = vsel %vm311, %v309, 0
      %318 = vmatpush.bf16.xpose.msra.mxu0 0
      %319 = vmatpush.bf16.xpose.msra.mxu0 0
      %320 = vmatpush.bf16.xpose.msra.mxu0 0
      %321 = vmatpush.bf16.xpose.msra.mxu0 0
      %322 = vmatpush.bf16.xpose.msra.mxu0 0
      %323 = vmatpush.bf16.xpose.msra.mxu0 0
      %324 = vmatpush.bf16.xpose.msra.mxu0 0
      %325 = vmatpush.bf16.xpose.msra.mxu0 %v316
      %326 = vmatmul.bf16.gmra.mxu0 %v313
      %v327 = vpop.f32.mrf.mxu0
      %v328 = vadd.f32 %v304, %v327
      %v329 = vpop.f32.mrf.mxu0
      %330 = vdwg.mxu0
      %vm331 = vcmask 64512
      %v332 = vsel %vm331, %v328, -inf
      %333 = vmax.xlane.f32.xlu0 %v332
      %v334 = vpop.xlane.xlu0 %333
      %v335 = vsub.f32 %v328, %v334
      %v336 = vmul.f32 %v335, 1.442695
      %v337 = vpow.pop %v336
      %v338 = vsel %vm331, %v337, 0.0
      %339 = vadd.xlane.f32.xlu0 %v338
      %v340 = vpop.xlane.xlu0 %339
      %v341 = vrcp.pop %v340
      %v342 = vmul.f32 %v337, %v341
      %v343 = vpack.c.bf16 %v342, %v342
      %v345 = vsel %vm331, %v343, 0
      %vm347 = vcmask 1043456
      %v349 = vsel %vm347, %v310, 0
      %351 = vmatpush.bf16.msra.mxu0 0
      %352 = vmatpush.bf16.msra.mxu0 0
      %353 = vmatpush.bf16.msra.mxu0 0
      %354 = vmatpush.bf16.msra.mxu0 0
      %355 = vmatpush.bf16.msra.mxu0 0
      %356 = vmatpush.bf16.msra.mxu0 0
      %357 = vmatpush.bf16.msra.mxu0 0
      %358 = vmatpush.bf16.msra.mxu0 %v349
      %359 = vmatmul.bf16.gmra.mxu0 %v345
      %v360 = vpop.f32.mrf.mxu0
      %v361 = vadd.f32 0.0, %v360
      %v362 = vpop.f32.mrf.mxu0
      %363 = vdwg.mxu0
      %v364 = vpack.c.bf16 %v361, %v361
      %vm365 = vcmask 257024
      %366 = vst.msk [vmem:[%s289] sm:$0xf] %vm365, %v364
      %v367 = vld [vmem:[%s267] sm:$0xf]
      %v368 = vunpack.c.l.bf16 %v367
      %v369 = vmul.f32 %v368, 0.17675781
      %v370 = vpack.c.bf16 %v369, %v369
      %v371 = vld [vmem:[%s273] sm:$0xf]
      %v372 = vld [vmem:[%s279] sm:$0xf]
      %374 = vrot.lane.b32.xlu0 %v370, 96
      %v375 = vpop.permute.xlu0 %374
      %v377 = vunpack.c.l.b16 %v371
      %v378 = vpack.c.b16 %v377, %v377
      %379 = vrot.lane.b32.xlu0 %v378, 96
      %v380 = vpop.permute.xlu0 %379
      %v382 = vsel %vm311, %v375, 0
      %v385 = vsel %vm311, %v380, 0
      %387 = vmatpush.bf16.xpose.msra.mxu0 0
      %388 = vmatpush.bf16.xpose.msra.mxu0 0
      %389 = vmatpush.bf16.xpose.msra.mxu0 0
      %390 = vmatpush.bf16.xpose.msra.mxu0 0
      %391 = vmatpush.bf16.xpose.msra.mxu0 0
      %392 = vmatpush.bf16.xpose.msra.mxu0 0
      %393 = vmatpush.bf16.xpose.msra.mxu0 0
      %394 = vmatpush.bf16.xpose.msra.mxu0 %v385
      %395 = vmatmul.bf16.gmra.mxu0 %v382
      %v396 = vpop.f32.mrf.mxu0
      %v397 = vadd.f32 %v304, %v396
      %v398 = vpop.f32.mrf.mxu0
      %399 = vdwg.mxu0
      %v400 = vsel %vm331, %v397, -inf
      %401 = vmax.xlane.f32.xlu0 %v400
      %v402 = vpop.xlane.xlu0 %401
      %v403 = vsub.f32 %v397, %v402
      %v404 = vmul.f32 %v403, 1.442695
      %v405 = vpow.pop %v404
      %v406 = vsel %vm331, %v405, 0.0
      %407 = vadd.xlane.f32.xlu0 %v406
      %v408 = vpop.xlane.xlu0 %407
      %v409 = vrcp.pop %v408
      %v410 = vmul.f32 %v405, %v409
      %v411 = vpack.c.bf16 %v410, %v410
      %v413 = vunpack.c.l.b16 %v372
      %v414 = vpack.c.b16 %v413, %v413
      %415 = vrot.lane.b32.xlu0 %v414, 96
      %v416 = vpop.permute.xlu0 %415
      %v418 = vsel %vm331, %v411, 0
      %v421 = vsel %vm347, %v416, 0
      %423 = vmatpush.bf16.msra.mxu0 0
      %424 = vmatpush.bf16.msra.mxu0 0
      %425 = vmatpush.bf16.msra.mxu0 0
      %426 = vmatpush.bf16.msra.mxu0 0
      %427 = vmatpush.bf16.msra.mxu0 0
      %428 = vmatpush.bf16.msra.mxu0 0
      %429 = vmatpush.bf16.msra.mxu0 0
      %430 = vmatpush.bf16.msra.mxu0 %v421
      %431 = vmatmul.bf16.gmra.mxu0 %v418
      %v432 = vpop.f32.mrf.mxu0
      %v433 = vadd.f32 0.0, %v432
      %v434 = vpop.f32.mrf.mxu0
      %435 = vdwg.mxu0
      %v436 = vpack.c.bf16 %v433, %v433
      %438 = vrot.lane.b32.xlu0 %v436, 32
      %v439 = vpop.permute.xlu0 %438
      %vm441 = vcmask 519424
      %442 = vst.msk [vmem:[%s289] sm:$0xf] %vm441, %v439
      %v443 = vld [vmem:[%s267] sm:$0xf]
      %v444 = vunpack.c.l.bf16 %v443
      %v445 = vmul.f32 %v444, 0.17675781
      %v446 = vpack.c.bf16 %v445, %v445
      %v447 = vld [vmem:[%s273] sm:$0xf]
      %v448 = vld [vmem:[%s279] sm:$0xf]
      %450 = vrot.lane.b32.xlu0 %v446, 64
      %v451 = vpop.permute.xlu0 %450
      %v453 = vunpack.c.l.b16 %v447
      %v454 = vpack.c.b16 %v453, %v453
      %455 = vrot.lane.b32.xlu0 %v454, 64
      %v456 = vpop.permute.xlu0 %455
      %v458 = vsel %vm311, %v451, 0
      %v461 = vsel %vm311, %v456, 0
      %463 = vmatpush.bf16.xpose.msra.mxu0 0
      %464 = vmatpush.bf16.xpose.msra.mxu0 0
      %465 = vmatpush.bf16.xpose.msra.mxu0 0
      %466 = vmatpush.bf16.xpose.msra.mxu0 0
      %467 = vmatpush.bf16.xpose.msra.mxu0 0
      %468 = vmatpush.bf16.xpose.msra.mxu0 0
      %469 = vmatpush.bf16.xpose.msra.mxu0 0
      %470 = vmatpush.bf16.xpose.msra.mxu0 %v461
      %471 = vmatmul.bf16.gmra.mxu0 %v458
      %v472 = vpop.f32.mrf.mxu0
      %v473 = vadd.f32 %v304, %v472
      %v474 = vpop.f32.mrf.mxu0
      %475 = vdwg.mxu0
      %v476 = vsel %vm331, %v473, -inf
      %477 = vmax.xlane.f32.xlu0 %v476
      %v478 = vpop.xlane.xlu0 %477
      %v479 = vsub.f32 %v473, %v478
      %v480 = vmul.f32 %v479, 1.442695
      %v481 = vpow.pop %v480
      %v482 = vsel %vm331, %v481, 0.0
      %483 = vadd.xlane.f32.xlu0 %v482
      %v484 = vpop.xlane.xlu0 %483
      %v485 = vrcp.pop %v484
      %v486 = vmul.f32 %v481, %v485
      %v487 = vpack.c.bf16 %v486, %v486
      %v489 = vunpack.c.l.b16 %v448
      %v490 = vpack.c.b16 %v489, %v489
      %491 = vrot.lane.b32.xlu0 %v490, 64
      %v492 = vpop.permute.xlu0 %491
      %v494 = vsel %vm331, %v487, 0
      %v497 = vsel %vm347, %v492, 0
      %499 = vmatpush.bf16.msra.mxu0 0
      %500 = vmatpush.bf16.msra.mxu0 0
      %501 = vmatpush.bf16.msra.mxu0 0
      %502 = vmatpush.bf16.msra.mxu0 0
      %503 = vmatpush.bf16.msra.mxu0 0
      %504 = vmatpush.bf16.msra.mxu0 0
      %505 = vmatpush.bf16.msra.mxu0 0
      %506 = vmatpush.bf16.msra.mxu0 %v497
      %507 = vmatmul.bf16.gmra.mxu0 %v494
      %v508 = vpop.f32.mrf.mxu0
      %v509 = vadd.f32 0.0, %v508
      %v510 = vpop.f32.mrf.mxu0
      %511 = vdwg.mxu0
      %v512 = vpack.c.bf16 %v509, %v509
      %514 = vrot.lane.b32.xlu0 %v512, 64
      %v515 = vpop.permute.xlu0 %514
      %vm517 = vcmask 781824
      %518 = vst.msk [vmem:[%s289] sm:$0xf] %vm517, %v515
      %v519 = vld [vmem:[%s267] sm:$0xf]
      %v520 = vunpack.c.l.bf16 %v519
      %v521 = vmul.f32 %v520, 0.17675781
      %v522 = vpack.c.bf16 %v521, %v521
      %v523 = vld [vmem:[%s273] sm:$0xf]
      %v524 = vld [vmem:[%s279] sm:$0xf]
      %526 = vrot.lane.b32.xlu0 %v522, 32
      %v527 = vpop.permute.xlu0 %526
      %v529 = vunpack.c.l.b16 %v523
      %v530 = vpack.c.b16 %v529, %v529
      %531 = vrot.lane.b32.xlu0 %v530, 32
      %v532 = vpop.permute.xlu0 %531
      %v534 = vsel %vm311, %v527, 0
      %v537 = vsel %vm311, %v532, 0
      %539 = vmatpush.bf16.xpose.msra.mxu0 0
      %540 = vmatpush.bf16.xpose.msra.mxu0 0
      %541 = vmatpush.bf16.xpose.msra.mxu0 0
      %542 = vmatpush.bf16.xpose.msra.mxu0 0
      %543 = vmatpush.bf16.xpose.msra.mxu0 0
      %544 = vmatpush.bf16.xpose.msra.mxu0 0
      %545 = vmatpush.bf16.xpose.msra.mxu0 0
      %546 = vmatpush.bf16.xpose.msra.mxu0 %v537
      %547 = vmatmul.bf16.gmra.mxu0 %v534
      %v548 = vpop.f32.mrf.mxu0
      %v549 = vadd.f32 %v304, %v548
      %v550 = vpop.f32.mrf.mxu0
      %551 = vdwg.mxu0
      %v552 = vsel %vm331, %v549, -inf
      %553 = vmax.xlane.f32.xlu0 %v552
      %v554 = vpop.xlane.xlu0 %553
      %v555 = vsub.f32 %v549, %v554
      %v556 = vmul.f32 %v555, 1.442695
      %v557 = vpow.pop %v556
      %v558 = vsel %vm331, %v557, 0.0
      %559 = vadd.xlane.f32.xlu0 %v558
      %v560 = vpop.xlane.xlu0 %559
      %v561 = vrcp.pop %v560
      %v562 = vmul.f32 %v557, %v561
      %v563 = vpack.c.bf16 %v562, %v562
      %v565 = vunpack.c.l.b16 %v524
      %v566 = vpack.c.b16 %v565, %v565
      %567 = vrot.lane.b32.xlu0 %v566, 32
      %v568 = vpop.permute.xlu0 %567
      %v570 = vsel %vm331, %v563, 0
      %v573 = vsel %vm347, %v568, 0
      %575 = vmatpush.bf16.msra.mxu0 0
      %576 = vmatpush.bf16.msra.mxu0 0
      %577 = vmatpush.bf16.msra.mxu0 0
      %578 = vmatpush.bf16.msra.mxu0 0
      %579 = vmatpush.bf16.msra.mxu0 0
      %580 = vmatpush.bf16.msra.mxu0 0
      %581 = vmatpush.bf16.msra.mxu0 0
      %582 = vmatpush.bf16.msra.mxu0 %v573
      %583 = vmatmul.bf16.gmra.mxu0 %v570
      %v584 = vpop.f32.mrf.mxu0
      %v585 = vadd.f32 0.0, %v584
      %v586 = vpop.f32.mrf.mxu0
      %587 = vdwg.mxu0
      %v588 = vpack.c.bf16 %v585, %v585
      %590 = vrot.lane.b32.xlu0 %v588, 96
      %v591 = vpop.permute.xlu0 %590
      %vm593 = vcmask 1044224
      %594 = vst.msk [vmem:[%s289] sm:$0xf] %vm593, %v591
      %p595 = scmp.lt.s32.totalorder %s19, 1
      %s596 = scalar_select %p595, %s19, 1
      %p597 = scmp.lt.s32.totalorder %s20, 0
      %s598 = scalar_select %p597, %s20, 0
      %s599 = sadd.s32 %s598, %s596
      %s600 = smul.addr %s599, 4
      %s601 = scalar_lea.vmem %s4, %s600
      // Predicated region
      $region37: #{decoder_forward.24} parent=35 // pred_check
        %p602 = pneg %p153
      $region38: #{decoder_forward.24} parent=35 // pred_check_branch
        %604 = sbr.rel (%p602) target = $region40
      $region39: #{decoder_forward.24} parent=35 // pred_region
        _
      $region40: #{decoder_forward.24} parent=35 // pred_fallthru
        _
    $region36: #{decoder_forward.24} parent=5 // pred_fallthru
      _
    %p605 = scmp.le.s32.totalorder 2, %s10
    // Predicated region
    $region41: #{decoder_forward.24} parent=5 // pred_check
      %p606 = pneg %p605
    $region42: #{decoder_forward.24} parent=5 // pred_check_branch
      %608 = sbr.rel (%p606) target = $region44
    $region43: #{decoder_forward.24} parent=5 // pred_region
      %s609 = ssub.s32 %s10, 2
      // Predicated region
      $region45: #{decoder_forward.24} parent=43 // pred_check
        %p610 = pneg %p159
      $region46: #{decoder_forward.24} parent=43 // pred_check_branch
        %612 = sbr.rel (%p610) target = $region48
      $region47: #{decoder_forward.24} parent=43 // pred_region
        %p613 = scmp.lt.s32.totalorder %s21, 1
        %s614 = scalar_select %p613, %s21, 1
        %p615 = scmp.lt.s32.totalorder %s22, 0
        %s616 = scalar_select %p615, %s22, 0
        %s617 = sadd.s32 %s616, %s614
        %s618 = smul.addr %s617, 4
        %s619 = scalar_lea.vmem %s4, %s618
      $region48: #{decoder_forward.24} parent=43 // pred_fallthru
        _
    $region44: #{decoder_forward.24} parent=5 // pred_fallthru
      _
  $region6: #{decoder_forward.24} parent=0 // loop_footer
    %s14 = sadd.s32 1, %s10
  $region7: #{decoder_forward.24} parent=0 // loop_footer_branch
    %9 = sbr.rel target = $region3
  $region8: #{decoder_forward.24} parent=0 // loop_exit
    _

// kernel: decoder_forward.25
$region0: #{decoder_forward.25}
  #allocation0 [shape = 'u32[]', space=smem, size = 0x4, offset = 0x4, fixed_abs, tag = 'smem constant byte address 0x4 - core index']
  #allocation1 [shape = 'u32[72,128]{1,0:T(1,128)}', space=vmem, size = 0x9000, scoped, tag = 'internal scratch']
  #allocation2 [shape = 'f32[16,128]{1,0:T(8,128)}', space=vmem, size = 0x2000, scoped, tag = 'scratch operand']
  %s0 = inlined_call_operand.vmem [shape: bf16[16,128], index: 0, kind: input, shape index: {}]
  %s1 = inlined_call_operand.vmem [shape: bf16[128,128], index: 1, kind: input, shape index: {}]
  %s2 = inlined_call_operand.vmem [shape: f32[1,128], index: 2, kind: input, shape index: {}]
  %s3 = inlined_call_operand.vmem [shape: bf16[16,128], index: 3, kind: input, shape index: {}]
  %s4 = inlined_call_operand.vmem [shape: f32[1,128], index: 4, kind: input, shape index: {}]
  %s5 = inlined_call_operand.vmem [shape: f32[1,128], index: 5, kind: input, shape index: {}]
  %s6 = inlined_call_operand.vmem [shape: bf16[16,128], index: 6, kind: output, shape index: {}]
  %s7 = sld [smem:[#allocation0]]
  $region42: #{decoder_forward.25} parent=0
    _
  %s9 = ssub.s32 1, %s7
  %s10 = scalar_select 0, %s9, %s7
  // Predicated region
  $region2: #{decoder_forward.25} parent=0 // pred_check
    _
  $region3: #{decoder_forward.25} parent=0 // pred_check_branch
    %12 = sbr.rel (0) target = $region5
  $region4: #{decoder_forward.25} parent=0 // pred_region
    _
  $region5: #{decoder_forward.25} parent=0 // pred_fallthru
    _
  // Predicated region
  $region6: #{decoder_forward.25} parent=0 // pred_check
    _
  $region7: #{decoder_forward.25} parent=0 // pred_check_branch
    %14 = sbr.rel (0) target = $region9
  $region8: #{decoder_forward.25} parent=0 // pred_region
    _
  $region9: #{decoder_forward.25} parent=0 // pred_fallthru
    _
  // Predicated region
  $region10: #{decoder_forward.25} parent=0 // pred_check
    _
  $region11: #{decoder_forward.25} parent=0 // pred_check_branch
    %16 = sbr.rel (0) target = $region13
  $region12: #{decoder_forward.25} parent=0 // pred_region
    _
  $region13: #{decoder_forward.25} parent=0 // pred_fallthru
    _
  // Predicated region
  $region14: #{decoder_forward.25} parent=0 // pred_check
    _
  $region15: #{decoder_forward.25} parent=0 // pred_check_branch
    %18 = sbr.rel (0) target = $region17
  $region16: #{decoder_forward.25} parent=0 // pred_region
    _
  $region17: #{decoder_forward.25} parent=0 // pred_fallthru
    _
  // Predicated region
  $region18: #{decoder_forward.25} parent=0 // pred_check
    _
  $region19: #{decoder_forward.25} parent=0 // pred_check_branch
    %20 = sbr.rel (0) target = $region21
  $region20: #{decoder_forward.25} parent=0 // pred_region
    _
  $region21: #{decoder_forward.25} parent=0 // pred_fallthru
    _
  // Predicated region
  $region22: #{decoder_forward.25} parent=0 // pred_check
    _
  $region23: #{decoder_forward.25} parent=0 // pred_check_branch
    %22 = sbr.rel (0) target = $region25
  $region24: #{decoder_forward.25} parent=0 // pred_region
    _
  $region25: #{decoder_forward.25} parent=0 // pred_fallthru
    _
  %p23 = scmp.eq.s32.totalorder 0, 0
  // Predicated region
  $region26: #{decoder_forward.25} parent=0 // pred_check
    %p24 = pneg %p23
  $region27: #{decoder_forward.25} parent=0 // pred_check_branch
    %26 = sbr.rel (%p24) target = $region29
  $region28: #{decoder_forward.25} parent=0 // pred_region
    %v27 = vld [vmem:[%s3] sm:$0xf]
    %v28 = vld [vmem:[%s3 + $0x4] sm:$0xf]
    %v29 = vunpack.c.l.bf16 %v27
    %v30 = vunpack.c.l.bf16 %v28
    %v31 = vld [vmem:[%s2] sm:$0x1]
    %v33 = vperm.slane %v31, 0
    %v35 = vadd.f32 %v29, %v33
    %v36 = vadd.f32 %v30, %v33
    %37 = vst [vmem:[#allocation2] sm:$0xff] %v35
    %38 = vst [vmem:[#allocation2 + $0x8] sm:$0xff] %v36
  $region29: #{decoder_forward.25} parent=0 // pred_fallthru
    _
  %v39 = vld [vmem:[#allocation2] sm:$0xff]
  %v40 = vld [vmem:[#allocation2 + $0x8] sm:$0xff]
  %v41 = vld [vmem:[%s0] sm:$0xf]
  %v42 = vld [vmem:[%s0 + $0x4] sm:$0xf]
  %v43 = vld [vmem:[%s1] sm:$0xf]
  %v44 = vld [vmem:[%s1 + $0x4] sm:$0xf]
  %v45 = vld [vmem:[%s1 + $0x8] sm:$0xf]
  %v46 = vld [vmem:[%s1 + $0xc] sm:$0xf]
  %v47 = vld [vmem:[%s1 + $0x10] sm:$0xf]
  %v48 = vld [vmem:[%s1 + $0x14] sm:$0xf]
  %v49 = vld [vmem:[%s1 + $0x18] sm:$0xf]
  %v50 = vld [vmem:[%s1 + $0x1c] sm:$0xf]
  %v51 = vld [vmem:[%s1 + $0x20] sm:$0xf]
  %v52 = vld [vmem:[%s1 + $0x24] sm:$0xf]
  %v53 = vld [vmem:[%s1 + $0x28] sm:$0xf]
  %v54 = vld [vmem:[%s1 + $0x2c] sm:$0xf]
  %v55 = vld [vmem:[%s1 + $0x30] sm:$0xf]
  %v56 = vld [vmem:[%s1 + $0x34] sm:$0xf]
  %v57 = vld [vmem:[%s1 + $0x38] sm:$0xf]
  %v58 = vld [vmem:[%s1 + $0x3c] sm:$0xf]
  %v61 = vunpack.c.l.b16 %v41
  %v62 = vunpack.c.l.b16 %v42
  %v63 = vpack.c.b16 %v62, %v61
  %v81 = vunpack.c.l.b16 %v43
  %v82 = vunpack.c.l.b16 %v44
  %v83 = vunpack.c.l.b16 %v45
  %v84 = vunpack.c.l.b16 %v46
  %v85 = vunpack.c.l.b16 %v47
  %v86 = vunpack.c.l.b16 %v48
  %v87 = vunpack.c.l.b16 %v49
  %v88 = vunpack.c.l.b16 %v50
  %v89 = vunpack.c.l.b16 %v51
  %v90 = vunpack.c.l.b16 %v52
  %v91 = vunpack.c.l.b16 %v53
  %v92 = vunpack.c.l.b16 %v54
  %v93 = vunpack.c.l.b16 %v55
  %v94 = vunpack.c.l.b16 %v56
  %v95 = vunpack.c.l.b16 %v57
  %v96 = vunpack.c.l.b16 %v58
  %v97 = vpack.c.b16 %v82, %v81
  %v98 = vpack.c.b16 %v84, %v83
  %v99 = vpack.c.b16 %v86, %v85
  %v100 = vpack.c.b16 %v88, %v87
  %v101 = vpack.c.b16 %v90, %v89
  %v102 = vpack.c.b16 %v92, %v91
  %v103 = vpack.c.b16 %v94, %v93
  %v104 = vpack.c.b16 %v96, %v95
  %113 = vmatpush.bf16.msra.mxu0 %v104
  %114 = vmatpush.bf16.msra.mxu0 %v103
  %115 = vmatpush.bf16.msra.mxu0 %v102
  %116 = vmatpush.bf16.msra.mxu0 %v101
  %117 = vmatpush.bf16.msra.mxu0 %v100
  %118 = vmatpush.bf16.msra.mxu0 %v99
  %119 = vmatpush.bf16.msra.mxu0 %v98
  %120 = vmatpush.bf16.msra.mxu0 %v97
  %121 = vmatmul.bf16.gmra.mxu0 %v63
  %v122 = vpop.f32.mrf.mxu0
  %v123 = vadd.f32 0.0, %v122
  %v124 = vpop.f32.mrf.mxu0
  %v125 = vadd.f32 0.0, %v124
  %126 = vdwg.mxu0
  %v127 = vadd.f32 %v39, %v123
  %v128 = vadd.f32 %v40, %v125
  %129 = vst [vmem:[#allocation2] sm:$0xff] %v127
  %130 = vst [vmem:[#allocation2 + $0x8] sm:$0xff] %v128
  // Predicated region
  $region30: #{decoder_forward.25} parent=0 // pred_check
    %p131 = pneg %p23
  $region31: #{decoder_forward.25} parent=0 // pred_check_branch
    %133 = sbr.rel (%p131) target = $region33
  $region32: #{decoder_forward.25} parent=0 // pred_region
    %v134 = vld [vmem:[#allocation2] sm:$0xff]
    %v135 = vld [vmem:[#allocation2 + $0x8] sm:$0xff]
    %136 = vadd.xlane.f32.xlu0 %v134
    %v137 = vpop.xlane.xlu0 %136
    %138 = vadd.xlane.f32.xlu0 %v135
    %v139 = vpop.xlane.xlu0 %138
    %v140 = vrcp.pop 128.0
    %v141 = vmul.f32 128.0, %v140
    %v142 = vsub.f32 1.0, %v141
    %v143 = vmul.f32 %v140, %v142
    %v144 = vadd.f32 %v140, %v143
    %vm145 = vweird.f32 %v140
    %v146 = vsel %vm145, %v140, %v144
    %v147 = vmul.f32 %v137, %v146
    %v148 = vmul.f32 %v139, %v146
    %v149 = vsub.f32 %v134, %v147
    %v150 = vsub.f32 %v135, %v148
    %v151 = vmul.f32 %v149, %v149
    %v152 = vmul.f32 %v150, %v150
    %153 = vadd.xlane.f32.xlu0 %v151
    %v154 = vpop.xlane.xlu0 %153
    %155 = vadd.xlane.f32.xlu0 %v152
    %v156 = vpop.xlane.xlu0 %155
    %v157 = vmul.f32 %v154, %v146
    %v158 = vmul.f32 %v156, %v146
    %v159 = vadd.f32 %v157, 1e-05
    %v160 = vadd.f32 %v158, 1e-05
    %v161 = vrsqrt.pop %v159
    %v162 = vmul.f32 %v161, %v159
    %v163 = vmul.f32 %v162, %v161
    %v164 = vmul.f32 0.5, %v163
    %v165 = vsub.f32 1.5, %v164
    %v166 = vmul.f32 %v161, %v165
    %vm167 = vweird.f32 %v159
    %vm168 = vweird.f32 %v161
    %vm169 = vmor %vm167, %vm168
    %v170 = vsel %vm169, %v161, %v166
    %v171 = vrsqrt.pop %v160
    %v172 = vmul.f32 %v171, %v160
    %v173 = vmul.f32 %v172, %v171
    %v174 = vmul.f32 0.5, %v173
    %v175 = vsub.f32 1.5, %v174
    %v176 = vmul.f32 %v171, %v175
    %vm177 = vweird.f32 %v160
    %vm178 = vweird.f32 %v171
    %vm179 = vmor %vm177, %vm178
    %v180 = vsel %vm179, %v171, %v176
    %v181 = vmul.f32 %v149, %v170
    %v182 = vmul.f32 %v150, %v180
    %v183 = vld [vmem:[%s4] sm:$0x1]
    %v185 = vperm.slane %v183, 0
    %v187 = vmul.f32 %v181, %v185
    %v188 = vmul.f32 %v182, %v185
    %v189 = vld [vmem:[%s5] sm:$0x1]
    %v191 = vperm.slane %v189, 0
    %v193 = vadd.f32 %v187, %v191
    %v194 = vadd.f32 %v188, %v191
    %v195 = vpack.c.bf16 %v193, %v193
    %v196 = vpack.c.bf16 %v194, %v194
    %197 = vst [vmem:[%s6] sm:$0xf] %v195
    %198 = vst [vmem:[%s6 + $0x4] sm:$0xf] %v196
  $region33: #{decoder_forward.25} parent=0 // pred_fallthru
    _
  // Predicated region
  $region34: #{decoder_forward.25} parent=0 // pred_check
    _
  $region35: #{decoder_forward.25} parent=0 // pred_check_branch
    %200 = sbr.rel (0) target = $region37
  $region36: #{decoder_forward.25} parent=0 // pred_region
    _
  $region37: #{decoder_forward.25} parent=0 // pred_fallthru
    _
  // Predicated region
  $region38: #{decoder_forward.25} parent=0 // pred_check
    _
  $region39: #{decoder_forward.25} parent=0 // pred_check_branch
    %202 = sbr.rel (0) target = $region41
  $region40: #{decoder_forward.25} parent=0 // pred_region
    _
  $region41: #{decoder_forward.25} parent=0 // pred_fallthru
    _

// kernel: decoder_forward.21
$region0: #{decoder_forward.21}
  #allocation0 [shape = 'u32[]', space=smem, size = 0x4, offset = 0x4, fixed_abs, tag = 'smem constant byte address 0x4 - core index']
  #allocation1 [shape = 'u32[72,128]{1,0:T(1,128)}', space=vmem, size = 0x9000, scoped, tag = 'internal scratch']
  %s0 = inlined_call_operand.vmem [shape: bf16[16,48], index: 0, kind: input, shape index: {}]
  %s1 = inlined_call_operand.vmem [shape: bf16[48,256], index: 1, kind: input, shape index: {}]
  %s2 = inlined_call_operand.vmem [shape: f32[1,256], index: 2, kind: input, shape index: {}]
  %s3 = inlined_call_operand.vmem [shape: bf16[16,256], index: 3, kind: output, shape index: {}]
  %s4 = sld [smem:[#allocation0]]
  $region22: #{decoder_forward.21} parent=0
    _
  %s6 = ssub.s32 1, %s4
  %s7 = scalar_select 0, %s6, %s4
  // Predicated region
  $region2: #{decoder_forward.21} parent=0 // pred_check
    _
  $region3: #{decoder_forward.21} parent=0 // pred_check_branch
    %9 = sbr.rel (0) target = $region5
  $region4: #{decoder_forward.21} parent=0 // pred_region
    _
  $region5: #{decoder_forward.21} parent=0 // pred_fallthru
    _
  // Predicated region
  $region6: #{decoder_forward.21} parent=0 // pred_check
    _
  $region7: #{decoder_forward.21} parent=0 // pred_check_branch
    %11 = sbr.rel (0) target = $region9
  $region8: #{decoder_forward.21} parent=0 // pred_region
    _
  $region9: #{decoder_forward.21} parent=0 // pred_fallthru
    _
  // Predicated region
  $region10: #{decoder_forward.21} parent=0 // pred_check
    _
  $region11: #{decoder_forward.21} parent=0 // pred_check_branch
    %13 = sbr.rel (0) target = $region13
  $region12: #{decoder_forward.21} parent=0 // pred_region
    _
  $region13: #{decoder_forward.21} parent=0 // pred_fallthru
    _
  %v15 = vld [vmem:[%s0] sm:$0xf]
  %v16 = vld [vmem:[%s0 + $0x4] sm:$0xf]
  %v17 = vld [vmem:[%s1] sm:$0xff]
  %v18 = vld [vmem:[%s1 + $0x8] sm:$0xff]
  %v19 = vld [vmem:[%s1 + $0x10] sm:$0xff]
  %v20 = vld [vmem:[%s1 + $0x18] sm:$0xff]
  %v21 = vld [vmem:[%s1 + $0x20] sm:$0xff]
  %v22 = vld [vmem:[%s1 + $0x28] sm:$0xff]
  %v23 = vld [vmem:[%s2] sm:$0x3]
  %v25 = vperm.slane %v23, 0
  %v26 = vperm.slane %v23, 1
  %v31 = vunpack.c.l.b16 %v15
  %v32 = vunpack.c.l.b16 %v16
  %v33 = vpack.c.b16 %v32, %v31
  %v40 = vunpack.c.l.b16 %v17
  %v41 = vunpack.c.h.b16 %v17
  %v42 = vunpack.c.l.b16 %v18
  %v43 = vunpack.c.h.b16 %v18
  %v44 = vunpack.c.l.b16 %v19
  %v45 = vunpack.c.h.b16 %v19
  %v46 = vunpack.c.l.b16 %v20
  %v47 = vunpack.c.h.b16 %v20
  %v48 = vunpack.c.l.b16 %v21
  %v49 = vunpack.c.h.b16 %v21
  %v50 = vunpack.c.l.b16 %v22
  %v51 = vunpack.c.h.b16 %v22
  %v52 = vpack.c.b16 %v42, %v40
  %v53 = vpack.c.b16 %v43, %v41
  %v54 = vpack.c.b16 %v46, %v44
  %v55 = vpack.c.b16 %v47, %v45
  %v56 = vpack.c.b16 %v50, %v48
  %v57 = vpack.c.b16 %v51, %v49
  %vm64 = vcmask 392192
  %v66 = vsel %vm64, %v33, 0
  %68 = vmatpush.bf16.msra.mxu0 0
  %69 = vmatpush.bf16.msra.mxu0 0
  %70 = vmatpush.bf16.msra.mxu0 0
  %71 = vmatpush.bf16.msra.mxu0 0
  %72 = vmatpush.bf16.msra.mxu0 0
  %73 = vmatpush.bf16.msra.mxu0 %v56
  %74 = vmatpush.bf16.msra.mxu0 %v54
  %75 = vmatpush.bf16.msra.mxu0 %v52
  %76 = vmatmul.bf16.gmra.mxu0 %v66
  %v77 = vpop.f32.mrf.mxu0
  %v78 = vadd.f32 %v25, %v77
  %v79 = vpop.f32.mrf.mxu0
  %v80 = vadd.f32 %v25, %v79
  %81 = vdwg.mxu0
  %82 = vmatpush.bf16.msra.mxu0 0
  %83 = vmatpush.bf16.msra.mxu0 0
  %84 = vmatpush.bf16.msra.mxu0 0
  %85 = vmatpush.bf16.msra.mxu0 0
  %86 = vmatpush.bf16.msra.mxu0 0
  %87 = vmatpush.bf16.msra.mxu0 %v57
  %88 = vmatpush.bf16.msra.mxu0 %v55
  %89 = vmatpush.bf16.msra.mxu0 %v53
  %90 = vmatmul.bf16.gmra.mxu0 %v66
  %v91 = vpop.f32.mrf.mxu0
  %v92 = vadd.f32 %v26, %v91
  %v93 = vpop.f32.mrf.mxu0
  %v94 = vadd.f32 %v26, %v93
  %95 = vdwg.mxu0
  %v96 = vmax.f32 %v78, 0.0
  %v97 = vmax.f32 %v92, 0.0
  %v98 = vmax.f32 %v80, 0.0
  %v99 = vmax.f32 %v94, 0.0
  %v100 = vpack.c.bf16 %v97, %v96
  %v101 = vpack.c.bf16 %v99, %v98
  %102 = vst [vmem:[%s3] sm:$0xff] %v100
  %103 = vst [vmem:[%s3 + $0x8] sm:$0xff] %v101
  // Predicated region
  $region14: #{decoder_forward.21} parent=0 // pred_check
    _
  $region15: #{decoder_forward.21} parent=0 // pred_check_branch
    %105 = sbr.rel (0) target = $region17
  $region16: #{decoder_forward.21} parent=0 // pred_region
    _
  $region17: #{decoder_forward.21} parent=0 // pred_fallthru
    _
  // Predicated region
  $region18: #{decoder_forward.21} parent=0 // pred_check
    _
  $region19: #{decoder_forward.21} parent=0 // pred_check_branch
    %107 = sbr.rel (0) target = $region21
  $region20: #{decoder_forward.21} parent=0 // pred_region
    _
  $region21: #{decoder_forward.21} parent=0 // pred_fallthru
    _

// kernel: decoder_forward.22
$region0: #{decoder_forward.22}
  #allocation0 [shape = 'u32[]', space=smem, size = 0x4, offset = 0x4, fixed_abs, tag = 'smem constant byte address 0x4 - core index']
  #allocation1 [shape = 'u32[72,128]{1,0:T(1,128)}', space=vmem, size = 0x9000, scoped, tag = 'internal scratch']
  %s0 = inlined_call_operand.vmem [shape: bf16[16,256], index: 0, kind: input, shape index: {}]
  %s1 = inlined_call_operand.hbm [shape: bf16[256,128], index: 1, kind: input, shape index: {}]
  %s2 = inlined_call_operand.vmem [shape: f32[1,128], index: 2, kind: input, shape index: {}]
  %s3 = inlined_call_operand.vmem [shape: bf16[16,128], index: 3, kind: output, shape index: {}]
  %s4 = sld [smem:[#allocation0]]
  $region26: #{decoder_forward.22} parent=0
    _
  %s6 = ssub.s32 1, %s4
  %s7 = scalar_select 0, %s6, %s4
  $region1: #{decoder_forward.22} parent=0
    #allocation2 [shape = 'u8[65536]{0}', space=vmem, size = 0x10000, scoped, tag = 'input window, operand 1, single buffered']
    #allocation3 [shape = 's32[1]{0}', space=sflag, size = 0x4, scoped, tag = 'scoped memory for decoder_forward.22']
    %8 = vsyncpa [#allocation3], 0
    // Predicated region
    $region2: #{decoder_forward.22} parent=1 // pred_check
      _
    $region3: #{decoder_forward.22} parent=1 // pred_check_branch
      %10 = sbr.rel (0) target = $region5
    $region4: #{decoder_forward.22} parent=1 // pred_region
      _
    $region5: #{decoder_forward.22} parent=1 // pred_fallthru
      _
    // Predicated region
    $region6: #{decoder_forward.22} parent=1 // pred_check
      _
    $region7: #{decoder_forward.22} parent=1 // pred_check_branch
      %12 = sbr.rel (0) target = $region9
    $region8: #{decoder_forward.22} parent=1 // pred_region
      %14 = vsyncadd [#allocation3], 0
      %s15 = sshll.u32 %s1, 4
      %s16 = int_to_ptr.hbm [resolvable:$true] %s15
      %s17 = sshll.u32 [#allocation2], 4
      %s18 = int_to_ptr.vmem [resolvable:$true] %s17
      %23 = dma.hbm_to_vmem [thread:$0]  %s16, 2048, %s18, [#allocation3], 64, 64, 4
    $region9: #{decoder_forward.22} parent=1 // pred_fallthru
      _
    // Predicated region
    $region10: #{decoder_forward.22} parent=1 // pred_check
      _
    $region11: #{decoder_forward.22} parent=1 // pred_check_branch
      %25 = sbr.rel (0) target = $region13
    $region12: #{decoder_forward.22} parent=1 // pred_region
      _
    $region13: #{decoder_forward.22} parent=1 // pred_fallthru
      _
    // Predicated region
    $region14: #{decoder_forward.22} parent=1 // pred_check
      _
    $region15: #{decoder_forward.22} parent=1 // pred_check_branch
      %27 = sbr.rel (0) target = $region17
    $region16: #{decoder_forward.22} parent=1 // pred_region
      %29 = dma.done [#allocation3], 2048
    $region17: #{decoder_forward.22} parent=1 // pred_fallthru
      _
    %v30 = vld [vmem:[%s0] sm:$0xff]
    %v31 = vld [vmem:[%s0 + $0x8] sm:$0xff]
    %v32 = vld [vmem:[#allocation2] sm:$0xf]
    %v33 = vld [vmem:[#allocation2 + $0x4] sm:$0xf]
    %v34 = vld [vmem:[#allocation2 + $0x8] sm:$0xf]
    %v35 = vld [vmem:[#allocation2 + $0xc] sm:$0xf]
    %v36 = vld [vmem:[#allocation2 + $0x10] sm:$0xf]
    %v37 = vld [vmem:[#allocation2 + $0x14] sm:$0xf]
    %v38 = vld [vmem:[#allocation2 + $0x18] sm:$0xf]
    %v39 = vld [vmem:[#allocation2 + $0x1c] sm:$0xf]
    %v40 = vld [vmem:[#allocation2 + $0x20] sm:$0xf]
    %v41 = vld [vmem:[#allocation2 + $0x24] sm:$0xf]
    %v42 = vld [vmem:[#allocation2 + $0x28] sm:$0xf]
    %v43 = vld [vmem:[#allocation2 + $0x2c] sm:$0xf]
    %v44 = vld [vmem:[#allocation2 + $0x30] sm:$0xf]
    %v45 = vld [vmem:[#allocation2 + $0x34] sm:$0xf]
    %v46 = vld [vmem:[#allocation2 + $0x38] sm:$0xf]
    %v47 = vld [vmem:[#allocation2 + $0x3c] sm:$0xf]
    %v48 = vld [vmem:[#allocation2 + $0x40] sm:$0xf]
    %v49 = vld [vmem:[#allocation2 + $0x44] sm:$0xf]
    %v50 = vld [vmem:[#allocation2 + $0x48] sm:$0xf]
    %v51 = vld [vmem:[#allocation2 + $0x4c] sm:$0xf]
    %v52 = vld [vmem:[#allocation2 + $0x50] sm:$0xf]
    %v53 = vld [vmem:[#allocation2 + $0x54] sm:$0xf]
    %v54 = vld [vmem:[#allocation2 + $0x58] sm:$0xf]
    %v55 = vld [vmem:[#allocation2 + $0x5c] sm:$0xf]
    %v56 = vld [vmem:[#allocation2 + $0x60] sm:$0xf]
    %v57 = vld [vmem:[#allocation2 + $0x64] sm:$0xf]
    %v58 = vld [vmem:[#allocation2 + $0x68] sm:$0xf]
    %v59 = vld [vmem:[#allocation2 + $0x6c] sm:$0xf]
    %v60 = vld [vmem:[#allocation2 + $0x70] sm:$0xf]
    %v61 = vld [vmem:[#allocation2 + $0x74] sm:$0xf]
    %v62 = vld [vmem:[#allocation2 + $0x78] sm:$0xf]
    %v63 = vld [vmem:[#allocation2 + $0x7c] sm:$0xf]
    %v64 = vld [vmem:[%s2] sm:$0x1]
    %v66 = vperm.slane %v64, 0
    %v70 = vunpack.c.l.b16 %v30
    %v71 = vunpack.c.h.b16 %v30
    %v72 = vunpack.c.l.b16 %v31
    %v73 = vunpack.c.h.b16 %v31
    %v74 = vpack.c.b16 %v72, %v70
    %v75 = vpack.c.b16 %v73, %v71
    %v110 = vunpack.c.l.b16 %v32
    %v111 = vunpack.c.l.b16 %v33
    %v112 = vunpack.c.l.b16 %v34
    %v113 = vunpack.c.l.b16 %v35
    %v114 = vunpack.c.l.b16 %v36
    %v115 = vunpack.c.l.b16 %v37
    %v116 = vunpack.c.l.b16 %v38
    %v117 = vunpack.c.l.b16 %v39
    %v118 = vunpack.c.l.b16 %v40
    %v119 = vunpack.c.l.b16 %v41
    %v120 = vunpack.c.l.b16 %v42
    %v121 = vunpack.c.l.b16 %v43
    %v122 = vunpack.c.l.b16 %v44
    %v123 = vunpack.c.l.b16 %v45
    %v124 = vunpack.c.l.b16 %v46
    %v125 = vunpack.c.l.b16 %v47
    %v126 = vunpack.c.l.b16 %v48
    %v127 = vunpack.c.l.b16 %v49
    %v128 = vunpack.c.l.b16 %v50
    %v129 = vunpack.c.l.b16 %v51
    %v130 = vunpack.c.l.b16 %v52
    %v131 = vunpack.c.l.b16 %v53
    %v132 = vunpack.c.l.b16 %v54
    %v133 = vunpack.c.l.b16 %v55
    %v134 = vunpack.c.l.b16 %v56
    %v135 = vunpack.c.l.b16 %v57
    %v136 = vunpack.c.l.b16 %v58
    %v137 = vunpack.c.l.b16 %v59
    %v138 = vunpack.c.l.b16 %v60
    %v139 = vunpack.c.l.b16 %v61
    %v140 = vunpack.c.l.b16 %v62
    %v141 = vunpack.c.l.b16 %v63
    %v142 = vpack.c.b16 %v111, %v110
    %v143 = vpack.c.b16 %v113, %v112
    %v144 = vpack.c.b16 %v115, %v114
    %v145 = vpack.c.b16 %v117, %v116
    %v146 = vpack.c.b16 %v119, %v118
    %v147 = vpack.c.b16 %v121, %v120
    %v148 = vpack.c.b16 %v123, %v122
    %v149 = vpack.c.b16 %v125, %v124
    %v150 = vpack.c.b16 %v127, %v126
    %v151 = vpack.c.b16 %v129, %v128
    %v152 = vpack.c.b16 %v131, %v130
    %v153 = vpack.c.b16 %v133, %v132
    %v154 = vpack.c.b16 %v135, %v134
    %v155 = vpack.c.b16 %v137, %v136
    %v156 = vpack.c.b16 %v139, %v138
    %v157 = vpack.c.b16 %v141, %v140
    %174 = vmatpush.bf16.msra.mxu0 %v149
    %175 = vmatpush.bf16.msra.mxu0 %v148
    %176 = vmatpush.bf16.msra.mxu0 %v147
    %177 = vmatpush.bf16.msra.mxu0 %v146
    %178 = vmatpush.bf16.msra.mxu0 %v145
    %179 = vmatpush.bf16.msra.mxu0 %v144
    %180 = vmatpush.bf16.msra.mxu0 %v143
    %181 = vmatpush.bf16.msra.mxu0 %v142
    %182 = vmatmul.bf16.gmra.mxu0 %v74
    %v183 = vpop.f32.mrf.mxu0
    %v184 = vadd.f32 %v66, %v183
    %v185 = vpop.f32.mrf.mxu0
    %v186 = vadd.f32 %v66, %v185
    %187 = vdwg.mxu0
    %188 = vmatpush.bf16.msra.mxu0 %v157
    %189 = vmatpush.bf16.msra.mxu0 %v156
    %190 = vmatpush.bf16.msra.mxu0 %v155
    %191 = vmatpush.bf16.msra.mxu0 %v154
    %192 = vmatpush.bf16.msra.mxu0 %v153
    %193 = vmatpush.bf16.msra.mxu0 %v152
    %194 = vmatpush.bf16.msra.mxu0 %v151
    %195 = vmatpush.bf16.msra.mxu0 %v150
    %196 = vmatmul.bf16.gmra.mxu0 %v75
    %v197 = vpop.f32.mrf.mxu0
    %v198 = vadd.f32 %v184, %v197
    %v199 = vpop.f32.mrf.mxu0
    %v200 = vadd.f32 %v186, %v199
    %201 = vdwg.mxu0
    %v202 = vpack.c.bf16 %v198, %v198
    %v203 = vpack.c.bf16 %v200, %v200
    %204 = vst [vmem:[%s3] sm:$0xf] %v202
    %205 = vst [vmem:[%s3 + $0x4] sm:$0xf] %v203
    // Predicated region
    $region18: #{decoder_forward.22} parent=1 // pred_check
      _
    $region19: #{decoder_forward.22} parent=1 // pred_check_branch
      %207 = sbr.rel (0) target = $region21
    $region20: #{decoder_forward.22} parent=1 // pred_region
      _
    $region21: #{decoder_forward.22} parent=1 // pred_fallthru
      _
    // Predicated region
    $region22: #{decoder_forward.22} parent=1 // pred_check
      _
    $region23: #{decoder_forward.22} parent=1 // pred_check_branch
      %209 = sbr.rel (0) target = $region25
    $region24: #{decoder_forward.22} parent=1 // pred_region
      _
    $region25: #{decoder_forward.22} parent=1 // pred_fallthru
      _
    %210 = vsyncpa [#allocation3], 1

// kernel: decoder_forward.27
$region0: #{decoder_forward.27}
  #allocation0 [shape = 'u32[]', space=smem, size = 0x4, offset = 0x4, fixed_abs, tag = 'smem constant byte address 0x4 - core index']
  #allocation1 [shape = 'u32[72,128]{1,0:T(1,128)}', space=vmem, size = 0x9000, scoped, tag = 'internal scratch']
  %s0 = inlined_call_operand.vmem [shape: bf16[16,128], index: 0, kind: input, shape index: {}]
  %s1 = inlined_call_operand.hbm [shape: bf16[128,256], index: 1, kind: input, shape index: {}]
  %s2 = inlined_call_operand.vmem [shape: f32[1,256], index: 2, kind: input, shape index: {}]
  %s3 = inlined_call_operand.vmem [shape: bf16[16,256], index: 3, kind: output, shape index: {}]
  %s4 = sld [smem:[#allocation0]]
  $region26: #{decoder_forward.27} parent=0
    _
  %s6 = ssub.s32 1, %s4
  %s7 = scalar_select 0, %s6, %s4
  $region1: #{decoder_forward.27} parent=0
    #allocation2 [shape = 'u8[65536]{0}', space=vmem, size = 0x10000, scoped, tag = 'input window, operand 1, single buffered']
    #allocation3 [shape = 's32[1]{0}', space=sflag, size = 0x4, scoped, tag = 'scoped memory for decoder_forward.27']
    %8 = vsyncpa [#allocation3], 0
    // Predicated region
    $region2: #{decoder_forward.27} parent=1 // pred_check
      _
    $region3: #{decoder_forward.27} parent=1 // pred_check_branch
      %10 = sbr.rel (0) target = $region5
    $region4: #{decoder_forward.27} parent=1 // pred_region
      _
    $region5: #{decoder_forward.27} parent=1 // pred_fallthru
      _
    // Predicated region
    $region6: #{decoder_forward.27} parent=1 // pred_check
      _
    $region7: #{decoder_forward.27} parent=1 // pred_check_branch
      %12 = sbr.rel (0) target = $region9
    $region8: #{decoder_forward.27} parent=1 // pred_region
      %14 = vsyncadd [#allocation3], 0
      %s15 = sshll.u32 %s1, 4
      %s16 = int_to_ptr.hbm [resolvable:$true] %s15
      %s17 = sshll.u32 [#allocation2], 4
      %s18 = int_to_ptr.vmem [resolvable:$true] %s17
      %23 = dma.hbm_to_vmem [thread:$0]  %s16, 2048, %s18, [#allocation3], 128, 128, 8
    $region9: #{decoder_forward.27} parent=1 // pred_fallthru
      _
    // Predicated region
    $region10: #{decoder_forward.27} parent=1 // pred_check
      _
    $region11: #{decoder_forward.27} parent=1 // pred_check_branch
      %25 = sbr.rel (0) target = $region13
    $region12: #{decoder_forward.27} parent=1 // pred_region
      _
    $region13: #{decoder_forward.27} parent=1 // pred_fallthru
      _
    // Predicated region
    $region14: #{decoder_forward.27} parent=1 // pred_check
      _
    $region15: #{decoder_forward.27} parent=1 // pred_check_branch
      %27 = sbr.rel (0) target = $region17
    $region16: #{decoder_forward.27} parent=1 // pred_region
      %29 = dma.done [#allocation3], 2048
    $region17: #{decoder_forward.27} parent=1 // pred_fallthru
      _
    %v30 = vld [vmem:[%s0] sm:$0xf]
    %v31 = vld [vmem:[%s0 + $0x4] sm:$0xf]
    %v32 = vld [vmem:[#allocation2] sm:$0xff]
    %v33 = vld [vmem:[#allocation2 + $0x8] sm:$0xff]
    %v34 = vld [vmem:[#allocation2 + $0x10] sm:$0xff]
    %v35 = vld [vmem:[#allocation2 + $0x18] sm:$0xff]
    %v36 = vld [vmem:[#allocation2 + $0x20] sm:$0xff]
    %v37 = vld [vmem:[#allocation2 + $0x28] sm:$0xff]
    %v38 = vld [vmem:[#allocation2 + $0x30] sm:$0xff]
    %v39 = vld [vmem:[#allocation2 + $0x38] sm:$0xff]
    %v40 = vld [vmem:[#allocation2 + $0x40] sm:$0xff]
    %v41 = vld [vmem:[#allocation2 + $0x48] sm:$0xff]
    %v42 = vld [vmem:[#allocation2 + $0x50] sm:$0xff]
    %v43 = vld [vmem:[#allocation2 + $0x58] sm:$0xff]
    %v44 = vld [vmem:[#allocation2 + $0x60] sm:$0xff]
    %v45 = vld [vmem:[#allocation2 + $0x68] sm:$0xff]
    %v46 = vld [vmem:[#allocation2 + $0x70] sm:$0xff]
    %v47 = vld [vmem:[#allocation2 + $0x78] sm:$0xff]
    %v48 = vld [vmem:[%s2] sm:$0x3]
    %v50 = vperm.slane %v48, 0
    %v51 = vperm.slane %v48, 1
    %v56 = vunpack.c.l.b16 %v30
    %v57 = vunpack.c.l.b16 %v31
    %v58 = vpack.c.b16 %v57, %v56
    %v76 = vunpack.c.l.b16 %v32
    %v77 = vunpack.c.h.b16 %v32
    %v78 = vunpack.c.l.b16 %v33
    %v79 = vunpack.c.h.b16 %v33
    %v80 = vunpack.c.l.b16 %v34
    %v81 = vunpack.c.h.b16 %v34
    %v82 = vunpack.c.l.b16 %v35
    %v83 = vunpack.c.h.b16 %v35
    %v84 = vunpack.c.l.b16 %v36
    %v85 = vunpack.c.h.b16 %v36
    %v86 = vunpack.c.l.b16 %v37
    %v87 = vunpack.c.h.b16 %v37
    %v88 = vunpack.c.l.b16 %v38
    %v89 = vunpack.c.h.b16 %v38
    %v90 = vunpack.c.l.b16 %v39
    %v91 = vunpack.c.h.b16 %v39
    %v92 = vunpack.c.l.b16 %v40
    %v93 = vunpack.c.h.b16 %v40
    %v94 = vunpack.c.l.b16 %v41
    %v95 = vunpack.c.h.b16 %v41
    %v96 = vunpack.c.l.b16 %v42
    %v97 = vunpack.c.h.b16 %v42
    %v98 = vunpack.c.l.b16 %v43
    %v99 = vunpack.c.h.b16 %v43
    %v100 = vunpack.c.l.b16 %v44
    %v101 = vunpack.c.h.b16 %v44
    %v102 = vunpack.c.l.b16 %v45
    %v103 = vunpack.c.h.b16 %v45
    %v104 = vunpack.c.l.b16 %v46
    %v105 = vunpack.c.h.b16 %v46
    %v106 = vunpack.c.l.b16 %v47
    %v107 = vunpack.c.h.b16 %v47
    %v108 = vpack.c.b16 %v78, %v76
    %v109 = vpack.c.b16 %v79, %v77
    %v110 = vpack.c.b16 %v82, %v80
    %v111 = vpack.c.b16 %v83, %v81
    %v112 = vpack.c.b16 %v86, %v84
    %v113 = vpack.c.b16 %v87, %v85
    %v114 = vpack.c.b16 %v90, %v88
    %v115 = vpack.c.b16 %v91, %v89
    %v116 = vpack.c.b16 %v94, %v92
    %v117 = vpack.c.b16 %v95, %v93
    %v118 = vpack.c.b16 %v98, %v96
    %v119 = vpack.c.b16 %v99, %v97
    %v120 = vpack.c.b16 %v102, %v100
    %v121 = vpack.c.b16 %v103, %v101
    %v122 = vpack.c.b16 %v106, %v104
    %v123 = vpack.c.b16 %v107, %v105
    %140 = vmatpush.bf16.msra.mxu0 %v122
    %141 = vmatpush.bf16.msra.mxu0 %v120
    %142 = vmatpush.bf16.msra.mxu0 %v118
    %143 = vmatpush.bf16.msra.mxu0 %v116
    %144 = vmatpush.bf16.msra.mxu0 %v114
    %145 = vmatpush.bf16.msra.mxu0 %v112
    %146 = vmatpush.bf16.msra.mxu0 %v110
    %147 = vmatpush.bf16.msra.mxu0 %v108
    %148 = vmatmul.bf16.gmra.mxu0 %v58
    %v149 = vpop.f32.mrf.mxu0
    %v150 = vadd.f32 %v50, %v149
    %v151 = vpop.f32.mrf.mxu0
    %v152 = vadd.f32 %v50, %v151
    %153 = vdwg.mxu0
    %154 = vmatpush.bf16.msra.mxu0 %v123
    %155 = vmatpush.bf16.msra.mxu0 %v121
    %156 = vmatpush.bf16.msra.mxu0 %v119
    %157 = vmatpush.bf16.msra.mxu0 %v117
    %158 = vmatpush.bf16.msra.mxu0 %v115
    %159 = vmatpush.bf16.msra.mxu0 %v113
    %160 = vmatpush.bf16.msra.mxu0 %v111
    %161 = vmatpush.bf16.msra.mxu0 %v109
    %162 = vmatmul.bf16.gmra.mxu0 %v58
    %v163 = vpop.f32.mrf.mxu0
    %v164 = vadd.f32 %v51, %v163
    %v165 = vpop.f32.mrf.mxu0
    %v166 = vadd.f32 %v51, %v165
    %167 = vdwg.mxu0
    %v168 = vpack.c.bf16 %v164, %v150
    %v169 = vpack.c.bf16 %v166, %v152
    %170 = vst [vmem:[%s3] sm:$0xff] %v168
    %171 = vst [vmem:[%s3 + $0x8] sm:$0xff] %v169
    // Predicated region
    $region18: #{decoder_forward.27} parent=1 // pred_check
      _
    $region19: #{decoder_forward.27} parent=1 // pred_check_branch
      %173 = sbr.rel (0) target = $region21
    $region20: #{decoder_forward.27} parent=1 // pred_region
      _
    $region21: #{decoder_forward.27} parent=1 // pred_fallthru
      _
    // Predicated region
    $region22: #{decoder_forward.27} parent=1 // pred_check
      _
    $region23: #{decoder_forward.27} parent=1 // pred_check_branch
      %175 = sbr.rel (0) target = $region25
    $region24: #{decoder_forward.27} parent=1 // pred_region
      _
    $region25: #{decoder_forward.27} parent=1 // pred_fallthru
      _
    %176 = vsyncpa [#allocation3], 1

// kernel: decoder_forward.28
$region0: #{decoder_forward.28}
  #allocation0 [shape = 'u32[]', space=smem, size = 0x4, offset = 0x4, fixed_abs, tag = 'smem constant byte address 0x4 - core index']
  #allocation1 [shape = 'u32[72,128]{1,0:T(1,128)}', space=vmem, size = 0x9000, scoped, tag = 'internal scratch']
  %s0 = inlined_call_operand.vmem [shape: bf16[2,8,128], index: 0, kind: input, shape index: {}]
  %s1 = inlined_call_operand.vmem [shape: bf16[2,8,256], index: 1, kind: input, shape index: {}, may-alias: {1,2}]
  %s2 = inlined_call_operand.vmem [shape: bf16[2,8,256], index: 2, kind: input, shape index: {}, may-alias: {1,2}]
  %s3 = inlined_call_operand.vmem [shape: f32[2,1,8], index: 3, kind: input, shape index: {}]
  %s4 = inlined_call_operand.vmem [shape: bf16[2,8,128], index: 4, kind: output, shape index: {}]
  %s5 = sld [smem:[#allocation0]]
  $region49: #{decoder_forward.28} parent=0
    _
  %s7 = ssub.s32 1, %s5
  %s8 = scalar_select 0, %s7, %s5
  loop: start=0, step=1, limit=4
  $region2: #{decoder_forward.28} parent=0 // loop_pre_header
    _
  $region3: #{decoder_forward.28} parent=0 // loop_header
    %s10 = sphi 0, %s14
    %p11 = scmp.ge.s32.totalorder %s10, 4
    %s17 = sphi 0, %s29
    %s18 = sphi 0, %s25
    %s19 = sphi 0, %s17
    %s20 = sphi 0, %s18
    %s21 = sphi 0, %s19
    %s22 = sphi 0, %s20
    %s34 = sphi 0, %s36
    %s37 = sphi 0, %s34
    %s38 = sphi 0, %s37
    %s54 = sphi 0, %s38
    %s60 = sphi 0, %s62
    %s63 = sphi 0, %s60
    %s64 = sphi 0, %s63
    %s80 = sphi 0, %s64
    %s86 = sphi 0, %s88
    %s89 = sphi 0, %s86
    %s90 = sphi 0, %s89
    %s106 = sphi 0, %s90
    %s112 = sphi 0, %s114
    %s115 = sphi 0, %s112
    %s116 = sphi 0, %s115
    %s132 = sphi 0, %s116
    %s140 = sphi 0, %s142
    %s143 = sphi 0, %s140
    %s144 = sphi 0, %s143
    %s160 = sphi 0, %s144
  $region4: #{decoder_forward.28} parent=0 // loop_header_branch
    %13 = sbr.rel (%p11) target = $region8
  $region5: #{decoder_forward.28} parent=0 // loop_body
    %s15 = ssub.s32 %s10, 1
    %s16 = ssub.s32 %s10, 2
    %s23 = sadd.s32 1, %s18
    %p24 = scmp.ge.s32.totalorder %s23, 1
    %s25 = scalar_select %p24, 0, %s23
    %s26 = sadd.s32 1, %s17
    %s27 = scalar_select %p24, %s26, %s17
    %p28 = scmp.ge.s32.totalorder %s27, 2
    %s29 = scalar_select %p28, 0, %s27
    %s30 = ssub.s32 %s17, %s29
    %s31 = ssub.s32 %s18, %s25
    %s32 = sor.u32 %s30, %s31
    %p33 = scmp.eq.s32.totalorder %s32, 0
    %s35 = sadd.s32 %s34, 1
    %s36 = scalar_select %p33, %s34, %s35
    %p39 = pneg %p33
    %p40 = scmp.eq.s32.totalorder %s10, 1
    %p41 = por %p39, %p40
    %p42 = scmp.ne.s32.totalorder %s34, %s37
    %p43 = scmp.eq.s32.totalorder %s10, 0
    %p44 = por %p42, %p43
    %p45 = scmp.ne.s32.totalorder %s34, %s37
    %p46 = scmp.eq.s32.totalorder %s15, 1
    %p47 = por %p45, %p46
    %p48 = scmp.ne.s32.totalorder %s37, %s38
    %p49 = scmp.eq.s32.totalorder %s15, 0
    %p50 = por %p48, %p49
    %p51 = scmp.ne.s32.totalorder %s37, %s38
    %p52 = scmp.eq.s32.totalorder %s16, 1
    %p53 = por %p51, %p52
    %p55 = scmp.ne.s32.totalorder %s38, %s54
    %p56 = scmp.eq.s32.totalorder %s16, 0
    %p57 = por %p55, %p56
    %s58 = ssub.s32 %s17, %s29
    %p59 = scmp.eq.s32.totalorder %s58, 0
    %s61 = sadd.s32 %s60, 1
    %s62 = scalar_select %p59, %s60, %s61
    %p65 = pneg %p59
    %p66 = scmp.eq.s32.totalorder %s10, 1
    %p67 = por %p65, %p66
    %p68 = scmp.ne.s32.totalorder %s60, %s63
    %p69 = scmp.eq.s32.totalorder %s10, 0
    %p70 = por %p68, %p69
    %p71 = scmp.ne.s32.totalorder %s60, %s63
    %p72 = scmp.eq.s32.totalorder %s15, 1
    %p73 = por %p71, %p72
    %p74 = scmp.ne.s32.totalorder %s63, %s64
    %p75 = scmp.eq.s32.totalorder %s15, 0
    %p76 = por %p74, %p75
    %p77 = scmp.ne.s32.totalorder %s63, %s64
    %p78 = scmp.eq.s32.totalorder %s16, 1
    %p79 = por %p77, %p78
    %p81 = scmp.ne.s32.totalorder %s64, %s80
    %p82 = scmp.eq.s32.totalorder %s16, 0
    %p83 = por %p81, %p82
    %s84 = ssub.s32 %s17, %s29
    %p85 = scmp.eq.s32.totalorder %s84, 0
    %s87 = sadd.s32 %s86, 1
    %s88 = scalar_select %p85, %s86, %s87
    %p91 = pneg %p85
    %p92 = scmp.eq.s32.totalorder %s10, 1
    %p93 = por %p91, %p92
    %p94 = scmp.ne.s32.totalorder %s86, %s89
    %p95 = scmp.eq.s32.totalorder %s10, 0
    %p96 = por %p94, %p95
    %p97 = scmp.ne.s32.totalorder %s86, %s89
    %p98 = scmp.eq.s32.totalorder %s15, 1
    %p99 = por %p97, %p98
    %p100 = scmp.ne.s32.totalorder %s89, %s90
    %p101 = scmp.eq.s32.totalorder %s15, 0
    %p102 = por %p100, %p101
    %p103 = scmp.ne.s32.totalorder %s89, %s90
    %p104 = scmp.eq.s32.totalorder %s16, 1
    %p105 = por %p103, %p104
    %p107 = scmp.ne.s32.totalorder %s90, %s106
    %p108 = scmp.eq.s32.totalorder %s16, 0
    %p109 = por %p107, %p108
    %s110 = ssub.s32 %s17, %s29
    %p111 = scmp.eq.s32.totalorder %s110, 0
    %s113 = sadd.s32 %s112, 1
    %s114 = scalar_select %p111, %s112, %s113
    %p117 = pneg %p111
    %p118 = scmp.eq.s32.totalorder %s10, 1
    %p119 = por %p117, %p118
    %p120 = scmp.ne.s32.totalorder %s112, %s115
    %p121 = scmp.eq.s32.totalorder %s10, 0
    %p122 = por %p120, %p121
    %p123 = scmp.ne.s32.totalorder %s112, %s115
    %p124 = scmp.eq.s32.totalorder %s15, 1
    %p125 = por %p123, %p124
    %p126 = scmp.ne.s32.totalorder %s115, %s116
    %p127 = scmp.eq.s32.totalorder %s15, 0
    %p128 = por %p126, %p127
    %p129 = scmp.ne.s32.totalorder %s115, %s116
    %p130 = scmp.eq.s32.totalorder %s16, 1
    %p131 = por %p129, %p130
    %p133 = scmp.ne.s32.totalorder %s116, %s132
    %p134 = scmp.eq.s32.totalorder %s16, 0
    %p135 = por %p133, %p134
    %s136 = ssub.s32 %s17, %s29
    %s137 = ssub.s32 %s18, %s25
    %s138 = sor.u32 %s136, %s137
    %p139 = scmp.eq.s32.totalorder %s138, 0
    %s141 = sadd.s32 %s140, 1
    %s142 = scalar_select %p139, %s140, %s141
    %p145 = pneg %p139
    %p146 = scmp.eq.s32.totalorder %s10, 1
    %p147 = por %p145, %p146
    %p148 = scmp.ne.s32.totalorder %s140, %s143
    %p149 = scmp.eq.s32.totalorder %s10, 0
    %p150 = por %p148, %p149
    %p151 = scmp.ne.s32.totalorder %s140, %s143
    %p152 = scmp.eq.s32.totalorder %s15, 1
    %p153 = por %p151, %p152
    %p154 = scmp.ne.s32.totalorder %s143, %s144
    %p155 = scmp.eq.s32.totalorder %s15, 0
    %p156 = por %p154, %p155
    %p157 = scmp.ne.s32.totalorder %s143, %s144
    %p158 = scmp.eq.s32.totalorder %s16, 1
    %p159 = por %p157, %p158
    %p161 = scmp.ne.s32.totalorder %s144, %s160
    %p162 = scmp.eq.s32.totalorder %s16, 0
    %p163 = por %p161, %p162
    %p164 = scmp.le.s32.totalorder 1, %s10
    %p165 = scmp.lt.s32.totalorder %s10, 3
    %p166 = pnand %p164, %p165
    %p167 = pneg %p166
    // Predicated region
    $region9: #{decoder_forward.28} parent=5 // pred_check
      _
    $region10: #{decoder_forward.28} parent=5 // pred_check_branch
      %169 = sbr.rel (%p166) target = $region12
    $region11: #{decoder_forward.28} parent=5 // pred_region
      %s170 = ssub.s32 %s10, 1
    $region12: #{decoder_forward.28} parent=5 // pred_fallthru
      _
    %p171 = scmp.lt.s32.totalorder %s10, 2
    // Predicated region
    $region13: #{decoder_forward.28} parent=5 // pred_check
      %p172 = pneg %p171
    $region14: #{decoder_forward.28} parent=5 // pred_check_branch
      %174 = sbr.rel (%p172) target = $region16
    $region15: #{decoder_forward.28} parent=5 // pred_region
      // Predicated region
      $region17: #{decoder_forward.28} parent=15 // pred_check
        %p175 = pneg %p44
      $region18: #{decoder_forward.28} parent=15 // pred_check_branch
        %177 = sbr.rel (%p175) target = $region20
      $region19: #{decoder_forward.28} parent=15 // pred_region
        %p178 = scmp.lt.s32.totalorder %s17, 1
        %s179 = scalar_select %p178, %s17, 1
        %p180 = scmp.lt.s32.totalorder %s18, 0
        %s181 = scalar_select %p180, %s18, 0
        %s182 = sadd.s32 %s181, %s179
        %s183 = smul.addr %s182, 4
        %s184 = scalar_lea.vmem %s0, %s183
      $region20: #{decoder_forward.28} parent=15 // pred_fallthru
        _
      // Predicated region
      $region21: #{decoder_forward.28} parent=15 // pred_check
        %p185 = pneg %p70
      $region22: #{decoder_forward.28} parent=15 // pred_check_branch
        %187 = sbr.rel (%p185) target = $region24
      $region23: #{decoder_forward.28} parent=15 // pred_region
        %p188 = scmp.lt.s32.totalorder %s17, 1
        %s189 = scalar_select %p188, %s17, 1
        %s190 = smul.addr %s189, 2
        %s191 = smul.addr %s190, 4
        %s192 = scalar_lea.vmem %s1, %s191
      $region24: #{decoder_forward.28} parent=15 // pred_fallthru
        _
      // Predicated region
      $region25: #{decoder_forward.28} parent=15 // pred_check
        %p193 = pneg %p96
      $region26: #{decoder_forward.28} parent=15 // pred_check_branch
        %195 = sbr.rel (%p193) target = $region28
      $region27: #{decoder_forward.28} parent=15 // pred_region
        %p196 = scmp.lt.s32.totalorder %s17, 1
        %s197 = scalar_select %p196, %s17, 1
        %s198 = smul.addr %s197, 2
        %s199 = sadd.s32 1, %s198
        %s200 = smul.addr %s199, 4
        %s201 = scalar_lea.vmem %s2, %s200
      $region28: #{decoder_forward.28} parent=15 // pred_fallthru
        _
      // Predicated region
      $region29: #{decoder_forward.28} parent=15 // pred_check
        %p202 = pneg %p122
      $region30: #{decoder_forward.28} parent=15 // pred_check_branch
        %204 = sbr.rel (%p202) target = $region32
      $region31: #{decoder_forward.28} parent=15 // pred_region
        %p205 = scmp.lt.s32.totalorder %s17, 1
        %s206 = scalar_select %p205, %s17, 1
        %s207 = scalar_lea.vmem %s3, %s206
      $region32: #{decoder_forward.28} parent=15 // pred_fallthru
        _
    $region16: #{decoder_forward.28} parent=5 // pred_fallthru
      _
    %p208 = scmp.le.s32.totalorder 1, %s10
    %p209 = scmp.lt.s32.totalorder %s10, 3
    %p210 = pnand %p208, %p209
    %p211 = pneg %p210
    // Predicated region
    $region33: #{decoder_forward.28} parent=5 // pred_check
      _
    $region34: #{decoder_forward.28} parent=5 // pred_check_branch
      %213 = sbr.rel (%p210) target = $region36
    $region35: #{decoder_forward.28} parent=5 // pred_region
      %s214 = ssub.s32 %s10, 1
      %p215 = scmp.lt.s32.totalorder %s19, 1
      %s216 = scalar_select %p215, %s19, 1
      %p217 = scmp.lt.s32.totalorder %s20, 0
      %s218 = scalar_select %p217, %s20, 0
      %s219 = sadd.s32 %s218, %s216
      %s220 = smul.addr %s219, 4
      %s221 = scalar_lea.vmem %s0, %s220
      %p222 = pneg %p50
      %p223 = pneg %p47
      %p224 = scmp.lt.s32.totalorder %s19, 1
      %s225 = scalar_select %p224, %s19, 1
      %s226 = smul.addr %s225, 2
      %s227 = smul.addr %s226, 4
      %s228 = scalar_lea.vmem %s1, %s227
      %p229 = pneg %p76
      %p230 = pneg %p73
      %p231 = scmp.lt.s32.totalorder %s19, 1
      %s232 = scalar_select %p231, %s19, 1
      %s233 = smul.addr %s232, 2
      %s234 = sadd.s32 1, %s233
      %s235 = smul.addr %s234, 4
      %s236 = scalar_lea.vmem %s2, %s235
      %p237 = pneg %p102
      %p238 = pneg %p99
      %p239 = scmp.lt.s32.totalorder %s19, 1
      %s240 = scalar_select %p239, %s19, 1
      %s241 = scalar_lea.vmem %s3, %s240
      %p242 = pneg %p128
      %p243 = pneg %p125
      %p244 = pneg %p156
      %p245 = pneg %p153
      %p246 = scmp.lt.s32.totalorder %s19, 1
      %s247 = scalar_select %p246, %s19, 1
      %p248 = scmp.lt.s32.totalorder %s20, 0
      %s249 = scalar_select %p248, %s20, 0
      %s250 = sadd.s32 %s249, %s247
      %s251 = smul.addr %s250, 4
      %s252 = scalar_lea.vmem %s4, %s251
      %p253 = scmp.lt.s32.totalorder %s19, 1
      %s254 = scalar_select %p253, %s19, 1
      %p255 = scmp.lt.s32.totalorder %s20, 0
      %s256 = scalar_select %p255, %s20, 0
      %s257 = sadd.s32 %s256, %s254
      %s258 = smul.addr %s257, 4
      %s259 = scalar_lea.vmem %s0, %s258
      %p260 = scmp.lt.s32.totalorder %s19, 1
      %s261 = scalar_select %p260, %s19, 1
      %s262 = smul.addr %s261, 2
      %s263 = smul.addr %s262, 4
      %s264 = scalar_lea.vmem %s1, %s263
      %p265 = scmp.lt.s32.totalorder %s19, 1
      %s266 = scalar_select %p265, %s19, 1
      %s267 = smul.addr %s266, 2
      %s268 = sadd.s32 1, %s267
      %s269 = smul.addr %s268, 4
      %s270 = scalar_lea.vmem %s2, %s269
      %p271 = scmp.lt.s32.totalorder %s19, 1
      %s272 = scalar_select %p271, %s19, 1
      %s273 = scalar_lea.vmem %s3, %s272
      %p274 = scmp.lt.s32.totalorder %s19, 1
      %s275 = scalar_select %p274, %s19, 1
      %p276 = scmp.lt.s32.totalorder %s20, 0
      %s277 = scalar_select %p276, %s20, 0
      %s278 = sadd.s32 %s277, %s275
      %s279 = smul.addr %s278, 4
      %s280 = scalar_lea.vmem %s4, %s279
      %v282 = vld [vmem:[%s273] sm:$0x1]
      %v283 = vld [vmem:[%s259] sm:$0xf]
      %v284 = vunpack.c.l.bf16 %v283
      %v285 = vmul.f32 %v284, 0.17675781
      %v286 = vpack.c.bf16 %v285, %v285
      %v287 = vld [vmem:[%s264] sm:$0xf]
      %v288 = vld [vmem:[%s270] sm:$0xf]
      %v290 = vperm.slane %v282, 0
      %vm292 = vcmask 261120
      %v294 = vsel %vm292, %v286, 0
      %v297 = vsel %vm292, %v287, 0
      %299 = vmatpush.bf16.xpose.msra.mxu0 0
      %300 = vmatpush.bf16.xpose.msra.mxu0 0
      %301 = vmatpush.bf16.xpose.msra.mxu0 0
      %302 = vmatpush.bf16.xpose.msra.mxu0 0
      %303 = vmatpush.bf16.xpose.msra.mxu0 0
      %304 = vmatpush.bf16.xpose.msra.mxu0 0
      %305 = vmatpush.bf16.xpose.msra.mxu0 0
      %306 = vmatpush.bf16.xpose.msra.mxu0 %v297
      %307 = vmatmul.bf16.gmra.mxu0 %v294
      %v308 = vpop.f32.mrf.mxu0
      %v309 = vadd.f32 %v290, %v308
      %v310 = vpop.f32.mrf.mxu0
      %311 = vdwg.mxu0
      %vm312 = vcmask 64512
      %v313 = vsel %vm312, %v309, -inf
      %314 = vmax.xlane.f32.xlu0 %v313
      %v315 = vpop.xlane.xlu0 %314
      %v316 = vsub.f32 %v309, %v315
      %v317 = vmul.f32 %v316, 1.442695
      %v318 = vpow.pop %v317
      %v319 = vsel %vm312, %v318, 0.0
      %320 = vadd.xlane.f32.xlu0 %v319
      %v321 = vpop.xlane.xlu0 %320
      %v322 = vrcp.pop %v321
      %v323 = vmul.f32 %v318, %v322
      %v324 = vpack.c.bf16 %v323, %v323
      %v326 = vsel %vm312, %v324, 0
      %vm328 = vcmask 1043456
      %v330 = vsel %vm328, %v288, 0
      %332 = vmatpush.bf16.msra.mxu0 0
      %333 = vmatpush.bf16.msra.mxu0 0
      %334 = vmatpush.bf16.msra.mxu0 0
      %335 = vmatpush.bf16.msra.mxu0 0
      %336 = vmatpush.bf16.msra.mxu0 0
      %337 = vmatpush.bf16.msra.mxu0 0
      %338 = vmatpush.bf16.msra.mxu0 0
      %339 = vmatpush.bf16.msra.mxu0 %v330
      %340 = vmatmul.bf16.gmra.mxu0 %v326
      %v341 = vpop.f32.mrf.mxu0
      %v342 = vadd.f32 0.0, %v341
      %v343 = vpop.f32.mrf.mxu0
      %344 = vdwg.mxu0
      %v345 = vpack.c.bf16 %v342, %v342
      %vm346 = vcmask 257024
      %347 = vst.msk [vmem:[%s280] sm:$0xf] %vm346, %v345
      %v348 = vld [vmem:[%s259] sm:$0xf]
      %v349 = vunpack.c.l.bf16 %v348
      %v350 = vmul.f32 %v349, 0.17675781
      %v351 = vpack.c.bf16 %v350, %v350
      %v352 = vld [vmem:[%s264] sm:$0xf]
      %v353 = vld [vmem:[%s270] sm:$0xf]
      %355 = vrot.lane.b32.xlu0 %v351, 96
      %v356 = vpop.permute.xlu0 %355
      %v358 = vunpack.c.l.b16 %v352
      %v359 = vpack.c.b16 %v358, %v358
      %360 = vrot.lane.b32.xlu0 %v359, 96
      %v361 = vpop.permute.xlu0 %360
      %v363 = vsel %vm292, %v356, 0
      %v366 = vsel %vm292, %v361, 0
      %368 = vmatpush.bf16.xpose.msra.mxu0 0
      %369 = vmatpush.bf16.xpose.msra.mxu0 0
      %370 = vmatpush.bf16.xpose.msra.mxu0 0
      %371 = vmatpush.bf16.xpose.msra.mxu0 0
      %372 = vmatpush.bf16.xpose.msra.mxu0 0
      %373 = vmatpush.bf16.xpose.msra.mxu0 0
      %374 = vmatpush.bf16.xpose.msra.mxu0 0
      %375 = vmatpush.bf16.xpose.msra.mxu0 %v366
      %376 = vmatmul.bf16.gmra.mxu0 %v363
      %v377 = vpop.f32.mrf.mxu0
      %v378 = vadd.f32 %v290, %v377
      %v379 = vpop.f32.mrf.mxu0
      %380 = vdwg.mxu0
      %v381 = vsel %vm312, %v378, -inf
      %382 = vmax.xlane.f32.xlu0 %v381
      %v383 = vpop.xlane.xlu0 %382
      %v384 = vsub.f32 %v378, %v383
      %v385 = vmul.f32 %v384, 1.442695
      %v386 = vpow.pop %v385
      %v387 = vsel %vm312, %v386, 0.0
      %388 = vadd.xlane.f32.xlu0 %v387
      %v389 = vpop.xlane.xlu0 %388
      %v390 = vrcp.pop %v389
      %v391 = vmul.f32 %v386, %v390
      %v392 = vpack.c.bf16 %v391, %v391
      %v394 = vunpack.c.l.b16 %v353
      %v395 = vpack.c.b16 %v394, %v394
      %396 = vrot.lane.b32.xlu0 %v395, 96
      %v397 = vpop.permute.xlu0 %396
      %v399 = vsel %vm312, %v392, 0
      %v402 = vsel %vm328, %v397, 0
      %404 = vmatpush.bf16.msra.mxu0 0
      %405 = vmatpush.bf16.msra.mxu0 0
      %406 = vmatpush.bf16.msra.mxu0 0
      %407 = vmatpush.bf16.msra.mxu0 0
      %408 = vmatpush.bf16.msra.mxu0 0
      %409 = vmatpush.bf16.msra.mxu0 0
      %410 = vmatpush.bf16.msra.mxu0 0
      %411 = vmatpush.bf16.msra.mxu0 %v402
      %412 = vmatmul.bf16.gmra.mxu0 %v399
      %v413 = vpop.f32.mrf.mxu0
      %v414 = vadd.f32 0.0, %v413
      %v415 = vpop.f32.mrf.mxu0
      %416 = vdwg.mxu0
      %v417 = vpack.c.bf16 %v414, %v414
      %419 = vrot.lane.b32.xlu0 %v417, 32
      %v420 = vpop.permute.xlu0 %419
      %vm422 = vcmask 519424
      %423 = vst.msk [vmem:[%s280] sm:$0xf] %vm422, %v420
      %v424 = vld [vmem:[%s259] sm:$0xf]
      %v425 = vunpack.c.l.bf16 %v424
      %v426 = vmul.f32 %v425, 0.17675781
      %v427 = vpack.c.bf16 %v426, %v426
      %v428 = vld [vmem:[%s264] sm:$0xf]
      %v429 = vld [vmem:[%s270] sm:$0xf]
      %431 = vrot.lane.b32.xlu0 %v427, 64
      %v432 = vpop.permute.xlu0 %431
      %v434 = vunpack.c.l.b16 %v428
      %v435 = vpack.c.b16 %v434, %v434
      %436 = vrot.lane.b32.xlu0 %v435, 64
      %v437 = vpop.permute.xlu0 %436
      %v439 = vsel %vm292, %v432, 0
      %v442 = vsel %vm292, %v437, 0
      %444 = vmatpush.bf16.xpose.msra.mxu0 0
      %445 = vmatpush.bf16.xpose.msra.mxu0 0
      %446 = vmatpush.bf16.xpose.msra.mxu0 0
      %447 = vmatpush.bf16.xpose.msra.mxu0 0
      %448 = vmatpush.bf16.xpose.msra.mxu0 0
      %449 = vmatpush.bf16.xpose.msra.mxu0 0
      %450 = vmatpush.bf16.xpose.msra.mxu0 0
      %451 = vmatpush.bf16.xpose.msra.mxu0 %v442
      %452 = vmatmul.bf16.gmra.mxu0 %v439
      %v453 = vpop.f32.mrf.mxu0
      %v454 = vadd.f32 %v290, %v453
      %v455 = vpop.f32.mrf.mxu0
      %456 = vdwg.mxu0
      %v457 = vsel %vm312, %v454, -inf
      %458 = vmax.xlane.f32.xlu0 %v457
      %v459 = vpop.xlane.xlu0 %458
      %v460 = vsub.f32 %v454, %v459
      %v461 = vmul.f32 %v460, 1.442695
      %v462 = vpow.pop %v461
      %v463 = vsel %vm312, %v462, 0.0
      %464 = vadd.xlane.f32.xlu0 %v463
      %v465 = vpop.xlane.xlu0 %464
      %v466 = vrcp.pop %v465
      %v467 = vmul.f32 %v462, %v466
      %v468 = vpack.c.bf16 %v467, %v467
      %v470 = vunpack.c.l.b16 %v429
      %v471 = vpack.c.b16 %v470, %v470
      %472 = vrot.lane.b32.xlu0 %v471, 64
      %v473 = vpop.permute.xlu0 %472
      %v475 = vsel %vm312, %v468, 0
      %v478 = vsel %vm328, %v473, 0
      %480 = vmatpush.bf16.msra.mxu0 0
      %481 = vmatpush.bf16.msra.mxu0 0
      %482 = vmatpush.bf16.msra.mxu0 0
      %483 = vmatpush.bf16.msra.mxu0 0
      %484 = vmatpush.bf16.msra.mxu0 0
      %485 = vmatpush.bf16.msra.mxu0 0
      %486 = vmatpush.bf16.msra.mxu0 0
      %487 = vmatpush.bf16.msra.mxu0 %v478
      %488 = vmatmul.bf16.gmra.mxu0 %v475
      %v489 = vpop.f32.mrf.mxu0
      %v490 = vadd.f32 0.0, %v489
      %v491 = vpop.f32.mrf.mxu0
      %492 = vdwg.mxu0
      %v493 = vpack.c.bf16 %v490, %v490
      %495 = vrot.lane.b32.xlu0 %v493, 64
      %v496 = vpop.permute.xlu0 %495
      %vm498 = vcmask 781824
      %499 = vst.msk [vmem:[%s280] sm:$0xf] %vm498, %v496
      %v500 = vld [vmem:[%s259] sm:$0xf]
      %v501 = vunpack.c.l.bf16 %v500
      %v502 = vmul.f32 %v501, 0.17675781
      %v503 = vpack.c.bf16 %v502, %v502
      %v504 = vld [vmem:[%s264] sm:$0xf]
      %v505 = vld [vmem:[%s270] sm:$0xf]
      %507 = vrot.lane.b32.xlu0 %v503, 32
      %v508 = vpop.permute.xlu0 %507
      %v510 = vunpack.c.l.b16 %v504
      %v511 = vpack.c.b16 %v510, %v510
      %512 = vrot.lane.b32.xlu0 %v511, 32
      %v513 = vpop.permute.xlu0 %512
      %v515 = vsel %vm292, %v508, 0
      %v518 = vsel %vm292, %v513, 0
      %520 = vmatpush.bf16.xpose.msra.mxu0 0
      %521 = vmatpush.bf16.xpose.msra.mxu0 0
      %522 = vmatpush.bf16.xpose.msra.mxu0 0
      %523 = vmatpush.bf16.xpose.msra.mxu0 0
      %524 = vmatpush.bf16.xpose.msra.mxu0 0
      %525 = vmatpush.bf16.xpose.msra.mxu0 0
      %526 = vmatpush.bf16.xpose.msra.mxu0 0
      %527 = vmatpush.bf16.xpose.msra.mxu0 %v518
      %528 = vmatmul.bf16.gmra.mxu0 %v515
      %v529 = vpop.f32.mrf.mxu0
      %v530 = vadd.f32 %v290, %v529
      %v531 = vpop.f32.mrf.mxu0
      %532 = vdwg.mxu0
      %v533 = vsel %vm312, %v530, -inf
      %534 = vmax.xlane.f32.xlu0 %v533
      %v535 = vpop.xlane.xlu0 %534
      %v536 = vsub.f32 %v530, %v535
      %v537 = vmul.f32 %v536, 1.442695
      %v538 = vpow.pop %v537
      %v539 = vsel %vm312, %v538, 0.0
      %540 = vadd.xlane.f32.xlu0 %v539
      %v541 = vpop.xlane.xlu0 %540
      %v542 = vrcp.pop %v541
      %v543 = vmul.f32 %v538, %v542
      %v544 = vpack.c.bf16 %v543, %v543
      %v546 = vunpack.c.l.b16 %v505
      %v547 = vpack.c.b16 %v546, %v546
      %548 = vrot.lane.b32.xlu0 %v547, 32
      %v549 = vpop.permute.xlu0 %548
      %v551 = vsel %vm312, %v544, 0
      %v554 = vsel %vm328, %v549, 0
      %556 = vmatpush.bf16.msra.mxu0 0
      %557 = vmatpush.bf16.msra.mxu0 0
      %558 = vmatpush.bf16.msra.mxu0 0
      %559 = vmatpush.bf16.msra.mxu0 0
      %560 = vmatpush.bf16.msra.mxu0 0
      %561 = vmatpush.bf16.msra.mxu0 0
      %562 = vmatpush.bf16.msra.mxu0 0
      %563 = vmatpush.bf16.msra.mxu0 %v554
      %564 = vmatmul.bf16.gmra.mxu0 %v551
      %v565 = vpop.f32.mrf.mxu0
      %v566 = vadd.f32 0.0, %v565
      %v567 = vpop.f32.mrf.mxu0
      %568 = vdwg.mxu0
      %v569 = vpack.c.bf16 %v566, %v566
      %571 = vrot.lane.b32.xlu0 %v569, 96
      %v572 = vpop.permute.xlu0 %571
      %vm574 = vcmask 1044224
      %575 = vst.msk [vmem:[%s280] sm:$0xf] %vm574, %v572
      %p576 = scmp.lt.s32.totalorder %s19, 1
      %s577 = scalar_select %p576, %s19, 1
      %p578 = scmp.lt.s32.totalorder %s20, 0
      %s579 = scalar_select %p578, %s20, 0
      %s580 = sadd.s32 %s579, %s577
      %s581 = smul.addr %s580, 4
      %s582 = scalar_lea.vmem %s4, %s581
      // Predicated region
      $region37: #{decoder_forward.28} parent=35 // pred_check
        %p583 = pneg %p153
      $region38: #{decoder_forward.28} parent=35 // pred_check_branch
        %585 = sbr.rel (%p583) target = $region40
      $region39: #{decoder_forward.28} parent=35 // pred_region
        _
      $region40: #{decoder_forward.28} parent=35 // pred_fallthru
        _
    $region36: #{decoder_forward.28} parent=5 // pred_fallthru
      _
    %p586 = scmp.le.s32.totalorder 2, %s10
    // Predicated region
    $region41: #{decoder_forward.28} parent=5 // pred_check
      %p587 = pneg %p586
    $region42: #{decoder_forward.28} parent=5 // pred_check_branch
      %589 = sbr.rel (%p587) target = $region44
    $region43: #{decoder_forward.28} parent=5 // pred_region
      %s590 = ssub.s32 %s10, 2
      // Predicated region
      $region45: #{decoder_forward.28} parent=43 // pred_check
        %p591 = pneg %p159
      $region46: #{decoder_forward.28} parent=43 // pred_check_branch
        %593 = sbr.rel (%p591) target = $region48
      $region47: #{decoder_forward.28} parent=43 // pred_region
        %p594 = scmp.lt.s32.totalorder %s21, 1
        %s595 = scalar_select %p594, %s21, 1
        %p596 = scmp.lt.s32.totalorder %s22, 0
        %s597 = scalar_select %p596, %s22, 0
        %s598 = sadd.s32 %s597, %s595
        %s599 = smul.addr %s598, 4
        %s600 = scalar_lea.vmem %s4, %s599
      $region48: #{decoder_forward.28} parent=43 // pred_fallthru
        _
    $region44: #{decoder_forward.28} parent=5 // pred_fallthru
      _
  $region6: #{decoder_forward.28} parent=0 // loop_footer
    %s14 = sadd.s32 1, %s10
  $region7: #{decoder_forward.28} parent=0 // loop_footer_branch
    %9 = sbr.rel target = $region3
  $region8: #{decoder_forward.28} parent=0 // loop_exit
    _

// kernel: decoder_forward.30
$region0: #{decoder_forward.30}
  #allocation0 [shape = 'u32[]', space=smem, size = 0x4, offset = 0x4, fixed_abs, tag = 'smem constant byte address 0x4 - core index']
  #allocation1 [shape = 'u32[72,128]{1,0:T(1,128)}', space=vmem, size = 0x9000, scoped, tag = 'internal scratch']
  %s0 = inlined_call_operand.vmem [shape: bf16[16,128], index: 0, kind: input, shape index: {}]
  %s1 = inlined_call_operand.hbm [shape: bf16[128,256], index: 1, kind: input, shape index: {}]
  %s2 = inlined_call_operand.vmem [shape: f32[1,256], index: 2, kind: input, shape index: {}]
  %s3 = inlined_call_operand.vmem [shape: bf16[16,256], index: 3, kind: output, shape index: {}]
  %s4 = sld [smem:[#allocation0]]
  $region26: #{decoder_forward.30} parent=0
    _
  %s6 = ssub.s32 1, %s4
  %s7 = scalar_select 0, %s6, %s4
  $region1: #{decoder_forward.30} parent=0
    #allocation2 [shape = 'u8[65536]{0}', space=vmem, size = 0x10000, scoped, tag = 'input window, operand 1, single buffered']
    #allocation3 [shape = 's32[1]{0}', space=sflag, size = 0x4, scoped, tag = 'scoped memory for decoder_forward.30']
    %8 = vsyncpa [#allocation3], 0
    // Predicated region
    $region2: #{decoder_forward.30} parent=1 // pred_check
      _
    $region3: #{decoder_forward.30} parent=1 // pred_check_branch
      %10 = sbr.rel (0) target = $region5
    $region4: #{decoder_forward.30} parent=1 // pred_region
      _
    $region5: #{decoder_forward.30} parent=1 // pred_fallthru
      _
    // Predicated region
    $region6: #{decoder_forward.30} parent=1 // pred_check
      _
    $region7: #{decoder_forward.30} parent=1 // pred_check_branch
      %12 = sbr.rel (0) target = $region9
    $region8: #{decoder_forward.30} parent=1 // pred_region
      %14 = vsyncadd [#allocation3], 0
      %s15 = sshll.u32 %s1, 4
      %s16 = int_to_ptr.hbm [resolvable:$true] %s15
      %s17 = sshll.u32 [#allocation2], 4
      %s18 = int_to_ptr.vmem [resolvable:$true] %s17
      %23 = dma.hbm_to_vmem [thread:$0]  %s16, 2048, %s18, [#allocation3], 128, 128, 8
    $region9: #{decoder_forward.30} parent=1 // pred_fallthru
      _
    // Predicated region
    $region10: #{decoder_forward.30} parent=1 // pred_check
      _
    $region11: #{decoder_forward.30} parent=1 // pred_check_branch
      %25 = sbr.rel (0) target = $region13
    $region12: #{decoder_forward.30} parent=1 // pred_region
      _
    $region13: #{decoder_forward.30} parent=1 // pred_fallthru
      _
    // Predicated region
    $region14: #{decoder_forward.30} parent=1 // pred_check
      _
    $region15: #{decoder_forward.30} parent=1 // pred_check_branch
      %27 = sbr.rel (0) target = $region17
    $region16: #{decoder_forward.30} parent=1 // pred_region
      %29 = dma.done [#allocation3], 2048
    $region17: #{decoder_forward.30} parent=1 // pred_fallthru
      _
    %v30 = vld [vmem:[%s0] sm:$0xf]
    %v31 = vld [vmem:[%s0 + $0x4] sm:$0xf]
    %v32 = vld [vmem:[#allocation2] sm:$0xff]
    %v33 = vld [vmem:[#allocation2 + $0x8] sm:$0xff]
    %v34 = vld [vmem:[#allocation2 + $0x10] sm:$0xff]
    %v35 = vld [vmem:[#allocation2 + $0x18] sm:$0xff]
    %v36 = vld [vmem:[#allocation2 + $0x20] sm:$0xff]
    %v37 = vld [vmem:[#allocation2 + $0x28] sm:$0xff]
    %v38 = vld [vmem:[#allocation2 + $0x30] sm:$0xff]
    %v39 = vld [vmem:[#allocation2 + $0x38] sm:$0xff]
    %v40 = vld [vmem:[#allocation2 + $0x40] sm:$0xff]
    %v41 = vld [vmem:[#allocation2 + $0x48] sm:$0xff]
    %v42 = vld [vmem:[#allocation2 + $0x50] sm:$0xff]
    %v43 = vld [vmem:[#allocation2 + $0x58] sm:$0xff]
    %v44 = vld [vmem:[#allocation2 + $0x60] sm:$0xff]
    %v45 = vld [vmem:[#allocation2 + $0x68] sm:$0xff]
    %v46 = vld [vmem:[#allocation2 + $0x70] sm:$0xff]
    %v47 = vld [vmem:[#allocation2 + $0x78] sm:$0xff]
    %v48 = vld [vmem:[%s2] sm:$0x3]
    %v50 = vperm.slane %v48, 0
    %v51 = vperm.slane %v48, 1
    %v56 = vunpack.c.l.b16 %v30
    %v57 = vunpack.c.l.b16 %v31
    %v58 = vpack.c.b16 %v57, %v56
    %v76 = vunpack.c.l.b16 %v32
    %v77 = vunpack.c.h.b16 %v32
    %v78 = vunpack.c.l.b16 %v33
    %v79 = vunpack.c.h.b16 %v33
    %v80 = vunpack.c.l.b16 %v34
    %v81 = vunpack.c.h.b16 %v34
    %v82 = vunpack.c.l.b16 %v35
    %v83 = vunpack.c.h.b16 %v35
    %v84 = vunpack.c.l.b16 %v36
    %v85 = vunpack.c.h.b16 %v36
    %v86 = vunpack.c.l.b16 %v37
    %v87 = vunpack.c.h.b16 %v37
    %v88 = vunpack.c.l.b16 %v38
    %v89 = vunpack.c.h.b16 %v38
    %v90 = vunpack.c.l.b16 %v39
    %v91 = vunpack.c.h.b16 %v39
    %v92 = vunpack.c.l.b16 %v40
    %v93 = vunpack.c.h.b16 %v40
    %v94 = vunpack.c.l.b16 %v41
    %v95 = vunpack.c.h.b16 %v41
    %v96 = vunpack.c.l.b16 %v42
    %v97 = vunpack.c.h.b16 %v42
    %v98 = vunpack.c.l.b16 %v43
    %v99 = vunpack.c.h.b16 %v43
    %v100 = vunpack.c.l.b16 %v44
    %v101 = vunpack.c.h.b16 %v44
    %v102 = vunpack.c.l.b16 %v45
    %v103 = vunpack.c.h.b16 %v45
    %v104 = vunpack.c.l.b16 %v46
    %v105 = vunpack.c.h.b16 %v46
    %v106 = vunpack.c.l.b16 %v47
    %v107 = vunpack.c.h.b16 %v47
    %v108 = vpack.c.b16 %v78, %v76
    %v109 = vpack.c.b16 %v79, %v77
    %v110 = vpack.c.b16 %v82, %v80
    %v111 = vpack.c.b16 %v83, %v81
    %v112 = vpack.c.b16 %v86, %v84
    %v113 = vpack.c.b16 %v87, %v85
    %v114 = vpack.c.b16 %v90, %v88
    %v115 = vpack.c.b16 %v91, %v89
    %v116 = vpack.c.b16 %v94, %v92
    %v117 = vpack.c.b16 %v95, %v93
    %v118 = vpack.c.b16 %v98, %v96
    %v119 = vpack.c.b16 %v99, %v97
    %v120 = vpack.c.b16 %v102, %v100
    %v121 = vpack.c.b16 %v103, %v101
    %v122 = vpack.c.b16 %v106, %v104
    %v123 = vpack.c.b16 %v107, %v105
    %140 = vmatpush.bf16.msra.mxu0 %v122
    %141 = vmatpush.bf16.msra.mxu0 %v120
    %142 = vmatpush.bf16.msra.mxu0 %v118
    %143 = vmatpush.bf16.msra.mxu0 %v116
    %144 = vmatpush.bf16.msra.mxu0 %v114
    %145 = vmatpush.bf16.msra.mxu0 %v112
    %146 = vmatpush.bf16.msra.mxu0 %v110
    %147 = vmatpush.bf16.msra.mxu0 %v108
    %148 = vmatmul.bf16.gmra.mxu0 %v58
    %v149 = vpop.f32.mrf.mxu0
    %v150 = vadd.f32 %v50, %v149
    %v151 = vpop.f32.mrf.mxu0
    %v152 = vadd.f32 %v50, %v151
    %153 = vdwg.mxu0
    %154 = vmatpush.bf16.msra.mxu0 %v123
    %155 = vmatpush.bf16.msra.mxu0 %v121
    %156 = vmatpush.bf16.msra.mxu0 %v119
    %157 = vmatpush.bf16.msra.mxu0 %v117
    %158 = vmatpush.bf16.msra.mxu0 %v115
    %159 = vmatpush.bf16.msra.mxu0 %v113
    %160 = vmatpush.bf16.msra.mxu0 %v111
    %161 = vmatpush.bf16.msra.mxu0 %v109
    %162 = vmatmul.bf16.gmra.mxu0 %v58
    %v163 = vpop.f32.mrf.mxu0
    %v164 = vadd.f32 %v51, %v163
    %v165 = vpop.f32.mrf.mxu0
    %v166 = vadd.f32 %v51, %v165
    %167 = vdwg.mxu0
    %v168 = vmax.f32 %v150, 0.0
    %v169 = vmax.f32 %v164, 0.0
    %v170 = vmax.f32 %v152, 0.0
    %v171 = vmax.f32 %v166, 0.0
    %v172 = vpack.c.bf16 %v169, %v168
    %v173 = vpack.c.bf16 %v171, %v170
    %174 = vst [vmem:[%s3] sm:$0xff] %v172
    %175 = vst [vmem:[%s3 + $0x8] sm:$0xff] %v173
    // Predicated region
    $region18: #{decoder_forward.30} parent=1 // pred_check
      _
    $region19: #{decoder_forward.30} parent=1 // pred_check_branch
      %177 = sbr.rel (0) target = $region21
    $region20: #{decoder_forward.30} parent=1 // pred_region
      _
    $region21: #{decoder_forward.30} parent=1 // pred_fallthru
      _
    // Predicated region
    $region22: #{decoder_forward.30} parent=1 // pred_check
      _
    $region23: #{decoder_forward.30} parent=1 // pred_check_branch
      %179 = sbr.rel (0) target = $region25
    $region24: #{decoder_forward.30} parent=1 // pred_region
      _
    $region25: #{decoder_forward.30} parent=1 // pred_fallthru
      _
    %180 = vsyncpa [#allocation3], 1

// kernel: decoder_forward.29
$region0: #{decoder_forward.29}
  #allocation0 [shape = 'u32[]', space=smem, size = 0x4, offset = 0x4, fixed_abs, tag = 'smem constant byte address 0x4 - core index']
  #allocation1 [shape = 'u32[72,128]{1,0:T(1,128)}', space=vmem, size = 0x9000, scoped, tag = 'internal scratch']
  #allocation2 [shape = 'f32[16,128]{1,0:T(8,128)}', space=vmem, size = 0x2000, scoped, tag = 'scratch operand']
  %s0 = inlined_call_operand.vmem [shape: bf16[16,128], index: 0, kind: input, shape index: {}]
  %s1 = inlined_call_operand.hbm [shape: bf16[128,128], index: 1, kind: input, shape index: {}]
  %s2 = inlined_call_operand.vmem [shape: f32[1,128], index: 2, kind: input, shape index: {}]
  %s3 = inlined_call_operand.vmem [shape: bf16[16,128], index: 3, kind: input, shape index: {}]
  %s4 = inlined_call_operand.vmem [shape: f32[1,128], index: 4, kind: input, shape index: {}]
  %s5 = inlined_call_operand.vmem [shape: f32[1,128], index: 5, kind: input, shape index: {}]
  %s6 = inlined_call_operand.vmem [shape: bf16[16,128], index: 6, kind: output, shape index: {}]
  %s7 = sld [smem:[#allocation0]]
  $region46: #{decoder_forward.29} parent=0
    _
  %s9 = ssub.s32 1, %s7
  %s10 = scalar_select 0, %s9, %s7
  $region1: #{decoder_forward.29} parent=0
    #allocation3 [shape = 'u8[32768]{0}', space=vmem, size = 0x8000, scoped, tag = 'input window, operand 1, single buffered']
    #allocation4 [shape = 's32[1]{0}', space=sflag, size = 0x4, scoped, tag = 'scoped memory for decoder_forward.29']
    %11 = vsyncpa [#allocation4], 0
    // Predicated region
    $region2: #{decoder_forward.29} parent=1 // pred_check
      _
    $region3: #{decoder_forward.29} parent=1 // pred_check_branch
      %13 = sbr.rel (0) target = $region5
    $region4: #{decoder_forward.29} parent=1 // pred_region
      _
    $region5: #{decoder_forward.29} parent=1 // pred_fallthru
      _
    // Predicated region
    $region6: #{decoder_forward.29} parent=1 // pred_check
      _
    $region7: #{decoder_forward.29} parent=1 // pred_check_branch
      %15 = sbr.rel (0) target = $region9
    $region8: #{decoder_forward.29} parent=1 // pred_region
      %17 = vsyncadd [#allocation4], 0
      %s18 = sshll.u32 %s1, 4
      %s19 = int_to_ptr.hbm [resolvable:$true] %s18
      %s20 = sshll.u32 [#allocation3], 4
      %s21 = int_to_ptr.vmem [resolvable:$true] %s20
      %26 = dma.hbm_to_vmem [thread:$0]  %s19, 1024, %s21, [#allocation4], 64, 64, 4
    $region9: #{decoder_forward.29} parent=1 // pred_fallthru
      _
    // Predicated region
    $region10: #{decoder_forward.29} parent=1 // pred_check
      _
    $region11: #{decoder_forward.29} parent=1 // pred_check_branch
      %28 = sbr.rel (0) target = $region13
    $region12: #{decoder_forward.29} parent=1 // pred_region
      _
    $region13: #{decoder_forward.29} parent=1 // pred_fallthru
      _
    // Predicated region
    $region14: #{decoder_forward.29} parent=1 // pred_check
      _
    $region15: #{decoder_forward.29} parent=1 // pred_check_branch
      %30 = sbr.rel (0) target = $region17
    $region16: #{decoder_forward.29} parent=1 // pred_region
      _
    $region17: #{decoder_forward.29} parent=1 // pred_fallthru
      _
    // Predicated region
    $region18: #{decoder_forward.29} parent=1 // pred_check
      _
    $region19: #{decoder_forward.29} parent=1 // pred_check_branch
      %32 = sbr.rel (0) target = $region21
    $region20: #{decoder_forward.29} parent=1 // pred_region
      _
    $region21: #{decoder_forward.29} parent=1 // pred_fallthru
      _
    // Predicated region
    $region22: #{decoder_forward.29} parent=1 // pred_check
      _
    $region23: #{decoder_forward.29} parent=1 // pred_check_branch
      %34 = sbr.rel (0) target = $region25
    $region24: #{decoder_forward.29} parent=1 // pred_region
      _
    $region25: #{decoder_forward.29} parent=1 // pred_fallthru
      _
    // Predicated region
    $region26: #{decoder_forward.29} parent=1 // pred_check
      _
    $region27: #{decoder_forward.29} parent=1 // pred_check_branch
      %36 = sbr.rel (0) target = $region29
    $region28: #{decoder_forward.29} parent=1 // pred_region
      %38 = dma.done [#allocation4], 1024
    $region29: #{decoder_forward.29} parent=1 // pred_fallthru
      _
    %p39 = scmp.eq.s32.totalorder 0, 0
    // Predicated region
    $region30: #{decoder_forward.29} parent=1 // pred_check
      %p40 = pneg %p39
    $region31: #{decoder_forward.29} parent=1 // pred_check_branch
      %42 = sbr.rel (%p40) target = $region33
    $region32: #{decoder_forward.29} parent=1 // pred_region
      %v43 = vld [vmem:[%s3] sm:$0xf]
      %v44 = vld [vmem:[%s3 + $0x4] sm:$0xf]
      %v45 = vunpack.c.l.bf16 %v43
      %v46 = vunpack.c.l.bf16 %v44
      %v47 = vld [vmem:[%s2] sm:$0x1]
      %v49 = vperm.slane %v47, 0
      %v51 = vadd.f32 %v45, %v49
      %v52 = vadd.f32 %v46, %v49
      %53 = vst [vmem:[#allocation2] sm:$0xff] %v51
      %54 = vst [vmem:[#allocation2 + $0x8] sm:$0xff] %v52
    $region33: #{decoder_forward.29} parent=1 // pred_fallthru
      _
    %v55 = vld [vmem:[#allocation2] sm:$0xff]
    %v56 = vld [vmem:[#allocation2 + $0x8] sm:$0xff]
    %v57 = vld [vmem:[%s0] sm:$0xf]
    %v58 = vld [vmem:[%s0 + $0x4] sm:$0xf]
    %v59 = vld [vmem:[#allocation3] sm:$0xf]
    %v60 = vld [vmem:[#allocation3 + $0x4] sm:$0xf]
    %v61 = vld [vmem:[#allocation3 + $0x8] sm:$0xf]
    %v62 = vld [vmem:[#allocation3 + $0xc] sm:$0xf]
    %v63 = vld [vmem:[#allocation3 + $0x10] sm:$0xf]
    %v64 = vld [vmem:[#allocation3 + $0x14] sm:$0xf]
    %v65 = vld [vmem:[#allocation3 + $0x18] sm:$0xf]
    %v66 = vld [vmem:[#allocation3 + $0x1c] sm:$0xf]
    %v67 = vld [vmem:[#allocation3 + $0x20] sm:$0xf]
    %v68 = vld [vmem:[#allocation3 + $0x24] sm:$0xf]
    %v69 = vld [vmem:[#allocation3 + $0x28] sm:$0xf]
    %v70 = vld [vmem:[#allocation3 + $0x2c] sm:$0xf]
    %v71 = vld [vmem:[#allocation3 + $0x30] sm:$0xf]
    %v72 = vld [vmem:[#allocation3 + $0x34] sm:$0xf]
    %v73 = vld [vmem:[#allocation3 + $0x38] sm:$0xf]
    %v74 = vld [vmem:[#allocation3 + $0x3c] sm:$0xf]
    %v77 = vunpack.c.l.b16 %v57
    %v78 = vunpack.c.l.b16 %v58
    %v79 = vpack.c.b16 %v78, %v77
    %v97 = vunpack.c.l.b16 %v59
    %v98 = vunpack.c.l.b16 %v60
    %v99 = vunpack.c.l.b16 %v61
    %v100 = vunpack.c.l.b16 %v62
    %v101 = vunpack.c.l.b16 %v63
    %v102 = vunpack.c.l.b16 %v64
    %v103 = vunpack.c.l.b16 %v65
    %v104 = vunpack.c.l.b16 %v66
    %v105 = vunpack.c.l.b16 %v67
    %v106 = vunpack.c.l.b16 %v68
    %v107 = vunpack.c.l.b16 %v69
    %v108 = vunpack.c.l.b16 %v70
    %v109 = vunpack.c.l.b16 %v71
    %v110 = vunpack.c.l.b16 %v72
    %v111 = vunpack.c.l.b16 %v73
    %v112 = vunpack.c.l.b16 %v74
    %v113 = vpack.c.b16 %v98, %v97
    %v114 = vpack.c.b16 %v100, %v99
    %v115 = vpack.c.b16 %v102, %v101
    %v116 = vpack.c.b16 %v104, %v103
    %v117 = vpack.c.b16 %v106, %v105
    %v118 = vpack.c.b16 %v108, %v107
    %v119 = vpack.c.b16 %v110, %v109
    %v120 = vpack.c.b16 %v112, %v111
    %129 = vmatpush.bf16.msra.mxu0 %v120
    %130 = vmatpush.bf16.msra.mxu0 %v119
    %131 = vmatpush.bf16.msra.mxu0 %v118
    %132 = vmatpush.bf16.msra.mxu0 %v117
    %133 = vmatpush.bf16.msra.mxu0 %v116
    %134 = vmatpush.bf16.msra.mxu0 %v115
    %135 = vmatpush.bf16.msra.mxu0 %v114
    %136 = vmatpush.bf16.msra.mxu0 %v113
    %137 = vmatmul.bf16.gmra.mxu0 %v79
    %v138 = vpop.f32.mrf.mxu0
    %v139 = vadd.f32 0.0, %v138
    %v140 = vpop.f32.mrf.mxu0
    %v141 = vadd.f32 0.0, %v140
    %142 = vdwg.mxu0
    %v143 = vadd.f32 %v55, %v139
    %v144 = vadd.f32 %v56, %v141
    %145 = vst [vmem:[#allocation2] sm:$0xff] %v143
    %146 = vst [vmem:[#allocation2 + $0x8] sm:$0xff] %v144
    // Predicated region
    $region34: #{decoder_forward.29} parent=1 // pred_check
      %p147 = pneg %p39
    $region35: #{decoder_forward.29} parent=1 // pred_check_branch
      %149 = sbr.rel (%p147) target = $region37
    $region36: #{decoder_forward.29} parent=1 // pred_region
      %v150 = vld [vmem:[#allocation2] sm:$0xff]
      %v151 = vld [vmem:[#allocation2 + $0x8] sm:$0xff]
      %152 = vadd.xlane.f32.xlu0 %v150
      %v153 = vpop.xlane.xlu0 %152
      %154 = vadd.xlane.f32.xlu0 %v151
      %v155 = vpop.xlane.xlu0 %154
      %v156 = vrcp.pop 128.0
      %v157 = vmul.f32 128.0, %v156
      %v158 = vsub.f32 1.0, %v157
      %v159 = vmul.f32 %v156, %v158
      %v160 = vadd.f32 %v156, %v159
      %vm161 = vweird.f32 %v156
      %v162 = vsel %vm161, %v156, %v160
      %v163 = vmul.f32 %v153, %v162
      %v164 = vmul.f32 %v155, %v162
      %v165 = vsub.f32 %v150, %v163
      %v166 = vsub.f32 %v151, %v164
      %v167 = vmul.f32 %v165, %v165
      %v168 = vmul.f32 %v166, %v166
      %169 = vadd.xlane.f32.xlu0 %v167
      %v170 = vpop.xlane.xlu0 %169
      %171 = vadd.xlane.f32.xlu0 %v168
      %v172 = vpop.xlane.xlu0 %171
      %v173 = vmul.f32 %v170, %v162
      %v174 = vmul.f32 %v172, %v162
      %v175 = vadd.f32 %v173, 1e-05
      %v176 = vadd.f32 %v174, 1e-05
      %v177 = vrsqrt.pop %v175
      %v178 = vmul.f32 %v177, %v175
      %v179 = vmul.f32 %v178, %v177
      %v180 = vmul.f32 0.5, %v179
      %v181 = vsub.f32 1.5, %v180
      %v182 = vmul.f32 %v177, %v181
      %vm183 = vweird.f32 %v175
      %vm184 = vweird.f32 %v177
      %vm185 = vmor %vm183, %vm184
      %v186 = vsel %vm185, %v177, %v182
      %v187 = vrsqrt.pop %v176
      %v188 = vmul.f32 %v187, %v176
      %v189 = vmul.f32 %v188, %v187
      %v190 = vmul.f32 0.5, %v189
      %v191 = vsub.f32 1.5, %v190
      %v192 = vmul.f32 %v187, %v191
      %vm193 = vweird.f32 %v176
      %vm194 = vweird.f32 %v187
      %vm195 = vmor %vm193, %vm194
      %v196 = vsel %vm195, %v187, %v192
      %v197 = vmul.f32 %v165, %v186
      %v198 = vmul.f32 %v166, %v196
      %v199 = vld [vmem:[%s4] sm:$0x1]
      %v201 = vperm.slane %v199, 0
      %v203 = vmul.f32 %v197, %v201
      %v204 = vmul.f32 %v198, %v201
      %v205 = vld [vmem:[%s5] sm:$0x1]
      %v207 = vperm.slane %v205, 0
      %v209 = vadd.f32 %v203, %v207
      %v210 = vadd.f32 %v204, %v207
      %v211 = vpack.c.bf16 %v209, %v209
      %v212 = vpack.c.bf16 %v210, %v210
      %213 = vst [vmem:[%s6] sm:$0xf] %v211
      %214 = vst [vmem:[%s6 + $0x4] sm:$0xf] %v212
    $region37: #{decoder_forward.29} parent=1 // pred_fallthru
      _
    // Predicated region
    $region38: #{decoder_forward.29} parent=1 // pred_check
      _
    $region39: #{decoder_forward.29} parent=1 // pred_check_branch
      %216 = sbr.rel (0) target = $region41
    $region40: #{decoder_forward.29} parent=1 // pred_region
      _
    $region41: #{decoder_forward.29} parent=1 // pred_fallthru
      _
    // Predicated region
    $region42: #{decoder_forward.29} parent=1 // pred_check
      _
    $region43: #{decoder_forward.29} parent=1 // pred_check_branch
      %218 = sbr.rel (0) target = $region45
    $region44: #{decoder_forward.29} parent=1 // pred_region
      _
    $region45: #{decoder_forward.29} parent=1 // pred_fallthru
      _
    %219 = vsyncpa [#allocation4], 1

// kernel: decoder_forward.31
$region0: #{decoder_forward.31}
  #allocation0 [shape = 'u32[]', space=smem, size = 0x4, offset = 0x4, fixed_abs, tag = 'smem constant byte address 0x4 - core index']
  #allocation1 [shape = 'u32[72,128]{1,0:T(1,128)}', space=vmem, size = 0x9000, scoped, tag = 'internal scratch']
  #allocation2 [shape = 'f32[16,128]{1,0:T(8,128)}', space=vmem, size = 0x2000, scoped, tag = 'scratch operand']
  %s0 = inlined_call_operand.vmem [shape: bf16[16,256], index: 0, kind: input, shape index: {}]
  %s1 = inlined_call_operand.hbm [shape: bf16[256,128], index: 1, kind: input, shape index: {}]
  %s2 = inlined_call_operand.vmem [shape: f32[1,128], index: 2, kind: input, shape index: {}]
  %s3 = inlined_call_operand.vmem [shape: bf16[16,128], index: 3, kind: input, shape index: {}]
  %s4 = inlined_call_operand.vmem [shape: f32[1,128], index: 4, kind: input, shape index: {}]
  %s5 = inlined_call_operand.vmem [shape: f32[1,128], index: 5, kind: input, shape index: {}]
  %s6 = inlined_call_operand.vmem [shape: bf16[16,128], index: 6, kind: output, shape index: {}]
  %s7 = sld [smem:[#allocation0]]
  $region46: #{decoder_forward.31} parent=0
    _
  %s9 = ssub.s32 1, %s7
  %s10 = scalar_select 0, %s9, %s7
  $region1: #{decoder_forward.31} parent=0
    #allocation3 [shape = 'u8[65536]{0}', space=vmem, size = 0x10000, scoped, tag = 'input window, operand 1, single buffered']
    #allocation4 [shape = 's32[1]{0}', space=sflag, size = 0x4, scoped, tag = 'scoped memory for decoder_forward.31']
    %11 = vsyncpa [#allocation4], 0
    // Predicated region
    $region2: #{decoder_forward.31} parent=1 // pred_check
      _
    $region3: #{decoder_forward.31} parent=1 // pred_check_branch
      %13 = sbr.rel (0) target = $region5
    $region4: #{decoder_forward.31} parent=1 // pred_region
      _
    $region5: #{decoder_forward.31} parent=1 // pred_fallthru
      _
    // Predicated region
    $region6: #{decoder_forward.31} parent=1 // pred_check
      _
    $region7: #{decoder_forward.31} parent=1 // pred_check_branch
      %15 = sbr.rel (0) target = $region9
    $region8: #{decoder_forward.31} parent=1 // pred_region
      %17 = vsyncadd [#allocation4], 0
      %s18 = sshll.u32 %s1, 4
      %s19 = int_to_ptr.hbm [resolvable:$true] %s18
      %s20 = sshll.u32 [#allocation3], 4
      %s21 = int_to_ptr.vmem [resolvable:$true] %s20
      %26 = dma.hbm_to_vmem [thread:$0]  %s19, 2048, %s21, [#allocation4], 64, 64, 4
    $region9: #{decoder_forward.31} parent=1 // pred_fallthru
      _
    // Predicated region
    $region10: #{decoder_forward.31} parent=1 // pred_check
      _
    $region11: #{decoder_forward.31} parent=1 // pred_check_branch
      %28 = sbr.rel (0) target = $region13
    $region12: #{decoder_forward.31} parent=1 // pred_region
      _
    $region13: #{decoder_forward.31} parent=1 // pred_fallthru
      _
    // Predicated region
    $region14: #{decoder_forward.31} parent=1 // pred_check
      _
    $region15: #{decoder_forward.31} parent=1 // pred_check_branch
      %30 = sbr.rel (0) target = $region17
    $region16: #{decoder_forward.31} parent=1 // pred_region
      _
    $region17: #{decoder_forward.31} parent=1 // pred_fallthru
      _
    // Predicated region
    $region18: #{decoder_forward.31} parent=1 // pred_check
      _
    $region19: #{decoder_forward.31} parent=1 // pred_check_branch
      %32 = sbr.rel (0) target = $region21
    $region20: #{decoder_forward.31} parent=1 // pred_region
      _
    $region21: #{decoder_forward.31} parent=1 // pred_fallthru
      _
    // Predicated region
    $region22: #{decoder_forward.31} parent=1 // pred_check
      _
    $region23: #{decoder_forward.31} parent=1 // pred_check_branch
      %34 = sbr.rel (0) target = $region25
    $region24: #{decoder_forward.31} parent=1 // pred_region
      _
    $region25: #{decoder_forward.31} parent=1 // pred_fallthru
      _
    // Predicated region
    $region26: #{decoder_forward.31} parent=1 // pred_check
      _
    $region27: #{decoder_forward.31} parent=1 // pred_check_branch
      %36 = sbr.rel (0) target = $region29
    $region28: #{decoder_forward.31} parent=1 // pred_region
      %38 = dma.done [#allocation4], 2048
    $region29: #{decoder_forward.31} parent=1 // pred_fallthru
      _
    %p39 = scmp.eq.s32.totalorder 0, 0
    // Predicated region
    $region30: #{decoder_forward.31} parent=1 // pred_check
      %p40 = pneg %p39
    $region31: #{decoder_forward.31} parent=1 // pred_check_branch
      %42 = sbr.rel (%p40) target = $region33
    $region32: #{decoder_forward.31} parent=1 // pred_region
      %v43 = vld [vmem:[%s3] sm:$0xf]
      %v44 = vld [vmem:[%s3 + $0x4] sm:$0xf]
      %v45 = vunpack.c.l.bf16 %v43
      %v46 = vunpack.c.l.bf16 %v44
      %v47 = vld [vmem:[%s2] sm:$0x1]
      %v49 = vperm.slane %v47, 0
      %v51 = vadd.f32 %v45, %v49
      %v52 = vadd.f32 %v46, %v49
      %53 = vst [vmem:[#allocation2] sm:$0xff] %v51
      %54 = vst [vmem:[#allocation2 + $0x8] sm:$0xff] %v52
    $region33: #{decoder_forward.31} parent=1 // pred_fallthru
      _
    %v55 = vld [vmem:[#allocation2] sm:$0xff]
    %v56 = vld [vmem:[#allocation2 + $0x8] sm:$0xff]
    %v57 = vld [vmem:[%s0] sm:$0xff]
    %v58 = vld [vmem:[%s0 + $0x8] sm:$0xff]
    %v59 = vld [vmem:[#allocation3] sm:$0xf]
    %v60 = vld [vmem:[#allocation3 + $0x4] sm:$0xf]
    %v61 = vld [vmem:[#allocation3 + $0x8] sm:$0xf]
    %v62 = vld [vmem:[#allocation3 + $0xc] sm:$0xf]
    %v63 = vld [vmem:[#allocation3 + $0x10] sm:$0xf]
    %v64 = vld [vmem:[#allocation3 + $0x14] sm:$0xf]
    %v65 = vld [vmem:[#allocation3 + $0x18] sm:$0xf]
    %v66 = vld [vmem:[#allocation3 + $0x1c] sm:$0xf]
    %v67 = vld [vmem:[#allocation3 + $0x20] sm:$0xf]
    %v68 = vld [vmem:[#allocation3 + $0x24] sm:$0xf]
    %v69 = vld [vmem:[#allocation3 + $0x28] sm:$0xf]
    %v70 = vld [vmem:[#allocation3 + $0x2c] sm:$0xf]
    %v71 = vld [vmem:[#allocation3 + $0x30] sm:$0xf]
    %v72 = vld [vmem:[#allocation3 + $0x34] sm:$0xf]
    %v73 = vld [vmem:[#allocation3 + $0x38] sm:$0xf]
    %v74 = vld [vmem:[#allocation3 + $0x3c] sm:$0xf]
    %v75 = vld [vmem:[#allocation3 + $0x40] sm:$0xf]
    %v76 = vld [vmem:[#allocation3 + $0x44] sm:$0xf]
    %v77 = vld [vmem:[#allocation3 + $0x48] sm:$0xf]
    %v78 = vld [vmem:[#allocation3 + $0x4c] sm:$0xf]
    %v79 = vld [vmem:[#allocation3 + $0x50] sm:$0xf]
    %v80 = vld [vmem:[#allocation3 + $0x54] sm:$0xf]
    %v81 = vld [vmem:[#allocation3 + $0x58] sm:$0xf]
    %v82 = vld [vmem:[#allocation3 + $0x5c] sm:$0xf]
    %v83 = vld [vmem:[#allocation3 + $0x60] sm:$0xf]
    %v84 = vld [vmem:[#allocation3 + $0x64] sm:$0xf]
    %v85 = vld [vmem:[#allocation3 + $0x68] sm:$0xf]
    %v86 = vld [vmem:[#allocation3 + $0x6c] sm:$0xf]
    %v87 = vld [vmem:[#allocation3 + $0x70] sm:$0xf]
    %v88 = vld [vmem:[#allocation3 + $0x74] sm:$0xf]
    %v89 = vld [vmem:[#allocation3 + $0x78] sm:$0xf]
    %v90 = vld [vmem:[#allocation3 + $0x7c] sm:$0xf]
    %v93 = vunpack.c.l.b16 %v57
    %v94 = vunpack.c.h.b16 %v57
    %v95 = vunpack.c.l.b16 %v58
    %v96 = vunpack.c.h.b16 %v58
    %v97 = vpack.c.b16 %v95, %v93
    %v98 = vpack.c.b16 %v96, %v94
    %v133 = vunpack.c.l.b16 %v59
    %v134 = vunpack.c.l.b16 %v60
    %v135 = vunpack.c.l.b16 %v61
    %v136 = vunpack.c.l.b16 %v62
    %v137 = vunpack.c.l.b16 %v63
    %v138 = vunpack.c.l.b16 %v64
    %v139 = vunpack.c.l.b16 %v65
    %v140 = vunpack.c.l.b16 %v66
    %v141 = vunpack.c.l.b16 %v67
    %v142 = vunpack.c.l.b16 %v68
    %v143 = vunpack.c.l.b16 %v69
    %v144 = vunpack.c.l.b16 %v70
    %v145 = vunpack.c.l.b16 %v71
    %v146 = vunpack.c.l.b16 %v72
    %v147 = vunpack.c.l.b16 %v73
    %v148 = vunpack.c.l.b16 %v74
    %v149 = vunpack.c.l.b16 %v75
    %v150 = vunpack.c.l.b16 %v76
    %v151 = vunpack.c.l.b16 %v77
    %v152 = vunpack.c.l.b16 %v78
    %v153 = vunpack.c.l.b16 %v79
    %v154 = vunpack.c.l.b16 %v80
    %v155 = vunpack.c.l.b16 %v81
    %v156 = vunpack.c.l.b16 %v82
    %v157 = vunpack.c.l.b16 %v83
    %v158 = vunpack.c.l.b16 %v84
    %v159 = vunpack.c.l.b16 %v85
    %v160 = vunpack.c.l.b16 %v86
    %v161 = vunpack.c.l.b16 %v87
    %v162 = vunpack.c.l.b16 %v88
    %v163 = vunpack.c.l.b16 %v89
    %v164 = vunpack.c.l.b16 %v90
    %v165 = vpack.c.b16 %v134, %v133
    %v166 = vpack.c.b16 %v136, %v135
    %v167 = vpack.c.b16 %v138, %v137
    %v168 = vpack.c.b16 %v140, %v139
    %v169 = vpack.c.b16 %v142, %v141
    %v170 = vpack.c.b16 %v144, %v143
    %v171 = vpack.c.b16 %v146, %v145
    %v172 = vpack.c.b16 %v148, %v147
    %v173 = vpack.c.b16 %v150, %v149
    %v174 = vpack.c.b16 %v152, %v151
    %v175 = vpack.c.b16 %v154, %v153
    %v176 = vpack.c.b16 %v156, %v155
    %v177 = vpack.c.b16 %v158, %v157
    %v178 = vpack.c.b16 %v160, %v159
    %v179 = vpack.c.b16 %v162, %v161
    %v180 = vpack.c.b16 %v164, %v163
    %197 = vmatpush.bf16.msra.mxu0 %v172
    %198 = vmatpush.bf16.msra.mxu0 %v171
    %199 = vmatpush.bf16.msra.mxu0 %v170
    %200 = vmatpush.bf16.msra.mxu0 %v169
    %201 = vmatpush.bf16.msra.mxu0 %v168
    %202 = vmatpush.bf16.msra.mxu0 %v167
    %203 = vmatpush.bf16.msra.mxu0 %v166
    %204 = vmatpush.bf16.msra.mxu0 %v165
    %205 = vmatmul.bf16.gmra.mxu0 %v97
    %v206 = vpop.f32.mrf.mxu0
    %v207 = vadd.f32 0.0, %v206
    %v208 = vpop.f32.mrf.mxu0
    %v209 = vadd.f32 0.0, %v208
    %210 = vdwg.mxu0
    %211 = vmatpush.bf16.msra.mxu0 %v180
    %212 = vmatpush.bf16.msra.mxu0 %v179
    %213 = vmatpush.bf16.msra.mxu0 %v178
    %214 = vmatpush.bf16.msra.mxu0 %v177
    %215 = vmatpush.bf16.msra.mxu0 %v176
    %216 = vmatpush.bf16.msra.mxu0 %v175
    %217 = vmatpush.bf16.msra.mxu0 %v174
    %218 = vmatpush.bf16.msra.mxu0 %v173
    %219 = vmatmul.bf16.gmra.mxu0 %v98
    %v220 = vpop.f32.mrf.mxu0
    %v221 = vadd.f32 %v207, %v220
    %v222 = vpop.f32.mrf.mxu0
    %v223 = vadd.f32 %v209, %v222
    %224 = vdwg.mxu0
    %v225 = vadd.f32 %v55, %v221
    %v226 = vadd.f32 %v56, %v223
    %227 = vst [vmem:[#allocation2] sm:$0xff] %v225
    %228 = vst [vmem:[#allocation2 + $0x8] sm:$0xff] %v226
    // Predicated region
    $region34: #{decoder_forward.31} parent=1 // pred_check
      %p229 = pneg %p39
    $region35: #{decoder_forward.31} parent=1 // pred_check_branch
      %231 = sbr.rel (%p229) target = $region37
    $region36: #{decoder_forward.31} parent=1 // pred_region
      %v232 = vld [vmem:[#allocation2] sm:$0xff]
      %v233 = vld [vmem:[#allocation2 + $0x8] sm:$0xff]
      %234 = vadd.xlane.f32.xlu0 %v232
      %v235 = vpop.xlane.xlu0 %234
      %236 = vadd.xlane.f32.xlu0 %v233
      %v237 = vpop.xlane.xlu0 %236
      %v238 = vrcp.pop 128.0
      %v239 = vmul.f32 128.0, %v238
      %v240 = vsub.f32 1.0, %v239
      %v241 = vmul.f32 %v238, %v240
      %v242 = vadd.f32 %v238, %v241
      %vm243 = vweird.f32 %v238
      %v244 = vsel %vm243, %v238, %v242
      %v245 = vmul.f32 %v235, %v244
      %v246 = vmul.f32 %v237, %v244
      %v247 = vsub.f32 %v232, %v245
      %v248 = vsub.f32 %v233, %v246
      %v249 = vmul.f32 %v247, %v247
      %v250 = vmul.f32 %v248, %v248
      %251 = vadd.xlane.f32.xlu0 %v249
      %v252 = vpop.xlane.xlu0 %251
      %253 = vadd.xlane.f32.xlu0 %v250
      %v254 = vpop.xlane.xlu0 %253
      %v255 = vmul.f32 %v252, %v244
      %v256 = vmul.f32 %v254, %v244
      %v257 = vadd.f32 %v255, 1e-05
      %v258 = vadd.f32 %v256, 1e-05
      %v259 = vrsqrt.pop %v257
      %v260 = vmul.f32 %v259, %v257
      %v261 = vmul.f32 %v260, %v259
      %v262 = vmul.f32 0.5, %v261
      %v263 = vsub.f32 1.5, %v262
      %v264 = vmul.f32 %v259, %v263
      %vm265 = vweird.f32 %v257
      %vm266 = vweird.f32 %v259
      %vm267 = vmor %vm265, %vm266
      %v268 = vsel %vm267, %v259, %v264
      %v269 = vrsqrt.pop %v258
      %v270 = vmul.f32 %v269, %v258
      %v271 = vmul.f32 %v270, %v269
      %v272 = vmul.f32 0.5, %v271
      %v273 = vsub.f32 1.5, %v272
      %v274 = vmul.f32 %v269, %v273
      %vm275 = vweird.f32 %v258
      %vm276 = vweird.f32 %v269
      %vm277 = vmor %vm275, %vm276
      %v278 = vsel %vm277, %v269, %v274
      %v279 = vmul.f32 %v247, %v268
      %v280 = vmul.f32 %v248, %v278
      %v281 = vld [vmem:[%s4] sm:$0x1]
      %v283 = vperm.slane %v281, 0
      %v285 = vmul.f32 %v279, %v283
      %v286 = vmul.f32 %v280, %v283
      %v287 = vld [vmem:[%s5] sm:$0x1]
      %v289 = vperm.slane %v287, 0
      %v291 = vadd.f32 %v285, %v289
      %v292 = vadd.f32 %v286, %v289
      %v293 = vpack.c.bf16 %v291, %v291
      %v294 = vpack.c.bf16 %v292, %v292
      %295 = vst [vmem:[%s6] sm:$0xf] %v293
      %296 = vst [vmem:[%s6 + $0x4] sm:$0xf] %v294
    $region37: #{decoder_forward.31} parent=1 // pred_fallthru
      _
    // Predicated region
    $region38: #{decoder_forward.31} parent=1 // pred_check
      _
    $region39: #{decoder_forward.31} parent=1 // pred_check_branch
      %298 = sbr.rel (0) target = $region41
    $region40: #{decoder_forward.31} parent=1 // pred_region
      _
    $region41: #{decoder_forward.31} parent=1 // pred_fallthru
      _
    // Predicated region
    $region42: #{decoder_forward.31} parent=1 // pred_check
      _
    $region43: #{decoder_forward.31} parent=1 // pred_check_branch
      %300 = sbr.rel (0) target = $region45
    $region44: #{decoder_forward.31} parent=1 // pred_region
      _
    $region45: #{decoder_forward.31} parent=1 // pred_fallthru
      _
    %301 = vsyncpa [#allocation4], 1

// kernel: decoder_forward.37
$region0: #{decoder_forward.37}
  #allocation0 [shape = 'u32[]', space=smem, size = 0x4, offset = 0x4, fixed_abs, tag = 'smem constant byte address 0x4 - core index']
  #allocation1 [shape = 'u32[72,128]{1,0:T(1,128)}', space=vmem, size = 0x9000, scoped, tag = 'internal scratch']
  %s0 = inlined_call_operand.vmem [shape: bf16[2,8,128], index: 0, kind: input, shape index: {}]
  %s1 = inlined_call_operand.vmem [shape: bf16[2,8,256], index: 1, kind: input, shape index: {}, may-alias: {1,2}]
  %s2 = inlined_call_operand.vmem [shape: bf16[2,8,256], index: 2, kind: input, shape index: {}, may-alias: {1,2}]
  %s3 = inlined_call_operand.vmem [shape: f32[2,1,8], index: 3, kind: input, shape index: {}]
  %s4 = inlined_call_operand.vmem [shape: bf16[2,8,128], index: 4, kind: output, shape index: {0}]
  %s5 = inlined_call_operand.hbm [shape: f32[2,8,8], index: 5, kind: output, shape index: {1}]
  %6 = xla_tuple %s4, %s5
  %s7 = sld [smem:[#allocation0]]
  $region57: #{decoder_forward.37} parent=0
    _
  %s9 = ssub.s32 1, %s7
  %s10 = scalar_select 0, %s9, %s7
  $region1: #{decoder_forward.37} parent=0
    #allocation2 [shape = 'u8[8192]{0}', space=vmem, size = 0x2000, scoped, tag = 'output window, operand 1']
    #allocation3 [shape = 's32[2]{0}', space=sflag, size = 0x8, scoped, tag = 'scoped memory for decoder_forward.37']
    %11 = vsyncpa [#allocation3], 0
    %s12 = scalar_lea.sflag [#allocation3], 1
    %13 = vsyncpa %s12, 0
    loop: start=0, step=1, limit=4
    $region2: #{decoder_forward.37} parent=1 // loop_pre_header
      _
    $region3: #{decoder_forward.37} parent=1 // loop_header
      %s15 = sphi 0, %s19
      %p16 = scmp.ge.s32.totalorder %s15, 4
      %s22 = sphi 0, %s34
      %s23 = sphi 0, %s30
      %s24 = sphi 0, %s22
      %s25 = sphi 0, %s23
      %s26 = sphi 0, %s24
      %s27 = sphi 0, %s25
      %s39 = sphi 0, %s41
      %s42 = sphi 0, %s39
      %s43 = sphi 0, %s42
      %s59 = sphi 0, %s43
      %s65 = sphi 0, %s67
      %s68 = sphi 0, %s65
      %s69 = sphi 0, %s68
      %s85 = sphi 0, %s69
      %s91 = sphi 0, %s93
      %s94 = sphi 0, %s91
      %s95 = sphi 0, %s94
      %s111 = sphi 0, %s95
      %s117 = sphi 0, %s119
      %s120 = sphi 0, %s117
      %s121 = sphi 0, %s120
      %s137 = sphi 0, %s121
      %s145 = sphi 0, %s147
      %s148 = sphi 0, %s145
      %s149 = sphi 0, %s148
      %s165 = sphi 0, %s149
      %s173 = sphi 0, %s175
      %s176 = sphi 0, %s173
      %s177 = sphi 0, %s176
      %s193 = sphi 0, %s177
    $region4: #{decoder_forward.37} parent=1 // loop_header_branch
      %18 = sbr.rel (%p16) target = $region8
    $region5: #{decoder_forward.37} parent=1 // loop_body
      %s20 = ssub.s32 %s15, 1
      %s21 = ssub.s32 %s15, 2
      %s28 = sadd.s32 1, %s23
      %p29 = scmp.ge.s32.totalorder %s28, 1
      %s30 = scalar_select %p29, 0, %s28
      %s31 = sadd.s32 1, %s22
      %s32 = scalar_select %p29, %s31, %s22
      %p33 = scmp.ge.s32.totalorder %s32, 2
      %s34 = scalar_select %p33, 0, %s32
      %s35 = ssub.s32 %s22, %s34
      %s36 = ssub.s32 %s23, %s30
      %s37 = sor.u32 %s35, %s36
      %p38 = scmp.eq.s32.totalorder %s37, 0
      %s40 = sadd.s32 %s39, 1
      %s41 = scalar_select %p38, %s39, %s40
      %p44 = pneg %p38
      %p45 = scmp.eq.s32.totalorder %s15, 1
      %p46 = por %p44, %p45
      %p47 = scmp.ne.s32.totalorder %s39, %s42
      %p48 = scmp.eq.s32.totalorder %s15, 0
      %p49 = por %p47, %p48
      %p50 = scmp.ne.s32.totalorder %s39, %s42
      %p51 = scmp.eq.s32.totalorder %s20, 1
      %p52 = por %p50, %p51
      %p53 = scmp.ne.s32.totalorder %s42, %s43
      %p54 = scmp.eq.s32.totalorder %s20, 0
      %p55 = por %p53, %p54
      %p56 = scmp.ne.s32.totalorder %s42, %s43
      %p57 = scmp.eq.s32.totalorder %s21, 1
      %p58 = por %p56, %p57
      %p60 = scmp.ne.s32.totalorder %s43, %s59
      %p61 = scmp.eq.s32.totalorder %s21, 0
      %p62 = por %p60, %p61
      %s63 = ssub.s32 %s22, %s34
      %p64 = scmp.eq.s32.totalorder %s63, 0
      %s66 = sadd.s32 %s65, 1
      %s67 = scalar_select %p64, %s65, %s66
      %p70 = pneg %p64
      %p71 = scmp.eq.s32.totalorder %s15, 1
      %p72 = por %p70, %p71
      %p73 = scmp.ne.s32.totalorder %s65, %s68
      %p74 = scmp.eq.s32.totalorder %s15, 0
      %p75 = por %p73, %p74
      %p76 = scmp.ne.s32.totalorder %s65, %s68
      %p77 = scmp.eq.s32.totalorder %s20, 1
      %p78 = por %p76, %p77
      %p79 = scmp.ne.s32.totalorder %s68, %s69
      %p80 = scmp.eq.s32.totalorder %s20, 0
      %p81 = por %p79, %p80
      %p82 = scmp.ne.s32.totalorder %s68, %s69
      %p83 = scmp.eq.s32.totalorder %s21, 1
      %p84 = por %p82, %p83
      %p86 = scmp.ne.s32.totalorder %s69, %s85
      %p87 = scmp.eq.s32.totalorder %s21, 0
      %p88 = por %p86, %p87
      %s89 = ssub.s32 %s22, %s34
      %p90 = scmp.eq.s32.totalorder %s89, 0
      %s92 = sadd.s32 %s91, 1
      %s93 = scalar_select %p90, %s91, %s92
      %p96 = pneg %p90
      %p97 = scmp.eq.s32.totalorder %s15, 1
      %p98 = por %p96, %p97
      %p99 = scmp.ne.s32.totalorder %s91, %s94
      %p100 = scmp.eq.s32.totalorder %s15, 0
      %p101 = por %p99, %p100
      %p102 = scmp.ne.s32.totalorder %s91, %s94
      %p103 = scmp.eq.s32.totalorder %s20, 1
      %p104 = por %p102, %p103
      %p105 = scmp.ne.s32.totalorder %s94, %s95
      %p106 = scmp.eq.s32.totalorder %s20, 0
      %p107 = por %p105, %p106
      %p108 = scmp.ne.s32.totalorder %s94, %s95
      %p109 = scmp.eq.s32.totalorder %s21, 1
      %p110 = por %p108, %p109
      %p112 = scmp.ne.s32.totalorder %s95, %s111
      %p113 = scmp.eq.s32.totalorder %s21, 0
      %p114 = por %p112, %p113
      %s115 = ssub.s32 %s22, %s34
      %p116 = scmp.eq.s32.totalorder %s115, 0
      %s118 = sadd.s32 %s117, 1
      %s119 = scalar_select %p116, %s117, %s118
      %p122 = pneg %p116
      %p123 = scmp.eq.s32.totalorder %s15, 1
      %p124 = por %p122, %p123
      %p125 = scmp.ne.s32.totalorder %s117, %s120
      %p126 = scmp.eq.s32.totalorder %s15, 0
      %p127 = por %p125, %p126
      %p128 = scmp.ne.s32.totalorder %s117, %s120
      %p129 = scmp.eq.s32.totalorder %s20, 1
      %p130 = por %p128, %p129
      %p131 = scmp.ne.s32.totalorder %s120, %s121
      %p132 = scmp.eq.s32.totalorder %s20, 0
      %p133 = por %p131, %p132
      %p134 = scmp.ne.s32.totalorder %s120, %s121
      %p135 = scmp.eq.s32.totalorder %s21, 1
      %p136 = por %p134, %p135
      %p138 = scmp.ne.s32.totalorder %s121, %s137
      %p139 = scmp.eq.s32.totalorder %s21, 0
      %p140 = por %p138, %p139
      %s141 = ssub.s32 %s22, %s34
      %s142 = ssub.s32 %s23, %s30
      %s143 = sor.u32 %s141, %s142
      %p144 = scmp.eq.s32.totalorder %s143, 0
      %s146 = sadd.s32 %s145, 1
      %s147 = scalar_select %p144, %s145, %s146
      %p150 = pneg %p144
      %p151 = scmp.eq.s32.totalorder %s15, 1
      %p152 = por %p150, %p151
      %p153 = scmp.ne.s32.totalorder %s145, %s148
      %p154 = scmp.eq.s32.totalorder %s15, 0
      %p155 = por %p153, %p154
      %p156 = scmp.ne.s32.totalorder %s145, %s148
      %p157 = scmp.eq.s32.totalorder %s20, 1
      %p158 = por %p156, %p157
      %p159 = scmp.ne.s32.totalorder %s148, %s149
      %p160 = scmp.eq.s32.totalorder %s20, 0
      %p161 = por %p159, %p160
      %p162 = scmp.ne.s32.totalorder %s148, %s149
      %p163 = scmp.eq.s32.totalorder %s21, 1
      %p164 = por %p162, %p163
      %p166 = scmp.ne.s32.totalorder %s149, %s165
      %p167 = scmp.eq.s32.totalorder %s21, 0
      %p168 = por %p166, %p167
      %s169 = ssub.s32 %s22, %s34
      %s170 = ssub.s32 %s23, %s30
      %s171 = sor.u32 %s169, %s170
      %p172 = scmp.eq.s32.totalorder %s171, 0
      %s174 = sadd.s32 %s173, 1
      %s175 = scalar_select %p172, %s173, %s174
      %p178 = pneg %p172
      %p179 = scmp.eq.s32.totalorder %s15, 1
      %p180 = por %p178, %p179
      %p181 = scmp.ne.s32.totalorder %s173, %s176
      %p182 = scmp.eq.s32.totalorder %s15, 0
      %p183 = por %p181, %p182
      %p184 = scmp.ne.s32.totalorder %s173, %s176
      %p185 = scmp.eq.s32.totalorder %s20, 1
      %p186 = por %p184, %p185
      %p187 = scmp.ne.s32.totalorder %s176, %s177
      %p188 = scmp.eq.s32.totalorder %s20, 0
      %p189 = por %p187, %p188
      %p190 = scmp.ne.s32.totalorder %s176, %s177
      %p191 = scmp.eq.s32.totalorder %s21, 1
      %p192 = por %p190, %p191
      %p194 = scmp.ne.s32.totalorder %s177, %s193
      %p195 = scmp.eq.s32.totalorder %s21, 0
      %p196 = por %p194, %p195
      %p197 = scmp.le.s32.totalorder 1, %s15
      %p198 = scmp.lt.s32.totalorder %s15, 3
      %p199 = pnand %p197, %p198
      %p200 = pneg %p199
      // Predicated region
      $region9: #{decoder_forward.37} parent=5 // pred_check
        _
      $region10: #{decoder_forward.37} parent=5 // pred_check_branch
        %202 = sbr.rel (%p199) target = $region12
      $region11: #{decoder_forward.37} parent=5 // pred_region
        %s203 = ssub.s32 %s15, 1
      $region12: #{decoder_forward.37} parent=5 // pred_fallthru
        _
      %p204 = scmp.lt.s32.totalorder %s15, 2
      // Predicated region
      $region13: #{decoder_forward.37} parent=5 // pred_check
        %p205 = pneg %p204
      $region14: #{decoder_forward.37} parent=5 // pred_check_branch
        %207 = sbr.rel (%p205) target = $region16
      $region15: #{decoder_forward.37} parent=5 // pred_region
        // Predicated region
        $region17: #{decoder_forward.37} parent=15 // pred_check
          %p208 = pneg %p49
        $region18: #{decoder_forward.37} parent=15 // pred_check_branch
          %210 = sbr.rel (%p208) target = $region20
        $region19: #{decoder_forward.37} parent=15 // pred_region
          %p211 = scmp.lt.s32.totalorder %s22, 1
          %s212 = scalar_select %p211, %s22, 1
          %p213 = scmp.lt.s32.totalorder %s23, 0
          %s214 = scalar_select %p213, %s23, 0
          %s215 = sadd.s32 %s214, %s212
          %s216 = smul.addr %s215, 4
          %s217 = scalar_lea.vmem %s0, %s216
        $region20: #{decoder_forward.37} parent=15 // pred_fallthru
          _
        // Predicated region
        $region21: #{decoder_forward.37} parent=15 // pred_check
          %p218 = pneg %p75
        $region22: #{decoder_forward.37} parent=15 // pred_check_branch
          %220 = sbr.rel (%p218) target = $region24
        $region23: #{decoder_forward.37} parent=15 // pred_region
          %p221 = scmp.lt.s32.totalorder %s22, 1
          %s222 = scalar_select %p221, %s22, 1
          %s223 = smul.addr %s222, 2
          %s224 = smul.addr %s223, 4
          %s225 = scalar_lea.vmem %s1, %s224
        $region24: #{decoder_forward.37} parent=15 // pred_fallthru
          _
        // Predicated region
        $region25: #{decoder_forward.37} parent=15 // pred_check
          %p226 = pneg %p101
        $region26: #{decoder_forward.37} parent=15 // pred_check_branch
          %228 = sbr.rel (%p226) target = $region28
        $region27: #{decoder_forward.37} parent=15 // pred_region
          %p229 = scmp.lt.s32.totalorder %s22, 1
          %s230 = scalar_select %p229, %s22, 1
          %s231 = smul.addr %s230, 2
          %s232 = sadd.s32 1, %s231
          %s233 = smul.addr %s232, 4
          %s234 = scalar_lea.vmem %s2, %s233
        $region28: #{decoder_forward.37} parent=15 // pred_fallthru
          _
        // Predicated region
        $region29: #{decoder_forward.37} parent=15 // pred_check
          %p235 = pneg %p127
        $region30: #{decoder_forward.37} parent=15 // pred_check_branch
          %237 = sbr.rel (%p235) target = $region32
        $region31: #{decoder_forward.37} parent=15 // pred_region
          %p238 = scmp.lt.s32.totalorder %s22, 1
          %s239 = scalar_select %p238, %s22, 1
          %s240 = scalar_lea.vmem %s3, %s239
        $region32: #{decoder_forward.37} parent=15 // pred_fallthru
          _
      $region16: #{decoder_forward.37} parent=5 // pred_fallthru
        _
      %p241 = scmp.le.s32.totalorder 1, %s15
      %p242 = scmp.lt.s32.totalorder %s15, 3
      %p243 = pnand %p241, %p242
      %p244 = pneg %p243
      // Predicated region
      $region33: #{decoder_forward.37} parent=5 // pred_check
        _
      $region34: #{decoder_forward.37} parent=5 // pred_check_branch
        %246 = sbr.rel (%p243) target = $region36
      $region35: #{decoder_forward.37} parent=5 // pred_region
        %s247 = ssub.s32 %s15, 1
        %p248 = scmp.lt.s32.totalorder %s24, 1
        %s249 = scalar_select %p248, %s24, 1
        %p250 = scmp.lt.s32.totalorder %s25, 0
        %s251 = scalar_select %p250, %s25, 0
        %s252 = sadd.s32 %s251, %s249
        %s253 = smul.addr %s252, 4
        %s254 = scalar_lea.vmem %s0, %s253
        %p255 = pneg %p55
        %p256 = pneg %p52
        %p257 = scmp.lt.s32.totalorder %s24, 1
        %s258 = scalar_select %p257, %s24, 1
        %s259 = smul.addr %s258, 2
        %s260 = smul.addr %s259, 4
        %s261 = scalar_lea.vmem %s1, %s260
        %p262 = pneg %p81
        %p263 = pneg %p78
        %p264 = scmp.lt.s32.totalorder %s24, 1
        %s265 = scalar_select %p264, %s24, 1
        %s266 = smul.addr %s265, 2
        %s267 = sadd.s32 1, %s266
        %s268 = smul.addr %s267, 4
        %s269 = scalar_lea.vmem %s2, %s268
        %p270 = pneg %p107
        %p271 = pneg %p104
        %p272 = scmp.lt.s32.totalorder %s24, 1
        %s273 = scalar_select %p272, %s24, 1
        %s274 = scalar_lea.vmem %s3, %s273
        %p275 = pneg %p133
        %p276 = pneg %p130
        %p277 = pneg %p161
        %p278 = pneg %p158
        %p279 = scmp.lt.s32.totalorder %s24, 1
        %s280 = scalar_select %p279, %s24, 1
        %p281 = scmp.lt.s32.totalorder %s25, 0
        %s282 = scalar_select %p281, %s25, 0
        %s283 = sadd.s32 %s282, %s280
        %s284 = smul.addr %s283, 4
        %s285 = scalar_lea.vmem %s4, %s284
        %p286 = pneg %p189
        %p287 = pneg %p186
        %s288 = sand.u32 %s176, 1
        %s289 = scalar_lea.sflag [#allocation3], %s288
        %s290 = sand.u32 %s176, 1
        %s291 = smul.addr %s290, 8
        %s292 = scalar_lea.vmem [#allocation2], %s291
        %p293 = scmp.lt.s32.totalorder %s24, 1
        %s294 = scalar_select %p293, %s24, 1
        %p295 = scmp.lt.s32.totalorder %s25, 0
        %s296 = scalar_select %p295, %s25, 0
        %s297 = sadd.s32 %s296, %s294
        %s298 = smul.addr %s297, 4
        %s299 = scalar_lea.vmem %s0, %s298
        %p300 = scmp.lt.s32.totalorder %s24, 1
        %s301 = scalar_select %p300, %s24, 1
        %s302 = smul.addr %s301, 2
        %s303 = smul.addr %s302, 4
        %s304 = scalar_lea.vmem %s1, %s303
        %p305 = scmp.lt.s32.totalorder %s24, 1
        %s306 = scalar_select %p305, %s24, 1
        %s307 = smul.addr %s306, 2
        %s308 = sadd.s32 1, %s307
        %s309 = smul.addr %s308, 4
        %s310 = scalar_lea.vmem %s2, %s309
        %p311 = scmp.lt.s32.totalorder %s24, 1
        %s312 = scalar_select %p311, %s24, 1
        %s313 = scalar_lea.vmem %s3, %s312
        %p314 = scmp.lt.s32.totalorder %s24, 1
        %s315 = scalar_select %p314, %s24, 1
        %p316 = scmp.lt.s32.totalorder %s25, 0
        %s317 = scalar_select %p316, %s25, 0
        %s318 = sadd.s32 %s317, %s315
        %s319 = smul.addr %s318, 4
        %s320 = scalar_lea.vmem %s4, %s319
        %v322 = vld [vmem:[%s313] sm:$0x1]
        %v323 = vld [vmem:[%s299] sm:$0xf]
        %v324 = vunpack.c.l.bf16 %v323
        %v325 = vmul.f32 %v324, 0.17675781
        %v326 = vpack.c.bf16 %v325, %v325
        %v327 = vld [vmem:[%s304] sm:$0xf]
        %v328 = vld [vmem:[%s310] sm:$0xf]
        %v330 = vperm.slane %v322, 0
        %vm332 = vcmask 261120
        %v334 = vsel %vm332, %v326, 0
        %v337 = vsel %vm332, %v327, 0
        %339 = vmatpush.bf16.xpose.msra.mxu0 0
        %340 = vmatpush.bf16.xpose.msra.mxu0 0
        %341 = vmatpush.bf16.xpose.msra.mxu0 0
        %342 = vmatpush.bf16.xpose.msra.mxu0 0
        %343 = vmatpush.bf16.xpose.msra.mxu0 0
        %344 = vmatpush.bf16.xpose.msra.mxu0 0
        %345 = vmatpush.bf16.xpose.msra.mxu0 0
        %346 = vmatpush.bf16.xpose.msra.mxu0 %v337
        %347 = vmatmul.bf16.gmra.mxu0 %v334
        %v348 = vpop.f32.mrf.mxu0
        %v349 = vadd.f32 %v330, %v348
        %v350 = vpop.f32.mrf.mxu0
        %351 = vdwg.mxu0
        %vm352 = vcmask 64512
        %v353 = vsel %vm352, %v349, -inf
        %354 = vmax.xlane.f32.xlu0 %v353
        %v355 = vpop.xlane.xlu0 %354
        %v356 = vsub.f32 %v349, %v355
        %v357 = vmul.f32 %v356, 1.442695
        %v358 = vpow.pop %v357
        %v359 = vsel %vm352, %v358, 0.0
        %360 = vadd.xlane.f32.xlu0 %v359
        %v361 = vpop.xlane.xlu0 %360
        %v362 = vrcp.pop %v361
        %v363 = vmul.f32 %v358, %v362
        %v364 = vadd.f32 %v363, 0.0
        %v365 = vpack.c.bf16 %v363, %v363
        %v367 = vsel %vm352, %v365, 0
        %vm369 = vcmask 1043456
        %v371 = vsel %vm369, %v328, 0
        %373 = vmatpush.bf16.msra.mxu0 0
        %374 = vmatpush.bf16.msra.mxu0 0
        %375 = vmatpush.bf16.msra.mxu0 0
        %376 = vmatpush.bf16.msra.mxu0 0
        %377 = vmatpush.bf16.msra.mxu0 0
        %378 = vmatpush.bf16.msra.mxu0 0
        %379 = vmatpush.bf16.msra.mxu0 0
        %380 = vmatpush.bf16.msra.mxu0 %v371
        %381 = vmatmul.bf16.gmra.mxu0 %v367
        %v382 = vpop.f32.mrf.mxu0
        %v383 = vadd.f32 0.0, %v382
        %v384 = vpop.f32.mrf.mxu0
        %385 = vdwg.mxu0
        %v386 = vpack.c.bf16 %v383, %v383
        %vm387 = vcmask 257024
        %388 = vst.msk [vmem:[%s320] sm:$0xf] %vm387, %v386
        %v389 = vld [vmem:[%s299] sm:$0xf]
        %v390 = vunpack.c.l.bf16 %v389
        %v391 = vmul.f32 %v390, 0.17675781
        %v392 = vpack.c.bf16 %v391, %v391
        %v393 = vld [vmem:[%s304] sm:$0xf]
        %v394 = vld [vmem:[%s310] sm:$0xf]
        %396 = vrot.lane.b32.xlu0 %v392, 96
        %v397 = vpop.permute.xlu0 %396
        %v399 = vunpack.c.l.b16 %v393
        %v400 = vpack.c.b16 %v399, %v399
        %401 = vrot.lane.b32.xlu0 %v400, 96
        %v402 = vpop.permute.xlu0 %401
        %v404 = vsel %vm332, %v397, 0
        %v407 = vsel %vm332, %v402, 0
        %409 = vmatpush.bf16.xpose.msra.mxu0 0
        %410 = vmatpush.bf16.xpose.msra.mxu0 0
        %411 = vmatpush.bf16.xpose.msra.mxu0 0
        %412 = vmatpush.bf16.xpose.msra.mxu0 0
        %413 = vmatpush.bf16.xpose.msra.mxu0 0
        %414 = vmatpush.bf16.xpose.msra.mxu0 0
        %415 = vmatpush.bf16.xpose.msra.mxu0 0
        %416 = vmatpush.bf16.xpose.msra.mxu0 %v407
        %417 = vmatmul.bf16.gmra.mxu0 %v404
        %v418 = vpop.f32.mrf.mxu0
        %v419 = vadd.f32 %v330, %v418
        %v420 = vpop.f32.mrf.mxu0
        %421 = vdwg.mxu0
        %v422 = vsel %vm352, %v419, -inf
        %423 = vmax.xlane.f32.xlu0 %v422
        %v424 = vpop.xlane.xlu0 %423
        %v425 = vsub.f32 %v419, %v424
        %v426 = vmul.f32 %v425, 1.442695
        %v427 = vpow.pop %v426
        %v428 = vsel %vm352, %v427, 0.0
        %429 = vadd.xlane.f32.xlu0 %v428
        %v430 = vpop.xlane.xlu0 %429
        %v431 = vrcp.pop %v430
        %v432 = vmul.f32 %v427, %v431
        %v433 = vadd.f32 %v364, %v432
        %v434 = vpack.c.bf16 %v432, %v432
        %v436 = vunpack.c.l.b16 %v394
        %v437 = vpack.c.b16 %v436, %v436
        %438 = vrot.lane.b32.xlu0 %v437, 96
        %v439 = vpop.permute.xlu0 %438
        %v441 = vsel %vm352, %v434, 0
        %v444 = vsel %vm369, %v439, 0
        %446 = vmatpush.bf16.msra.mxu0 0
        %447 = vmatpush.bf16.msra.mxu0 0
        %448 = vmatpush.bf16.msra.mxu0 0
        %449 = vmatpush.bf16.msra.mxu0 0
        %450 = vmatpush.bf16.msra.mxu0 0
        %451 = vmatpush.bf16.msra.mxu0 0
        %452 = vmatpush.bf16.msra.mxu0 0
        %453 = vmatpush.bf16.msra.mxu0 %v444
        %454 = vmatmul.bf16.gmra.mxu0 %v441
        %v455 = vpop.f32.mrf.mxu0
        %v456 = vadd.f32 0.0, %v455
        %v457 = vpop.f32.mrf.mxu0
        %458 = vdwg.mxu0
        %v459 = vpack.c.bf16 %v456, %v456
        %461 = vrot.lane.b32.xlu0 %v459, 32
        %v462 = vpop.permute.xlu0 %461
        %vm464 = vcmask 519424
        %465 = vst.msk [vmem:[%s320] sm:$0xf] %vm464, %v462
        %v466 = vld [vmem:[%s299] sm:$0xf]
        %v467 = vunpack.c.l.bf16 %v466
        %v468 = vmul.f32 %v467, 0.17675781
        %v469 = vpack.c.bf16 %v468, %v468
        %v470 = vld [vmem:[%s304] sm:$0xf]
        %v471 = vld [vmem:[%s310] sm:$0xf]
        %473 = vrot.lane.b32.xlu0 %v469, 64
        %v474 = vpop.permute.xlu0 %473
        %v476 = vunpack.c.l.b16 %v470
        %v477 = vpack.c.b16 %v476, %v476
        %478 = vrot.lane.b32.xlu0 %v477, 64
        %v479 = vpop.permute.xlu0 %478
        %v481 = vsel %vm332, %v474, 0
        %v484 = vsel %vm332, %v479, 0
        %486 = vmatpush.bf16.xpose.msra.mxu0 0
        %487 = vmatpush.bf16.xpose.msra.mxu0 0
        %488 = vmatpush.bf16.xpose.msra.mxu0 0
        %489 = vmatpush.bf16.xpose.msra.mxu0 0
        %490 = vmatpush.bf16.xpose.msra.mxu0 0
        %491 = vmatpush.bf16.xpose.msra.mxu0 0
        %492 = vmatpush.bf16.xpose.msra.mxu0 0
        %493 = vmatpush.bf16.xpose.msra.mxu0 %v484
        %494 = vmatmul.bf16.gmra.mxu0 %v481
        %v495 = vpop.f32.mrf.mxu0
        %v496 = vadd.f32 %v330, %v495
        %v497 = vpop.f32.mrf.mxu0
        %498 = vdwg.mxu0
        %v499 = vsel %vm352, %v496, -inf
        %500 = vmax.xlane.f32.xlu0 %v499
        %v501 = vpop.xlane.xlu0 %500
        %v502 = vsub.f32 %v496, %v501
        %v503 = vmul.f32 %v502, 1.442695
        %v504 = vpow.pop %v503
        %v505 = vsel %vm352, %v504, 0.0
        %506 = vadd.xlane.f32.xlu0 %v505
        %v507 = vpop.xlane.xlu0 %506
        %v508 = vrcp.pop %v507
        %v509 = vmul.f32 %v504, %v508
        %v510 = vadd.f32 %v433, %v509
        %v511 = vpack.c.bf16 %v509, %v509
        %v513 = vunpack.c.l.b16 %v471
        %v514 = vpack.c.b16 %v513, %v513
        %515 = vrot.lane.b32.xlu0 %v514, 64
        %v516 = vpop.permute.xlu0 %515
        %v518 = vsel %vm352, %v511, 0
        %v521 = vsel %vm369, %v516, 0
        %523 = vmatpush.bf16.msra.mxu0 0
        %524 = vmatpush.bf16.msra.mxu0 0
        %525 = vmatpush.bf16.msra.mxu0 0
        %526 = vmatpush.bf16.msra.mxu0 0
        %527 = vmatpush.bf16.msra.mxu0 0
        %528 = vmatpush.bf16.msra.mxu0 0
        %529 = vmatpush.bf16.msra.mxu0 0
        %530 = vmatpush.bf16.msra.mxu0 %v521
        %531 = vmatmul.bf16.gmra.mxu0 %v518
        %v532 = vpop.f32.mrf.mxu0
        %v533 = vadd.f32 0.0, %v532
        %v534 = vpop.f32.mrf.mxu0
        %535 = vdwg.mxu0
        %v536 = vpack.c.bf16 %v533, %v533
        %538 = vrot.lane.b32.xlu0 %v536, 64
        %v539 = vpop.permute.xlu0 %538
        %vm541 = vcmask 781824
        %542 = vst.msk [vmem:[%s320] sm:$0xf] %vm541, %v539
        %v543 = vld [vmem:[%s299] sm:$0xf]
        %v544 = vunpack.c.l.bf16 %v543
        %v545 = vmul.f32 %v544, 0.17675781
        %v546 = vpack.c.bf16 %v545, %v545
        %v547 = vld [vmem:[%s304] sm:$0xf]
        %v548 = vld [vmem:[%s310] sm:$0xf]
        %550 = vrot.lane.b32.xlu0 %v546, 32
        %v551 = vpop.permute.xlu0 %550
        %v553 = vunpack.c.l.b16 %v547
        %v554 = vpack.c.b16 %v553, %v553
        %555 = vrot.lane.b32.xlu0 %v554, 32
        %v556 = vpop.permute.xlu0 %555
        %v558 = vsel %vm332, %v551, 0
        %v561 = vsel %vm332, %v556, 0
        %563 = vmatpush.bf16.xpose.msra.mxu0 0
        %564 = vmatpush.bf16.xpose.msra.mxu0 0
        %565 = vmatpush.bf16.xpose.msra.mxu0 0
        %566 = vmatpush.bf16.xpose.msra.mxu0 0
        %567 = vmatpush.bf16.xpose.msra.mxu0 0
        %568 = vmatpush.bf16.xpose.msra.mxu0 0
        %569 = vmatpush.bf16.xpose.msra.mxu0 0
        %570 = vmatpush.bf16.xpose.msra.mxu0 %v561
        %571 = vmatmul.bf16.gmra.mxu0 %v558
        %v572 = vpop.f32.mrf.mxu0
        %v573 = vadd.f32 %v330, %v572
        %v574 = vpop.f32.mrf.mxu0
        %575 = vdwg.mxu0
        %v576 = vsel %vm352, %v573, -inf
        %577 = vmax.xlane.f32.xlu0 %v576
        %v578 = vpop.xlane.xlu0 %577
        %v579 = vsub.f32 %v573, %v578
        %v580 = vmul.f32 %v579, 1.442695
        %v581 = vpow.pop %v580
        %v582 = vsel %vm352, %v581, 0.0
        %583 = vadd.xlane.f32.xlu0 %v582
        %v584 = vpop.xlane.xlu0 %583
        %v585 = vrcp.pop %v584
        %v586 = vmul.f32 %v581, %v585
        %v587 = vadd.f32 %v510, %v586
        %v588 = vpack.c.bf16 %v586, %v586
        %v590 = vunpack.c.l.b16 %v548
        %v591 = vpack.c.b16 %v590, %v590
        %592 = vrot.lane.b32.xlu0 %v591, 32
        %v593 = vpop.permute.xlu0 %592
        %v595 = vsel %vm352, %v588, 0
        %v598 = vsel %vm369, %v593, 0
        %600 = vmatpush.bf16.msra.mxu0 0
        %601 = vmatpush.bf16.msra.mxu0 0
        %602 = vmatpush.bf16.msra.mxu0 0
        %603 = vmatpush.bf16.msra.mxu0 0
        %604 = vmatpush.bf16.msra.mxu0 0
        %605 = vmatpush.bf16.msra.mxu0 0
        %606 = vmatpush.bf16.msra.mxu0 0
        %607 = vmatpush.bf16.msra.mxu0 %v598
        %608 = vmatmul.bf16.gmra.mxu0 %v595
        %v609 = vpop.f32.mrf.mxu0
        %v610 = vadd.f32 0.0, %v609
        %v611 = vpop.f32.mrf.mxu0
        %612 = vdwg.mxu0
        %v613 = vpack.c.bf16 %v610, %v610
        %615 = vrot.lane.b32.xlu0 %v613, 96
        %v616 = vpop.permute.xlu0 %615
        %vm618 = vcmask 1044224
        %619 = vst.msk [vmem:[%s320] sm:$0xf] %vm618, %v616
        %v620 = vmul.f32 %v587, 0.25
        %621 = vst.msk [vmem:[%s292] sm:$0xff] %vm352, %v620
        %p622 = scmp.lt.s32.totalorder %s24, 1
        %s623 = scalar_select %p622, %s24, 1
        %p624 = scmp.lt.s32.totalorder %s25, 0
        %s625 = scalar_select %p624, %s25, 0
        %s626 = sadd.s32 %s625, %s623
        %s627 = smul.addr %s626, 4
        %s628 = scalar_lea.vmem %s4, %s627
        %s629 = sand.u32 %s176, 1
        %s630 = scalar_lea.sflag [#allocation3], %s629
        %s631 = sand.u32 %s176, 1
        %s632 = smul.addr %s631, 8
        %s633 = scalar_lea.vmem [#allocation2], %s632
        // Predicated region
        $region37: #{decoder_forward.37} parent=35 // pred_check
          %p634 = pneg %p158
        $region38: #{decoder_forward.37} parent=35 // pred_check_branch
          %636 = sbr.rel (%p634) target = $region40
        $region39: #{decoder_forward.37} parent=35 // pred_region
          _
        $region40: #{decoder_forward.37} parent=35 // pred_fallthru
          _
        // Predicated region
        $region41: #{decoder_forward.37} parent=35 // pred_check
          %p637 = pneg %p186
        $region42: #{decoder_forward.37} parent=35 // pred_check_branch
          %639 = sbr.rel (%p637) target = $region44
        $region43: #{decoder_forward.37} parent=35 // pred_region
          %641 = vsyncadd %s630, 0
          %s642 = sadd.s32 %s25, %s24
          %s643 = smul.addr %s642, 8
          %s644 = scalar_lea.hbm %s5, %s643
          %s646 = sshll.u32 %s633, 4
          %s647 = int_to_ptr.vmem [resolvable:$true] %s646
          %s648 = sshll.u32 %s644, 4
          %s649 = int_to_ptr.hbm [resolvable:$true] %s648
          %651 = dma.vmem_to_hbm [thread:$0]  %s647, 128, %s649, %s630
        $region44: #{decoder_forward.37} parent=35 // pred_fallthru
          _
      $region36: #{decoder_forward.37} parent=5 // pred_fallthru
        _
      %p652 = scmp.le.s32.totalorder 2, %s15
      // Predicated region
      $region45: #{decoder_forward.37} parent=5 // pred_check
        %p653 = pneg %p652
      $region46: #{decoder_forward.37} parent=5 // pred_check_branch
        %655 = sbr.rel (%p653) target = $region48
      $region47: #{decoder_forward.37} parent=5 // pred_region
        %s656 = ssub.s32 %s15, 2
        // Predicated region
        $region49: #{decoder_forward.37} parent=47 // pred_check
          %p657 = pneg %p164
        $region50: #{decoder_forward.37} parent=47 // pred_check_branch
          %659 = sbr.rel (%p657) target = $region52
        $region51: #{decoder_forward.37} parent=47 // pred_region
          %p660 = scmp.lt.s32.totalorder %s26, 1
          %s661 = scalar_select %p660, %s26, 1
          %p662 = scmp.lt.s32.totalorder %s27, 0
          %s663 = scalar_select %p662, %s27, 0
          %s664 = sadd.s32 %s663, %s661
          %s665 = smul.addr %s664, 4
          %s666 = scalar_lea.vmem %s4, %s665
        $region52: #{decoder_forward.37} parent=47 // pred_fallthru
          _
        // Predicated region
        $region53: #{decoder_forward.37} parent=47 // pred_check
          %p667 = pneg %p192
        $region54: #{decoder_forward.37} parent=47 // pred_check_branch
          %669 = sbr.rel (%p667) target = $region56
        $region55: #{decoder_forward.37} parent=47 // pred_region
          %s670 = sand.u32 %s177, 1
          %s671 = scalar_lea.sflag [#allocation3], %s670
          %s672 = sand.u32 %s177, 1
          %s673 = smul.addr %s672, 8
          %s674 = scalar_lea.vmem [#allocation2], %s673
          %676 = dma.done %s671, 128
        $region56: #{decoder_forward.37} parent=47 // pred_fallthru
          _
      $region48: #{decoder_forward.37} parent=5 // pred_fallthru
        _
    $region6: #{decoder_forward.37} parent=1 // loop_footer
      %s19 = sadd.s32 1, %s15
    $region7: #{decoder_forward.37} parent=1 // loop_footer_branch
      %14 = sbr.rel target = $region3
    $region8: #{decoder_forward.37} parent=1 // loop_exit
      _
    %677 = vsyncpa [#allocation3], 1
    %s678 = scalar_lea.sflag [#allocation3], 1
    %679 = vsyncpa %s678, 1

// kernel: decoder_forward.41
$region0: #{decoder_forward.41}
  #allocation0 [shape = 'u32[]', space=smem, size = 0x4, offset = 0x4, fixed_abs, tag = 'smem constant byte address 0x4 - core index']
  #allocation1 [shape = 'u32[72,128]{1,0:T(1,128)}', space=vmem, size = 0x9000, scoped, tag = 'internal scratch']
  %s0 = inlined_call_operand.vmem [shape: bf16[2,8,128], index: 0, kind: input, shape index: {}]
  %s1 = inlined_call_operand.hbm [shape: bf16[128,128], index: 1, kind: input, shape index: {}]
  %s2 = inlined_call_operand.vmem [shape: f32[1,128], index: 2, kind: input, shape index: {}]
  %s3 = inlined_call_operand.vmem [shape: f32[8,256], index: 3, kind: output, shape index: {}]
  %s4 = sld [smem:[#allocation0]]
  $region49: #{decoder_forward.41} parent=0
    _
  %s6 = ssub.s32 1, %s4
  %s7 = scalar_select 0, %s6, %s4
  $region1: #{decoder_forward.41} parent=0
    #allocation2 [shape = 'u8[32768]{0}', space=vmem, size = 0x8000, scoped, tag = 'input window, operand 1, single buffered']
    #allocation3 [shape = 's32[2]{0}', space=sflag, size = 0x8, scoped, tag = 'scoped memory for decoder_forward.41']
    %8 = vsyncpa [#allocation3], 0
    loop: start=0, step=1, limit=4
    $region2: #{decoder_forward.41} parent=1 // loop_pre_header
      _
    $region3: #{decoder_forward.41} parent=1 // loop_header
      %s10 = sphi 0, %s14
      %p11 = scmp.ge.s32.totalorder %s10, 4
      %s17 = sphi 0, %s36
      %s18 = sphi 0, %s32
      %s19 = sphi 0, %s28
      %s20 = sphi 0, %s17
      %s21 = sphi 0, %s18
      %s22 = sphi 0, %s19
      %s23 = sphi 0, %s20
      %s24 = sphi 0, %s21
      %s25 = sphi 0, %s22
      %s41 = sphi 0, %s43
      %s44 = sphi 0, %s41
      %s45 = sphi 0, %s44
      %s61 = sphi 0, %s45
      %s67 = sphi 0, %s69
      %s70 = sphi 0, %s67
      %s71 = sphi 0, %s70
      %s87 = sphi 0, %s71
      %s93 = sphi 0, %s95
      %s96 = sphi 0, %s93
      %s97 = sphi 0, %s96
      %s113 = sphi 0, %s97
      %s123 = sphi 0, %s125
      %s126 = sphi 0, %s123
      %s127 = sphi 0, %s126
      %s143 = sphi 0, %s127
    $region4: #{decoder_forward.41} parent=1 // loop_header_branch
      %13 = sbr.rel (%p11) target = $region8
    $region5: #{decoder_forward.41} parent=1 // loop_body
      %s15 = ssub.s32 %s10, 1
      %s16 = ssub.s32 %s10, 2
      %s26 = sadd.s32 1, %s19
      %p27 = scmp.ge.s32.totalorder %s26, 1
      %s28 = scalar_select %p27, 0, %s26
      %s29 = sadd.s32 1, %s18
      %s30 = scalar_select %p27, %s29, %s18
      %p31 = scmp.ge.s32.totalorder %s30, 2
      %s32 = scalar_select %p31, 0, %s30
      %s33 = sadd.s32 1, %s17
      %s34 = scalar_select %p31, %s33, %s17
      %p35 = scmp.ge.s32.totalorder %s34, 1
      %s36 = scalar_select %p35, 0, %s34
      %s37 = ssub.s32 %s18, %s32
      %s38 = ssub.s32 %s19, %s28
      %s39 = sor.u32 %s37, %s38
      %p40 = scmp.eq.s32.totalorder %s39, 0
      %s42 = sadd.s32 %s41, 1
      %s43 = scalar_select %p40, %s41, %s42
      %p46 = pneg %p40
      %p47 = scmp.eq.s32.totalorder %s10, 1
      %p48 = por %p46, %p47
      %p49 = scmp.ne.s32.totalorder %s41, %s44
      %p50 = scmp.eq.s32.totalorder %s10, 0
      %p51 = por %p49, %p50
      %p52 = scmp.ne.s32.totalorder %s41, %s44
      %p53 = scmp.eq.s32.totalorder %s15, 1
      %p54 = por %p52, %p53
      %p55 = scmp.ne.s32.totalorder %s44, %s45
      %p56 = scmp.eq.s32.totalorder %s15, 0
      %p57 = por %p55, %p56
      %p58 = scmp.ne.s32.totalorder %s44, %s45
      %p59 = scmp.eq.s32.totalorder %s16, 1
      %p60 = por %p58, %p59
      %p62 = scmp.ne.s32.totalorder %s45, %s61
      %p63 = scmp.eq.s32.totalorder %s16, 0
      %p64 = por %p62, %p63
      %s65 = ssub.s32 %s17, %s36
      %p66 = scmp.eq.s32.totalorder %s65, 0
      %s68 = sadd.s32 %s67, 1
      %s69 = scalar_select %p66, %s67, %s68
      %p72 = pneg %p66
      %p73 = scmp.eq.s32.totalorder %s10, 1
      %p74 = por %p72, %p73
      %p75 = scmp.ne.s32.totalorder %s67, %s70
      %p76 = scmp.eq.s32.totalorder %s10, 0
      %p77 = por %p75, %p76
      %p78 = scmp.ne.s32.totalorder %s67, %s70
      %p79 = scmp.eq.s32.totalorder %s15, 1
      %p80 = por %p78, %p79
      %p81 = scmp.ne.s32.totalorder %s70, %s71
      %p82 = scmp.eq.s32.totalorder %s15, 0
      %p83 = por %p81, %p82
      %p84 = scmp.ne.s32.totalorder %s70, %s71
      %p85 = scmp.eq.s32.totalorder %s16, 1
      %p86 = por %p84, %p85
      %p88 = scmp.ne.s32.totalorder %s71, %s87
      %p89 = scmp.eq.s32.totalorder %s16, 0
      %p90 = por %p88, %p89
      %s91 = ssub.s32 %s17, %s36
      %p92 = scmp.eq.s32.totalorder %s91, 0
      %s94 = sadd.s32 %s93, 1
      %s95 = scalar_select %p92, %s93, %s94
      %p98 = pneg %p92
      %p99 = scmp.eq.s32.totalorder %s10, 1
      %p100 = por %p98, %p99
      %p101 = scmp.ne.s32.totalorder %s93, %s96
      %p102 = scmp.eq.s32.totalorder %s10, 0
      %p103 = por %p101, %p102
      %p104 = scmp.ne.s32.totalorder %s93, %s96
      %p105 = scmp.eq.s32.totalorder %s15, 1
      %p106 = por %p104, %p105
      %p107 = scmp.ne.s32.totalorder %s96, %s97
      %p108 = scmp.eq.s32.totalorder %s15, 0
      %p109 = por %p107, %p108
      %p110 = scmp.ne.s32.totalorder %s96, %s97
      %p111 = scmp.eq.s32.totalorder %s16, 1
      %p112 = por %p110, %p111
      %p114 = scmp.ne.s32.totalorder %s97, %s113
      %p115 = scmp.eq.s32.totalorder %s16, 0
      %p116 = por %p114, %p115
      %s117 = sadd.s32 %s18, %s17
      %s118 = sadd.s32 %s32, %s36
      %s119 = ssub.s32 %s19, %s28
      %s120 = ssub.s32 %s117, %s118
      %s121 = sor.u32 %s119, %s120
      %p122 = scmp.eq.s32.totalorder %s121, 0
      %s124 = sadd.s32 %s123, 1
      %s125 = scalar_select %p122, %s123, %s124
      %p128 = pneg %p122
      %p129 = scmp.eq.s32.totalorder %s10, 1
      %p130 = por %p128, %p129
      %p131 = scmp.ne.s32.totalorder %s123, %s126
      %p132 = scmp.eq.s32.totalorder %s10, 0
      %p133 = por %p131, %p132
      %p134 = scmp.ne.s32.totalorder %s123, %s126
      %p135 = scmp.eq.s32.totalorder %s15, 1
      %p136 = por %p134, %p135
      %p137 = scmp.ne.s32.totalorder %s126, %s127
      %p138 = scmp.eq.s32.totalorder %s15, 0
      %p139 = por %p137, %p138
      %p140 = scmp.ne.s32.totalorder %s126, %s127
      %p141 = scmp.eq.s32.totalorder %s16, 1
      %p142 = por %p140, %p141
      %p144 = scmp.ne.s32.totalorder %s127, %s143
      %p145 = scmp.eq.s32.totalorder %s16, 0
      %p146 = por %p144, %p145
      %p147 = scmp.le.s32.totalorder 1, %s10
      %p148 = scmp.lt.s32.totalorder %s10, 3
      %p149 = pnand %p147, %p148
      %p150 = pneg %p149
      // Predicated region
      $region9: #{decoder_forward.41} parent=5 // pred_check
        _
      $region10: #{decoder_forward.41} parent=5 // pred_check_branch
        %152 = sbr.rel (%p149) target = $region12
      $region11: #{decoder_forward.41} parent=5 // pred_region
        %s153 = ssub.s32 %s10, 1
        // Predicated region
        $region13: #{decoder_forward.41} parent=11 // pred_check
          %p154 = pneg %p83
        $region14: #{decoder_forward.41} parent=11 // pred_check_branch
          %156 = sbr.rel (%p154) target = $region16
        $region15: #{decoder_forward.41} parent=11 // pred_region
          %158 = vsyncadd [#allocation3], 0
          %s159 = smul.addr %s20, 4
          %s160 = scalar_lea.hbm %s1, %s159
          %s161 = sshll.u32 %s160, 4
          %s162 = int_to_ptr.hbm [resolvable:$true] %s161
          %s163 = sshll.u32 [#allocation2], 4
          %s164 = int_to_ptr.vmem [resolvable:$true] %s163
          %169 = dma.hbm_to_vmem [thread:$0]  %s162, 1024, %s164, [#allocation3], 64, 64, 4
        $region16: #{decoder_forward.41} parent=11 // pred_fallthru
          _
        // Predicated region
        $region17: #{decoder_forward.41} parent=11 // pred_check
          %p170 = pneg %p109
        $region18: #{decoder_forward.41} parent=11 // pred_check_branch
          %172 = sbr.rel (%p170) target = $region20
        $region19: #{decoder_forward.41} parent=11 // pred_region
          %p173 = scmp.lt.s32.totalorder %s20, 0
          %s174 = scalar_select %p173, %s20, 0
          %s175 = scalar_lea.vmem %s2, %s174
        $region20: #{decoder_forward.41} parent=11 // pred_fallthru
          _
      $region12: #{decoder_forward.41} parent=5 // pred_fallthru
        _
      %p176 = scmp.lt.s32.totalorder %s10, 2
      // Predicated region
      $region21: #{decoder_forward.41} parent=5 // pred_check
        %p177 = pneg %p176
      $region22: #{decoder_forward.41} parent=5 // pred_check_branch
        %179 = sbr.rel (%p177) target = $region24
      $region23: #{decoder_forward.41} parent=5 // pred_region
        // Predicated region
        $region25: #{decoder_forward.41} parent=23 // pred_check
          %p180 = pneg %p51
        $region26: #{decoder_forward.41} parent=23 // pred_check_branch
          %182 = sbr.rel (%p180) target = $region28
        $region27: #{decoder_forward.41} parent=23 // pred_region
          %p183 = scmp.lt.s32.totalorder %s18, 1
          %s184 = scalar_select %p183, %s18, 1
          %p185 = scmp.lt.s32.totalorder %s19, 0
          %s186 = scalar_select %p185, %s19, 0
          %s187 = sadd.s32 %s186, %s184
          %s188 = smul.addr %s187, 4
          %s189 = scalar_lea.vmem %s0, %s188
        $region28: #{decoder_forward.41} parent=23 // pred_fallthru
          _
      $region24: #{decoder_forward.41} parent=5 // pred_fallthru
        _
      %p190 = scmp.le.s32.totalorder 1, %s10
      %p191 = scmp.lt.s32.totalorder %s10, 3
      %p192 = pnand %p190, %p191
      %p193 = pneg %p192
      // Predicated region
      $region29: #{decoder_forward.41} parent=5 // pred_check
        _
      $region30: #{decoder_forward.41} parent=5 // pred_check_branch
        %195 = sbr.rel (%p192) target = $region32
      $region31: #{decoder_forward.41} parent=5 // pred_region
        %s196 = ssub.s32 %s10, 1
        // Predicated region
        $region33: #{decoder_forward.41} parent=31 // pred_check
          %p197 = pneg %p83
        $region34: #{decoder_forward.41} parent=31 // pred_check_branch
          %199 = sbr.rel (%p197) target = $region36
        $region35: #{decoder_forward.41} parent=31 // pred_region
          %201 = dma.done [#allocation3], 1024
        $region36: #{decoder_forward.41} parent=31 // pred_fallthru
          _
        %p202 = scmp.lt.s32.totalorder %s21, 1
        %s203 = scalar_select %p202, %s21, 1
        %p204 = scmp.lt.s32.totalorder %s22, 0
        %s205 = scalar_select %p204, %s22, 0
        %s206 = sadd.s32 %s205, %s203
        %s207 = smul.addr %s206, 4
        %s208 = scalar_lea.vmem %s0, %s207
        %p209 = pneg %p57
        %p210 = pneg %p54
        %p211 = pneg %p83
        %p212 = pneg %p80
        %p213 = scmp.lt.s32.totalorder %s20, 0
        %s214 = scalar_select %p213, %s20, 0
        %s215 = scalar_lea.vmem %s2, %s214
        %p216 = pneg %p109
        %p217 = pneg %p106
        %p218 = pneg %p139
        %p219 = pneg %p136
        %s220 = sadd.s32 %s21, %s20
        %p221 = scmp.lt.s32.totalorder %s22, 0
        %s222 = scalar_select %p221, %s22, 0
        %p223 = scmp.lt.s32.totalorder %s220, 1
        %s224 = scalar_select %p223, %s220, 1
        %s225 = smul.addr %s222, 2
        %s226 = sadd.s32 %s224, %s225
        %s227 = smul.addr %s226, 8
        %s228 = scalar_lea.vmem %s3, %s227
        %p229 = scmp.lt.s32.totalorder %s21, 1
        %s230 = scalar_select %p229, %s21, 1
        %p231 = scmp.lt.s32.totalorder %s22, 0
        %s232 = scalar_select %p231, %s22, 0
        %s233 = sadd.s32 %s232, %s230
        %s234 = smul.addr %s233, 4
        %s235 = scalar_lea.vmem %s0, %s234
        %p236 = scmp.lt.s32.totalorder %s20, 0
        %s237 = scalar_select %p236, %s20, 0
        %s238 = scalar_lea.vmem %s2, %s237
        %s239 = sadd.s32 %s21, %s20
        %p240 = scmp.lt.s32.totalorder %s22, 0
        %s241 = scalar_select %p240, %s22, 0
        %p242 = scmp.lt.s32.totalorder %s239, 1
        %s243 = scalar_select %p242, %s239, 1
        %s244 = smul.addr %s241, 2
        %s245 = sadd.s32 %s243, %s244
        %s246 = smul.addr %s245, 8
        %s247 = scalar_lea.vmem %s3, %s246
        %s248 = sadd.s32 %s21, %s20
        %v249 = vld [vmem:[%s235] sm:$0xf]
        %v250 = vld [vmem:[#allocation2] sm:$0xf]
        %v251 = vld [vmem:[#allocation2 + $0x4] sm:$0xf]
        %v252 = vld [vmem:[#allocation2 + $0x8] sm:$0xf]
        %v253 = vld [vmem:[#allocation2 + $0xc] sm:$0xf]
        %v254 = vld [vmem:[#allocation2 + $0x10] sm:$0xf]
        %v255 = vld [vmem:[#allocation2 + $0x14] sm:$0xf]
        %v256 = vld [vmem:[#allocation2 + $0x18] sm:$0xf]
        %v257 = vld [vmem:[#allocation2 + $0x1c] sm:$0xf]
        %v258 = vld [vmem:[#allocation2 + $0x20] sm:$0xf]
        %v259 = vld [vmem:[#allocation2 + $0x24] sm:$0xf]
        %v260 = vld [vmem:[#allocation2 + $0x28] sm:$0xf]
        %v261 = vld [vmem:[#allocation2 + $0x2c] sm:$0xf]
        %v262 = vld [vmem:[#allocation2 + $0x30] sm:$0xf]
        %v263 = vld [vmem:[#allocation2 + $0x34] sm:$0xf]
        %v264 = vld [vmem:[#allocation2 + $0x38] sm:$0xf]
        %v265 = vld [vmem:[#allocation2 + $0x3c] sm:$0xf]
        %v266 = vld [vmem:[%s238] sm:$0x1]
        %v268 = vperm.slane %v266, 0
        %v286 = vunpack.c.l.b16 %v250
        %v287 = vunpack.c.l.b16 %v251
        %v288 = vunpack.c.l.b16 %v252
        %v289 = vunpack.c.l.b16 %v253
        %v290 = vunpack.c.l.b16 %v254
        %v291 = vunpack.c.l.b16 %v255
        %v292 = vunpack.c.l.b16 %v256
        %v293 = vunpack.c.l.b16 %v257
        %v294 = vunpack.c.l.b16 %v258
        %v295 = vunpack.c.l.b16 %v259
        %v296 = vunpack.c.l.b16 %v260
        %v297 = vunpack.c.l.b16 %v261
        %v298 = vunpack.c.l.b16 %v262
        %v299 = vunpack.c.l.b16 %v263
        %v300 = vunpack.c.l.b16 %v264
        %v301 = vunpack.c.l.b16 %v265
        %v302 = vpack.c.b16 %v287, %v286
        %v303 = vpack.c.b16 %v289, %v288
        %v304 = vpack.c.b16 %v291, %v290
        %v305 = vpack.c.b16 %v293, %v292
        %v306 = vpack.c.b16 %v295, %v294
        %v307 = vpack.c.b16 %v297, %v296
        %v308 = vpack.c.b16 %v299, %v298
        %v309 = vpack.c.b16 %v301, %v300
        %318 = vmatpush.bf16.msra.mxu0 %v309
        %319 = vmatpush.bf16.msra.mxu0 %v308
        %320 = vmatpush.bf16.msra.mxu0 %v307
        %321 = vmatpush.bf16.msra.mxu0 %v306
        %322 = vmatpush.bf16.msra.mxu0 %v305
        %323 = vmatpush.bf16.msra.mxu0 %v304
        %324 = vmatpush.bf16.msra.mxu0 %v303
        %325 = vmatpush.bf16.msra.mxu0 %v302
        %326 = vmatmul.bf16.gmra.mxu0 %v249
        %v327 = vpop.f32.mrf.mxu0
        %v328 = vadd.f32 %v268, %v327
        %v329 = vpop.f32.mrf.mxu0
        %330 = vdwg.mxu0
        %331 = vst [vmem:[%s247] sm:$0xff] %v328
        %s332 = sadd.s32 %s21, %s20
        %p333 = scmp.lt.s32.totalorder %s22, 0
        %s334 = scalar_select %p333, %s22, 0
        %p335 = scmp.lt.s32.totalorder %s332, 1
        %s336 = scalar_select %p335, %s332, 1
        %s337 = smul.addr %s334, 2
        %s338 = sadd.s32 %s336, %s337
        %s339 = smul.addr %s338, 8
        %s340 = scalar_lea.vmem %s3, %s339
        // Predicated region
        $region37: #{decoder_forward.41} parent=31 // pred_check
          %p341 = pneg %p136
        $region38: #{decoder_forward.41} parent=31 // pred_check_branch
          %343 = sbr.rel (%p341) target = $region40
        $region39: #{decoder_forward.41} parent=31 // pred_region
          %s344 = sadd.s32 %s21, %s20
        $region40: #{decoder_forward.41} parent=31 // pred_fallthru
          _
      $region32: #{decoder_forward.41} parent=5 // pred_fallthru
        _
      %p345 = scmp.le.s32.totalorder 2, %s10
      // Predicated region
      $region41: #{decoder_forward.41} parent=5 // pred_check
        %p346 = pneg %p345
      $region42: #{decoder_forward.41} parent=5 // pred_check_branch
        %348 = sbr.rel (%p346) target = $region44
      $region43: #{decoder_forward.41} parent=5 // pred_region
        %s349 = ssub.s32 %s10, 2
        // Predicated region
        $region45: #{decoder_forward.41} parent=43 // pred_check
          %p350 = pneg %p142
        $region46: #{decoder_forward.41} parent=43 // pred_check_branch
          %352 = sbr.rel (%p350) target = $region48
        $region47: #{decoder_forward.41} parent=43 // pred_region
          %s353 = sadd.s32 %s24, %s23
          %p354 = scmp.lt.s32.totalorder %s25, 0
          %s355 = scalar_select %p354, %s25, 0
          %p356 = scmp.lt.s32.totalorder %s353, 1
          %s357 = scalar_select %p356, %s353, 1
          %s358 = smul.addr %s355, 2
          %s359 = sadd.s32 %s357, %s358
          %s360 = smul.addr %s359, 8
          %s361 = scalar_lea.vmem %s3, %s360
        $region48: #{decoder_forward.41} parent=43 // pred_fallthru
          _
      $region44: #{decoder_forward.41} parent=5 // pred_fallthru
        _
    $region6: #{decoder_forward.41} parent=1 // loop_footer
      %s14 = sadd.s32 1, %s10
    $region7: #{decoder_forward.41} parent=1 // loop_footer_branch
      %9 = sbr.rel target = $region3
    $region8: #{decoder_forward.41} parent=1 // loop_exit
      _
    %362 = vsyncpa [#allocation3], 1
    %s363 = scalar_lea.sflag [#allocation3], 1
    %364 = vsyncpa %s363, 1

</llo_original>
